<compile_context>
chip_gen: v7x
topology: tpu7x:2x2x1
jax: 0.10.0
libtpu: 0.0.40
codegen_flags: <defaults>
</compile_context>

<pallas_src>
import math

import jax
import jax.numpy as jnp
from jax.experimental import pallas as pl
from jax.experimental.pallas import tpu as pltpu


def _fused_mlp_kernel(x_ref, w_ref, b_ref, o_ref, h_ref):
    """Applies layer `l = program_id(0)` of  h <- h @ W_t[l] + b[l].

    The activation `h` lives in a persistent VMEM scratch across the layer
    grid, so the only significant HBM traffic per step is the (double-
    buffered) weight block of the next layer streaming in while this layer's
    matmul runs on the MXU.
    """
    l = pl.program_id(0)

    @pl.when(l == 0)
    def _():
        h_ref[...] = x_ref[...].astype(jnp.float32)

    h = h_ref[...]
    # bf16 (or f32) weight block; accumulate on the MXU in f32; bias in f32.
    y = jnp.dot(h.astype(w_ref.dtype), w_ref[0],
                preferred_element_type=jnp.float32) + b_ref[0]
    h_ref[...] = y

    @pl.when(l == pl.num_programs(0) - 1)
    def _():
        o_ref[...] = y.astype(o_ref.dtype)


@jax.jit
def fused_mlp(x, w_stack, b_stack):
    """x: (M, K); w_stack: (L, K, N) (pre-transposed); b_stack: (L, 1, N)."""
    M, K = x.shape
    L, K2, N = w_stack.shape
    assert K == K2 and K == N, "square layers required for a resident activation"
    assert b_stack.shape == (L, 1, N)

    w_bytes = K * N * w_stack.dtype.itemsize
    # Full-layer weight block, double-buffered, must fit comfortably in VMEM
    # on every generation (v7x has only 64 MiB physical / 32 MiB default).
    # TODO(synk): for the full 10*1024 hidden size the weight block needs K/N
    #             tiling (and a per-chip tile sweep); not needed for this demo.
    assert 2 * w_bytes < 24 * 1024 * 1024, "weight block too large for VMEM"

    cost = pl.CostEstimate(
        flops=2 * L * M * K * N,
        transcendentals=0,
        bytes_accessed=(L * w_bytes + L * N * 4 + M * K * 4 + M * N * 4),
    )

    return pl.pallas_call(
        _fused_mlp_kernel,
        out_shape=jax.ShapeDtypeStruct((M, N), x.dtype),
        grid_spec=pltpu.PrefetchScalarGridSpec(
            num_scalar_prefetch=0,
            grid=(L,),                                        # layer axis
            in_specs=[
                pl.BlockSpec((M, K), lambda l: (0, 0)),       # x: fetched once
                pl.BlockSpec((1, K, N), lambda l: (l, 0, 0)),  # layer-l weight
                pl.BlockSpec((1, 1, N), lambda l: (l, 0, 0)),  # layer-l bias
            ],
            out_specs=pl.BlockSpec((M, N), lambda l: (0, 0)),  # written at end
            scratch_shapes=[pltpu.VMEM((M, N), jnp.float32)],  # resident act.
        ),
        compiler_params=pltpu.CompilerParams(
            dimension_semantics=("arbitrary",),   # layers are sequential
        ),
        cost_estimate=cost,
    )(x, w_stack, b_stack)


class MyModulePallas:
    """10 sequential square Linear layers fused into one Pallas kernel."""

    def __init__(self, hidden=1024, num_layers=10, key=jax.random.PRNGKey(0),
                 weight_dtype=jnp.bfloat16):
        self.hidden = hidden
        self.num_layers = num_layers
        bound = 1.0 / math.sqrt(hidden)           # PyTorch default Linear init
        ws, bs = [], []
        for _ in range(num_layers):
            key, kw, kb = jax.random.split(key, 3)
            w = jax.random.uniform(kw, (hidden, hidden), jnp.float32,
                                   -bound, bound)
            b = jax.random.uniform(kb, (1, hidden), jnp.float32, -bound, bound)
            ws.append(jnp.transpose(w))           # store as (in, out)
            bs.append(b)
        # Stack so a single pallas_call streams all layers.  Weights in bf16
        # halve HBM traffic (the kernel is weight-streaming bound at small
        # batch); bias and accumulation stay in f32.
        self.w_stack = jnp.stack(ws).astype(weight_dtype)    # (L, K, N)
        self.b_stack = jnp.stack(bs)                         # (L, 1, N), f32

    def __call__(self, x):
        return fused_mlp(x, self.w_stack, self.b_stack)


if __name__ == "__main__":
    batch, hidden, num_layers = 8, 1024, 10

    module = MyModulePallas(hidden=hidden, num_layers=num_layers,
                            key=jax.random.PRNGKey(0))

    x = jax.random.normal(jax.random.PRNGKey(0), (batch, hidden), jnp.float32)

    out = jax.block_until_ready(module(x))

    # Reference: same math in plain JAX (same bf16 weight rounding, f32 acc).
    ref = x
    for l in range(num_layers):
        ref = jnp.dot(ref.astype(module.w_stack.dtype), module.w_stack[l],
                      preferred_element_type=jnp.float32) + module.b_stack[l]

    assert out.shape == (batch, hidden)
    assert jnp.allclose(out, ref, rtol=1e-2, atol=1e-2), (
        float(jnp.max(jnp.abs(out - ref))))

    print("KERNEL_OK")
</pallas_src>

<mosaic_0001>
module attributes {stable_mosaic.version = 11 : i64} {
  func.func @_fused_mlp_kernel(%arg0: i32, %arg1: memref<8x1024xf32, #tpu.memory_space<vmem>>, %arg2: memref<1x1024x1024xbf16, #tpu.memory_space<vmem>>, %arg3: memref<1x1x1024xf32, #tpu.memory_space<vmem>>, %arg4: memref<8x1024xf32, #tpu.memory_space<vmem>>, %arg5: memref<8x1024xf32, #tpu.memory_space<vmem>>) attributes {dimension_semantics = [#tpu.dimension_semantics<arbitrary>], iteration_bounds = array<i64: 10>, scalar_prefetch = 0 : i64, scratch_operands = 1 : i64, tpu.core_type = #tpu.core_type<tc>, window_params = [{pipeline_mode = #tpu.pipeline_mode<synchronous>, transform_indices = @transform_0, window_bounds = array<i64: 8, 1024>}, {transform_indices = @transform_1, window_bounds = array<i64: 1, 1024, 1024>}, {transform_indices = @transform_2, window_bounds = array<i64: 1, 1, 1024>}, {pipeline_mode = #tpu.pipeline_mode<synchronous>, transform_indices = @transform_3, window_bounds = array<i64: 8, 1024>}]} {
    %c0_i32 = arith.constant 0 : i32
    %0 = arith.cmpi eq, %arg0, %c0_i32 : i32
    %1 = arith.extui %0 : i1 to i32
    %c0_i32_0 = arith.constant 0 : i32
    %2 = arith.cmpi ne, %1, %c0_i32_0 : i32
    scf.if %2 {
      %c0_11 = arith.constant 0 : index
      %c0_12 = arith.constant 0 : index
      %16 = vector.load %arg1[%c0_11, %c0_12] : memref<8x1024xf32, #tpu.memory_space<vmem>>, vector<8x1024xf32>
      %c0_13 = arith.constant 0 : index
      %c0_14 = arith.constant 0 : index
      %17 = vector.load %arg5[%c0_13, %c0_14] : memref<8x1024xf32, #tpu.memory_space<vmem>>, vector<8x1024xf32>
      tpu.vector_store %arg5[%c0_13, %c0_14], %16 {strides = array<i32>} : memref<8x1024xf32, #tpu.memory_space<vmem>>, vector<8x1024xf32>,
    } else {
    }
    %c0 = arith.constant 0 : index
    %c0_1 = arith.constant 0 : index
    %3 = vector.load %arg5[%c0, %c0_1] : memref<8x1024xf32, #tpu.memory_space<vmem>>, vector<8x1024xf32>
    %4 = arith.truncf %3 : vector<8x1024xf32> to vector<8x1024xbf16>
    %c0_2 = arith.constant 0 : index
    %c0_3 = arith.constant 0 : index
    %c0_4 = arith.constant 0 : index
    %5 = vector.load %arg2[%c0_2, %c0_3, %c0_4] : memref<1x1024x1024xbf16, #tpu.memory_space<vmem>>, vector<1x1024x1024xbf16>
    %6 = vector.shape_cast %5 : vector<1x1024x1024xbf16> to vector<1024x1024xbf16>
    %cst = arith.constant dense<0.000000e+00> : vector<8x1024xf32>
    %7 = tpu.matmul %4, %6, %cst {dimension_numbers = #tpu.dot_dimension_numbers<[1], [0], [0], [1], [0, 0, 1, 1], [], []>} : vector<8x1024xbf16>, vector<1024x1024xbf16>, vector<8x1024xf32> -> vector<8x1024xf32>
    %c0_5 = arith.constant 0 : index
    %c0_6 = arith.constant 0 : index
    %c0_7 = arith.constant 0 : index
    %8 = vector.load %arg3[%c0_5, %c0_6, %c0_7] : memref<1x1x1024xf32, #tpu.memory_space<vmem>>, vector<1x1x1024xf32>
    %9 = vector.shape_cast %8 : vector<1x1x1024xf32> to vector<1x1024xf32>
    %10 = vector.broadcast %9 : vector<1x1024xf32> to vector<8x1024xf32>
    %11 = arith.addf %7, %10 : vector<8x1024xf32>
    %c0_8 = arith.constant 0 : index
    %c0_9 = arith.constant 0 : index
    %12 = vector.load %arg5[%c0_8, %c0_9] : memref<8x1024xf32, #tpu.memory_space<vmem>>, vector<8x1024xf32>
    tpu.vector_store %arg5[%c0_8, %c0_9], %11 {strides = array<i32>} : memref<8x1024xf32, #tpu.memory_space<vmem>>, vector<8x1024xf32>,
    %c9_i32 = arith.constant 9 : i32
    %13 = arith.cmpi eq, %arg0, %c9_i32 : i32
    %14 = arith.extui %13 : i1 to i32
    %c0_i32_10 = arith.constant 0 : i32
    %15 = arith.cmpi ne, %14, %c0_i32_10 : i32
    scf.if %15 {
      %c0_11 = arith.constant 0 : index
      %c0_12 = arith.constant 0 : index
      %16 = vector.load %arg4[%c0_11, %c0_12] : memref<8x1024xf32, #tpu.memory_space<vmem>>, vector<8x1024xf32>
      tpu.vector_store %arg4[%c0_11, %c0_12], %11 {strides = array<i32>} : memref<8x1024xf32, #tpu.memory_space<vmem>>, vector<8x1024xf32>,
    } else {
    }
    return
  }
  func.func @transform_0(%arg0: i32) -> (i32, i32) {
    %c0_i32 = arith.constant 0 : i32
    %c0_i32_0 = arith.constant 0 : i32
    %c0_i32_1 = arith.constant 0 : i32
    return %c0_i32, %c0_i32_0 : i32, i32
  }
  func.func @transform_1(%arg0: i32) -> (i32, i32, i32) {
    %c0_i32 = arith.constant 0 : i32
    %c0_i32_0 = arith.constant 0 : i32
    %c0_i32_1 = arith.constant 0 : i32
    return %arg0, %c0_i32, %c0_i32_0 : i32, i32, i32
  }
  func.func @transform_2(%arg0: i32) -> (i32, i32, i32) {
    %c0_i32 = arith.constant 0 : i32
    %c0_i32_0 = arith.constant 0 : i32
    %c0_i32_1 = arith.constant 0 : i32
    return %arg0, %c0_i32, %c0_i32_0 : i32, i32, i32
  }
  func.func @transform_3(%arg0: i32) -> (i32, i32) {
    %c0_i32 = arith.constant 0 : i32
    %c0_i32_0 = arith.constant 0 : i32
    %c0_i32_1 = arith.constant 0 : i32
    return %c0_i32, %c0_i32_0 : i32, i32
  }
}

</mosaic_0001>

<llo_original>
// kernel: fused_mlp.1
$region0: #{fused_mlp.1}
  #allocation0 [shape = 'u32[]', space=smem, size = 0x4, offset = 0x4, fixed_abs, tag = 'smem constant byte address 0x4 - core index']
  #allocation1 [shape = 'u32[144,128]{1,0:T(1,128)}', space=vmem, size = 0x12000, scoped, tag = 'internal scratch']
  #allocation2 [shape = 'f32[8,1024]{1,0:T(8,128)}', space=vmem, size = 0x8000, scoped, tag = 'scratch operand']
  %s0 = inlined_call_operand.hbm [shape: f32[8,1024], index: 0, kind: input, shape index: {}]
  %s1 = inlined_call_operand.hbm [shape: bf16[10,1024,1024], index: 1, kind: input, shape index: {}]
  %s2 = inlined_call_operand.hbm [shape: f32[10,1,1024], index: 2, kind: input, shape index: {}]
  %s3 = inlined_call_operand.hbm [shape: f32[8,1024], index: 3, kind: output, shape index: {}]
  %s4 = sld [smem:[#allocation0]]
  $region65: #{fused_mlp.1} parent=0
    _
  %s6 = ssub.s32 1, %s4
  %s7 = scalar_select 0, %s6, %s4
  $region1: #{fused_mlp.1} parent=0
    #allocation3 [shape = 'u8[32768]{0}', space=vmem, size = 0x8000, scoped, tag = 'input window, operand 0, single buffered']
    #allocation4 [shape = 's32[2]{0}', space=sflag, size = 0x8, scoped, tag = 'scoped memory for fused_mlp.1']
    #allocation5 [shape = 's32[2]{0}', space=sflag, size = 0x8, scoped, tag = 'scoped memory for fused_mlp.1']
    #allocation6 [shape = 'u8[4194304]{0}', space=vmem, size = 0x400000, scoped, tag = 'input window, operand 1']
    #allocation7 [shape = 's32[2]{0}', space=sflag, size = 0x8, scoped, tag = 'scoped memory for fused_mlp.1']
    #allocation8 [shape = 'u8[8192]{0}', space=vmem, size = 0x2000, scoped, tag = 'input window, operand 2']
    #allocation9 [shape = 'u8[32768]{0}', space=vmem, size = 0x8000, scoped, tag = 'output window, operand 0, single buffered']
    %8 = vsyncpa [#allocation4], 0
    %9 = vsyncpa [#allocation7], 0
    %s10 = scalar_lea.sflag [#allocation7], 1
    %11 = vsyncpa %s10, 0
    %12 = vsyncpa [#allocation5], 0
    loop: start=0, step=1, limit=12
    $region2: #{fused_mlp.1} parent=1 // loop_pre_header
      _
    $region3: #{fused_mlp.1} parent=1 // loop_header
      %s14 = sphi 0, %s18
      %p15 = scmp.ge.s32.totalorder %s14, 12
      %s22 = sphi 0, %s22
      %s24 = sphi 0, %s22
      %s25 = sphi 0, %s24
      %s39 = sphi 0, %s25
      %s45 = sphi 0, %s47
      %s48 = sphi 0, %s45
      %s49 = sphi 0, %s48
      %s65 = sphi 0, %s49
      %s71 = sphi 0, %s73
      %s74 = sphi 0, %s71
      %s75 = sphi 0, %s74
      %s91 = sphi 0, %s75
      %s95 = sphi 0, %s95
      %s97 = sphi 0, %s95
      %s98 = sphi 0, %s97
      %s112 = sphi 0, %s98
    $region4: #{fused_mlp.1} parent=1 // loop_header_branch
      %17 = sbr.rel (%p15) target = $region8
    $region5: #{fused_mlp.1} parent=1 // loop_body
      %s19 = ssub.s32 %s14, 1
      %s20 = ssub.s32 %s14, 2
      %s21 = sadd.s32 %s14, 1
      %s23 = sadd.s32 %s22, 1
      %p26 = scmp.eq.s32.totalorder %s14, 9
      %p27 = scmp.ne.s32.totalorder %s22, %s24
      %p28 = scmp.eq.s32.totalorder %s14, 0
      %p29 = por %p27, %p28
      %p30 = scmp.ne.s32.totalorder %s22, %s24
      %p31 = scmp.eq.s32.totalorder %s19, 9
      %p32 = por %p30, %p31
      %p33 = scmp.ne.s32.totalorder %s24, %s25
      %p34 = scmp.eq.s32.totalorder %s19, 0
      %p35 = por %p33, %p34
      %p36 = scmp.ne.s32.totalorder %s24, %s25
      %p37 = scmp.eq.s32.totalorder %s20, 9
      %p38 = por %p36, %p37
      %p40 = scmp.ne.s32.totalorder %s25, %s39
      %p41 = scmp.eq.s32.totalorder %s20, 0
      %p42 = por %p40, %p41
      %s43 = ssub.s32 %s14, %s21
      %p44 = scmp.eq.s32.totalorder %s43, 0
      %s46 = sadd.s32 %s45, 1
      %s47 = scalar_select %p44, %s45, %s46
      %p50 = pneg %p44
      %p51 = scmp.eq.s32.totalorder %s14, 9
      %p52 = por %p50, %p51
      %p53 = scmp.ne.s32.totalorder %s45, %s48
      %p54 = scmp.eq.s32.totalorder %s14, 0
      %p55 = por %p53, %p54
      %p56 = scmp.ne.s32.totalorder %s45, %s48
      %p57 = scmp.eq.s32.totalorder %s19, 9
      %p58 = por %p56, %p57
      %p59 = scmp.ne.s32.totalorder %s48, %s49
      %p60 = scmp.eq.s32.totalorder %s19, 0
      %p61 = por %p59, %p60
      %p62 = scmp.ne.s32.totalorder %s48, %s49
      %p63 = scmp.eq.s32.totalorder %s20, 9
      %p64 = por %p62, %p63
      %p66 = scmp.ne.s32.totalorder %s49, %s65
      %p67 = scmp.eq.s32.totalorder %s20, 0
      %p68 = por %p66, %p67
      %s69 = ssub.s32 %s14, %s21
      %p70 = scmp.eq.s32.totalorder %s69, 0
      %s72 = sadd.s32 %s71, 1
      %s73 = scalar_select %p70, %s71, %s72
      %p76 = pneg %p70
      %p77 = scmp.eq.s32.totalorder %s14, 9
      %p78 = por %p76, %p77
      %p79 = scmp.ne.s32.totalorder %s71, %s74
      %p80 = scmp.eq.s32.totalorder %s14, 0
      %p81 = por %p79, %p80
      %p82 = scmp.ne.s32.totalorder %s71, %s74
      %p83 = scmp.eq.s32.totalorder %s19, 9
      %p84 = por %p82, %p83
      %p85 = scmp.ne.s32.totalorder %s74, %s75
      %p86 = scmp.eq.s32.totalorder %s19, 0
      %p87 = por %p85, %p86
      %p88 = scmp.ne.s32.totalorder %s74, %s75
      %p89 = scmp.eq.s32.totalorder %s20, 9
      %p90 = por %p88, %p89
      %p92 = scmp.ne.s32.totalorder %s75, %s91
      %p93 = scmp.eq.s32.totalorder %s20, 0
      %p94 = por %p92, %p93
      %s96 = sadd.s32 %s95, 1
      %p99 = scmp.eq.s32.totalorder %s14, 9
      %p100 = scmp.ne.s32.totalorder %s95, %s97
      %p101 = scmp.eq.s32.totalorder %s14, 0
      %p102 = por %p100, %p101
      %p103 = scmp.ne.s32.totalorder %s95, %s97
      %p104 = scmp.eq.s32.totalorder %s19, 9
      %p105 = por %p103, %p104
      %p106 = scmp.ne.s32.totalorder %s97, %s98
      %p107 = scmp.eq.s32.totalorder %s19, 0
      %p108 = por %p106, %p107
      %p109 = scmp.ne.s32.totalorder %s97, %s98
      %p110 = scmp.eq.s32.totalorder %s20, 9
      %p111 = por %p109, %p110
      %p113 = scmp.ne.s32.totalorder %s98, %s112
      %p114 = scmp.eq.s32.totalorder %s20, 0
      %p115 = por %p113, %p114
      %p116 = scmp.le.s32.totalorder 1, %s14
      %p117 = scmp.lt.s32.totalorder %s14, 11
      %p118 = pnand %p116, %p117
      %p119 = pneg %p118
      // Predicated region
      $region9: #{fused_mlp.1} parent=5 // pred_check
        _
      $region10: #{fused_mlp.1} parent=5 // pred_check_branch
        %121 = sbr.rel (%p118) target = $region12
      $region11: #{fused_mlp.1} parent=5 // pred_region
        %s122 = ssub.s32 %s14, 1
        // Predicated region
        $region13: #{fused_mlp.1} parent=11 // pred_check
          %p123 = pneg %p35
        $region14: #{fused_mlp.1} parent=11 // pred_check_branch
          %125 = sbr.rel (%p123) target = $region16
        $region15: #{fused_mlp.1} parent=11 // pred_region
          %s127 = ssub.s32 1024, 1024
          %128 = vsyncadd [#allocation4], %s127
          %s130 = sshll.u32 [#allocation3], 4
          %s131 = int_to_ptr.vmem [resolvable:$true] %s130
          %133 = dma.hbm_to_vmem [thread:$0]  %s0, 1024, %s131, [#allocation4]
        $region16: #{fused_mlp.1} parent=11 // pred_fallthru
          _
      $region12: #{fused_mlp.1} parent=5 // pred_fallthru
        _
      %p134 = scmp.lt.s32.totalorder %s14, 10
      // Predicated region
      $region17: #{fused_mlp.1} parent=5 // pred_check
        %p135 = pneg %p134
      $region18: #{fused_mlp.1} parent=5 // pred_check_branch
        %137 = sbr.rel (%p135) target = $region20
      $region19: #{fused_mlp.1} parent=5 // pred_region
        // Predicated region
        $region21: #{fused_mlp.1} parent=19 // pred_check
          %p138 = pneg %p55
        $region22: #{fused_mlp.1} parent=19 // pred_check_branch
          %140 = sbr.rel (%p138) target = $region24
        $region23: #{fused_mlp.1} parent=19 // pred_region
          %s141 = sand.u32 %s14, 1
          %s142 = scalar_lea.sflag [#allocation7], %s141
          %s143 = sand.u32 %s45, 1
          %s144 = smul.addr %s143, 4096
          %s145 = scalar_lea.vmem [#allocation6], %s144
          %s147 = ssub.s32 65536, 65536
          %148 = vsyncadd %s142, %s147
          %s149 = smul.addr %s14, 1024
          %s150 = smul.addr %s149, 64
          %s151 = scalar_lea.hbm %s1, %s150
          %s152 = sshll.u32 %s145, 4
          %s153 = int_to_ptr.vmem [resolvable:$true] %s152
          %158 = dma.hbm_to_vmem [thread:$0]  %s151, 65536, %s153, %s142, 512, 512, 32
        $region24: #{fused_mlp.1} parent=19 // pred_fallthru
          _
        // Predicated region
        $region25: #{fused_mlp.1} parent=19 // pred_check
          %p159 = pneg %p81
        $region26: #{fused_mlp.1} parent=19 // pred_check_branch
          %161 = sbr.rel (%p159) target = $region28
        $region27: #{fused_mlp.1} parent=19 // pred_region
          %s162 = sand.u32 %s14, 1
          %s163 = scalar_lea.sflag [#allocation7], %s162
          %s164 = sand.u32 %s71, 1
          %s165 = smul.addr %s164, 8
          %s166 = scalar_lea.vmem [#allocation8], %s165
          %s168 = ssub.s32 128, 128
          %169 = vsyncadd %s163, %s168
          %s170 = smul.addr %s14, 8
          %s171 = smul.addr %s170, 16
          %s172 = scalar_lea.hbm %s2, %s171
          %s174 = sshll.u32 %s166, 4
          %s175 = int_to_ptr.vmem [resolvable:$true] %s174
          %177 = dma.hbm_to_vmem [thread:$0]  %s172, 128, %s175, %s163
        $region28: #{fused_mlp.1} parent=19 // pred_fallthru
          _
      $region20: #{fused_mlp.1} parent=5 // pred_fallthru
        _
      %p178 = scmp.le.s32.totalorder 1, %s14
      %p179 = scmp.lt.s32.totalorder %s14, 11
      %p180 = pnand %p178, %p179
      %p181 = pneg %p180
      // Predicated region
      $region29: #{fused_mlp.1} parent=5 // pred_check
        _
      $region30: #{fused_mlp.1} parent=5 // pred_check_branch
        %183 = sbr.rel (%p180) target = $region32
      $region31: #{fused_mlp.1} parent=5 // pred_region
        %s184 = ssub.s32 %s14, 1
        // Predicated region
        $region33: #{fused_mlp.1} parent=31 // pred_check
          %p185 = pneg %p35
        $region34: #{fused_mlp.1} parent=31 // pred_check_branch
          %187 = sbr.rel (%p185) target = $region36
        $region35: #{fused_mlp.1} parent=31 // pred_region
          %188 = dma.done [#allocation4], 1024
        $region36: #{fused_mlp.1} parent=31 // pred_fallthru
          _
        %s189 = sand.u32 %s19, 1
        %s190 = scalar_lea.sflag [#allocation7], %s189
        %s191 = sand.u32 %s48, 1
        %s192 = smul.addr %s191, 4096
        %s193 = scalar_lea.vmem [#allocation6], %s192
        // Predicated region
        $region37: #{fused_mlp.1} parent=31 // pred_check
          %p194 = pneg %p61
        $region38: #{fused_mlp.1} parent=31 // pred_check_branch
          %196 = sbr.rel (%p194) target = $region40
        $region39: #{fused_mlp.1} parent=31 // pred_region
          %197 = dma.done %s190, 65536
        $region40: #{fused_mlp.1} parent=31 // pred_fallthru
          _
        %s198 = sand.u32 %s19, 1
        %s199 = scalar_lea.sflag [#allocation7], %s198
        %s200 = sand.u32 %s74, 1
        %s201 = smul.addr %s200, 8
        %s202 = scalar_lea.vmem [#allocation8], %s201
        // Predicated region
        $region41: #{fused_mlp.1} parent=31 // pred_check
          %p203 = pneg %p87
        $region42: #{fused_mlp.1} parent=31 // pred_check_branch
          %205 = sbr.rel (%p203) target = $region44
        $region43: #{fused_mlp.1} parent=31 // pred_region
          %206 = dma.done %s199, 128
        $region44: #{fused_mlp.1} parent=31 // pred_fallthru
          _
        %p207 = pneg %p35
        %p208 = pneg %p32
        %s209 = sand.u32 %s19, 1
        %s210 = scalar_lea.sflag [#allocation7], %s209
        %s211 = sand.u32 %s48, 1
        %s212 = smul.addr %s211, 4096
        %s213 = scalar_lea.vmem [#allocation6], %s212
        %p214 = pneg %p61
        %p215 = pneg %p58
        %s216 = sand.u32 %s19, 1
        %s217 = scalar_lea.sflag [#allocation7], %s216
        %s218 = sand.u32 %s74, 1
        %s219 = smul.addr %s218, 8
        %s220 = scalar_lea.vmem [#allocation8], %s219
        %p221 = pneg %p87
        %p222 = pneg %p84
        %p223 = pneg %p108
        %p224 = pneg %p105
        %p225 = scmp.eq.s32.totalorder %s19, 0
        // Predicated region
        $region45: #{fused_mlp.1} parent=31 // pred_check
          %p226 = pneg %p225
        $region46: #{fused_mlp.1} parent=31 // pred_check_branch
          %228 = sbr.rel (%p226) target = $region48
        $region47: #{fused_mlp.1} parent=31 // pred_region
          %v229 = vld [vmem:[#allocation3] sm:$0xff]
          %v230 = vld [vmem:[#allocation3 + $0x8] sm:$0xff]
          %v231 = vld [vmem:[#allocation3 + $0x10] sm:$0xff]
          %v232 = vld [vmem:[#allocation3 + $0x18] sm:$0xff]
          %v233 = vld [vmem:[#allocation3 + $0x20] sm:$0xff]
          %v234 = vld [vmem:[#allocation3 + $0x28] sm:$0xff]
          %v235 = vld [vmem:[#allocation3 + $0x30] sm:$0xff]
          %v236 = vld [vmem:[#allocation3 + $0x38] sm:$0xff]
          %237 = vst [vmem:[#allocation2] sm:$0xff] %v229
          %238 = vst [vmem:[#allocation2 + $0x8] sm:$0xff] %v230
          %239 = vst [vmem:[#allocation2 + $0x10] sm:$0xff] %v231
          %240 = vst [vmem:[#allocation2 + $0x18] sm:$0xff] %v232
          %241 = vst [vmem:[#allocation2 + $0x20] sm:$0xff] %v233
          %242 = vst [vmem:[#allocation2 + $0x28] sm:$0xff] %v234
          %243 = vst [vmem:[#allocation2 + $0x30] sm:$0xff] %v235
          %244 = vst [vmem:[#allocation2 + $0x38] sm:$0xff] %v236
        $region48: #{fused_mlp.1} parent=31 // pred_fallthru
          _
        %v245 = vld [vmem:[#allocation2] sm:$0xff]
        %v246 = vld [vmem:[#allocation2 + $0x8] sm:$0xff]
        %v247 = vld [vmem:[#allocation2 + $0x10] sm:$0xff]
        %v248 = vld [vmem:[#allocation2 + $0x18] sm:$0xff]
        %v249 = vld [vmem:[#allocation2 + $0x20] sm:$0xff]
        %v250 = vld [vmem:[#allocation2 + $0x28] sm:$0xff]
        %v251 = vld [vmem:[#allocation2 + $0x30] sm:$0xff]
        %v252 = vld [vmem:[#allocation2 + $0x38] sm:$0xff]
        %v253 = vpack.c.bf16 %v245, %v245
        %v254 = vpack.c.bf16 %v246, %v246
        %v255 = vpack.c.bf16 %v247, %v247
        %v256 = vpack.c.bf16 %v248, %v248
        %v257 = vpack.c.bf16 %v249, %v249
        %v258 = vpack.c.bf16 %v250, %v250
        %v259 = vpack.c.bf16 %v251, %v251
        %v260 = vpack.c.bf16 %v252, %v252
        %v261 = vld [vmem:[%s193] sm:$0xff]
        %v262 = vld [vmem:[%s193 + $0x8] sm:$0xff]
        %v263 = vld [vmem:[%s193 + $0x10] sm:$0xff]
        %v264 = vld [vmem:[%s193 + $0x18] sm:$0xff]
        %v265 = vld [vmem:[%s193 + $0x20] sm:$0xff]
        %v266 = vld [vmem:[%s193 + $0x28] sm:$0xff]
        %v267 = vld [vmem:[%s193 + $0x30] sm:$0xff]
        %v268 = vld [vmem:[%s193 + $0x38] sm:$0xff]
        %v269 = vld [vmem:[%s193 + $0x40] sm:$0xff]
        %v270 = vld [vmem:[%s193 + $0x48] sm:$0xff]
        %v271 = vld [vmem:[%s193 + $0x50] sm:$0xff]
        %v272 = vld [vmem:[%s193 + $0x58] sm:$0xff]
        %v273 = vld [vmem:[%s193 + $0x60] sm:$0xff]
        %v274 = vld [vmem:[%s193 + $0x68] sm:$0xff]
        %v275 = vld [vmem:[%s193 + $0x70] sm:$0xff]
        %v276 = vld [vmem:[%s193 + $0x78] sm:$0xff]
        %v277 = vld [vmem:[%s193 + $0x80] sm:$0xff]
        %v278 = vld [vmem:[%s193 + $0x88] sm:$0xff]
        %v279 = vld [vmem:[%s193 + $0x90] sm:$0xff]
        %v280 = vld [vmem:[%s193 + $0x98] sm:$0xff]
        %v281 = vld [vmem:[%s193 + $0xa0] sm:$0xff]
        %v282 = vld [vmem:[%s193 + $0xa8] sm:$0xff]
        %v283 = vld [vmem:[%s193 + $0xb0] sm:$0xff]
        %v284 = vld [vmem:[%s193 + $0xb8] sm:$0xff]
        %v285 = vld [vmem:[%s193 + $0xc0] sm:$0xff]
        %v286 = vld [vmem:[%s193 + $0xc8] sm:$0xff]
        %v287 = vld [vmem:[%s193 + $0xd0] sm:$0xff]
        %v288 = vld [vmem:[%s193 + $0xd8] sm:$0xff]
        %v289 = vld [vmem:[%s193 + $0xe0] sm:$0xff]
        %v290 = vld [vmem:[%s193 + $0xe8] sm:$0xff]
        %v291 = vld [vmem:[%s193 + $0xf0] sm:$0xff]
        %v292 = vld [vmem:[%s193 + $0xf8] sm:$0xff]
        %v293 = vld [vmem:[%s193 + $0x100] sm:$0xff]
        %v294 = vld [vmem:[%s193 + $0x108] sm:$0xff]
        %v295 = vld [vmem:[%s193 + $0x110] sm:$0xff]
        %v296 = vld [vmem:[%s193 + $0x118] sm:$0xff]
        %v297 = vld [vmem:[%s193 + $0x120] sm:$0xff]
        %v298 = vld [vmem:[%s193 + $0x128] sm:$0xff]
        %v299 = vld [vmem:[%s193 + $0x130] sm:$0xff]
        %v300 = vld [vmem:[%s193 + $0x138] sm:$0xff]
        %v301 = vld [vmem:[%s193 + $0x140] sm:$0xff]
        %v302 = vld [vmem:[%s193 + $0x148] sm:$0xff]
        %v303 = vld [vmem:[%s193 + $0x150] sm:$0xff]
        %v304 = vld [vmem:[%s193 + $0x158] sm:$0xff]
        %v305 = vld [vmem:[%s193 + $0x160] sm:$0xff]
        %v306 = vld [vmem:[%s193 + $0x168] sm:$0xff]
        %v307 = vld [vmem:[%s193 + $0x170] sm:$0xff]
        %v308 = vld [vmem:[%s193 + $0x178] sm:$0xff]
        %v309 = vld [vmem:[%s193 + $0x180] sm:$0xff]
        %v310 = vld [vmem:[%s193 + $0x188] sm:$0xff]
        %v311 = vld [vmem:[%s193 + $0x190] sm:$0xff]
        %v312 = vld [vmem:[%s193 + $0x198] sm:$0xff]
        %v313 = vld [vmem:[%s193 + $0x1a0] sm:$0xff]
        %v314 = vld [vmem:[%s193 + $0x1a8] sm:$0xff]
        %v315 = vld [vmem:[%s193 + $0x1b0] sm:$0xff]
        %v316 = vld [vmem:[%s193 + $0x1b8] sm:$0xff]
        %v317 = vld [vmem:[%s193 + $0x1c0] sm:$0xff]
        %v318 = vld [vmem:[%s193 + $0x1c8] sm:$0xff]
        %v319 = vld [vmem:[%s193 + $0x1d0] sm:$0xff]
        %v320 = vld [vmem:[%s193 + $0x1d8] sm:$0xff]
        %v321 = vld [vmem:[%s193 + $0x1e0] sm:$0xff]
        %v322 = vld [vmem:[%s193 + $0x1e8] sm:$0xff]
        %v323 = vld [vmem:[%s193 + $0x1f0] sm:$0xff]
        %v324 = vld [vmem:[%s193 + $0x1f8] sm:$0xff]
        %v325 = vld [vmem:[%s193 + $0x200] sm:$0xff]
        %v326 = vld [vmem:[%s193 + $0x208] sm:$0xff]
        %v327 = vld [vmem:[%s193 + $0x210] sm:$0xff]
        %v328 = vld [vmem:[%s193 + $0x218] sm:$0xff]
        %v329 = vld [vmem:[%s193 + $0x220] sm:$0xff]
        %v330 = vld [vmem:[%s193 + $0x228] sm:$0xff]
        %v331 = vld [vmem:[%s193 + $0x230] sm:$0xff]
        %v332 = vld [vmem:[%s193 + $0x238] sm:$0xff]
        %v333 = vld [vmem:[%s193 + $0x240] sm:$0xff]
        %v334 = vld [vmem:[%s193 + $0x248] sm:$0xff]
        %v335 = vld [vmem:[%s193 + $0x250] sm:$0xff]
        %v336 = vld [vmem:[%s193 + $0x258] sm:$0xff]
        %v337 = vld [vmem:[%s193 + $0x260] sm:$0xff]
        %v338 = vld [vmem:[%s193 + $0x268] sm:$0xff]
        %v339 = vld [vmem:[%s193 + $0x270] sm:$0xff]
        %v340 = vld [vmem:[%s193 + $0x278] sm:$0xff]
        %v341 = vld [vmem:[%s193 + $0x280] sm:$0xff]
        %v342 = vld [vmem:[%s193 + $0x288] sm:$0xff]
        %v343 = vld [vmem:[%s193 + $0x290] sm:$0xff]
        %v344 = vld [vmem:[%s193 + $0x298] sm:$0xff]
        %v345 = vld [vmem:[%s193 + $0x2a0] sm:$0xff]
        %v346 = vld [vmem:[%s193 + $0x2a8] sm:$0xff]
        %v347 = vld [vmem:[%s193 + $0x2b0] sm:$0xff]
        %v348 = vld [vmem:[%s193 + $0x2b8] sm:$0xff]
        %v349 = vld [vmem:[%s193 + $0x2c0] sm:$0xff]
        %v350 = vld [vmem:[%s193 + $0x2c8] sm:$0xff]
        %v351 = vld [vmem:[%s193 + $0x2d0] sm:$0xff]
        %v352 = vld [vmem:[%s193 + $0x2d8] sm:$0xff]
        %v353 = vld [vmem:[%s193 + $0x2e0] sm:$0xff]
        %v354 = vld [vmem:[%s193 + $0x2e8] sm:$0xff]
        %v355 = vld [vmem:[%s193 + $0x2f0] sm:$0xff]
        %v356 = vld [vmem:[%s193 + $0x2f8] sm:$0xff]
        %v357 = vld [vmem:[%s193 + $0x300] sm:$0xff]
        %v358 = vld [vmem:[%s193 + $0x308] sm:$0xff]
        %v359 = vld [vmem:[%s193 + $0x310] sm:$0xff]
        %v360 = vld [vmem:[%s193 + $0x318] sm:$0xff]
        %v361 = vld [vmem:[%s193 + $0x320] sm:$0xff]
        %v362 = vld [vmem:[%s193 + $0x328] sm:$0xff]
        %v363 = vld [vmem:[%s193 + $0x330] sm:$0xff]
        %v364 = vld [vmem:[%s193 + $0x338] sm:$0xff]
        %v365 = vld [vmem:[%s193 + $0x340] sm:$0xff]
        %v366 = vld [vmem:[%s193 + $0x348] sm:$0xff]
        %v367 = vld [vmem:[%s193 + $0x350] sm:$0xff]
        %v368 = vld [vmem:[%s193 + $0x358] sm:$0xff]
        %v369 = vld [vmem:[%s193 + $0x360] sm:$0xff]
        %v370 = vld [vmem:[%s193 + $0x368] sm:$0xff]
        %v371 = vld [vmem:[%s193 + $0x370] sm:$0xff]
        %v372 = vld [vmem:[%s193 + $0x378] sm:$0xff]
        %v373 = vld [vmem:[%s193 + $0x380] sm:$0xff]
        %v374 = vld [vmem:[%s193 + $0x388] sm:$0xff]
        %v375 = vld [vmem:[%s193 + $0x390] sm:$0xff]
        %v376 = vld [vmem:[%s193 + $0x398] sm:$0xff]
        %v377 = vld [vmem:[%s193 + $0x3a0] sm:$0xff]
        %v378 = vld [vmem:[%s193 + $0x3a8] sm:$0xff]
        %v379 = vld [vmem:[%s193 + $0x3b0] sm:$0xff]
        %v380 = vld [vmem:[%s193 + $0x3b8] sm:$0xff]
        %v381 = vld [vmem:[%s193 + $0x3c0] sm:$0xff]
        %v382 = vld [vmem:[%s193 + $0x3c8] sm:$0xff]
        %v383 = vld [vmem:[%s193 + $0x3d0] sm:$0xff]
        %v384 = vld [vmem:[%s193 + $0x3d8] sm:$0xff]
        %v385 = vld [vmem:[%s193 + $0x3e0] sm:$0xff]
        %v386 = vld [vmem:[%s193 + $0x3e8] sm:$0xff]
        %v387 = vld [vmem:[%s193 + $0x3f0] sm:$0xff]
        %v388 = vld [vmem:[%s193 + $0x3f8] sm:$0xff]
        %v389 = vld [vmem:[%s193 + $0x400] sm:$0xff]
        %v390 = vld [vmem:[%s193 + $0x408] sm:$0xff]
        %v391 = vld [vmem:[%s193 + $0x410] sm:$0xff]
        %v392 = vld [vmem:[%s193 + $0x418] sm:$0xff]
        %v393 = vld [vmem:[%s193 + $0x420] sm:$0xff]
        %v394 = vld [vmem:[%s193 + $0x428] sm:$0xff]
        %v395 = vld [vmem:[%s193 + $0x430] sm:$0xff]
        %v396 = vld [vmem:[%s193 + $0x438] sm:$0xff]
        %v397 = vld [vmem:[%s193 + $0x440] sm:$0xff]
        %v398 = vld [vmem:[%s193 + $0x448] sm:$0xff]
        %v399 = vld [vmem:[%s193 + $0x450] sm:$0xff]
        %v400 = vld [vmem:[%s193 + $0x458] sm:$0xff]
        %v401 = vld [vmem:[%s193 + $0x460] sm:$0xff]
        %v402 = vld [vmem:[%s193 + $0x468] sm:$0xff]
        %v403 = vld [vmem:[%s193 + $0x470] sm:$0xff]
        %v404 = vld [vmem:[%s193 + $0x478] sm:$0xff]
        %v405 = vld [vmem:[%s193 + $0x480] sm:$0xff]
        %v406 = vld [vmem:[%s193 + $0x488] sm:$0xff]
        %v407 = vld [vmem:[%s193 + $0x490] sm:$0xff]
        %v408 = vld [vmem:[%s193 + $0x498] sm:$0xff]
        %v409 = vld [vmem:[%s193 + $0x4a0] sm:$0xff]
        %v410 = vld [vmem:[%s193 + $0x4a8] sm:$0xff]
        %v411 = vld [vmem:[%s193 + $0x4b0] sm:$0xff]
        %v412 = vld [vmem:[%s193 + $0x4b8] sm:$0xff]
        %v413 = vld [vmem:[%s193 + $0x4c0] sm:$0xff]
        %v414 = vld [vmem:[%s193 + $0x4c8] sm:$0xff]
        %v415 = vld [vmem:[%s193 + $0x4d0] sm:$0xff]
        %v416 = vld [vmem:[%s193 + $0x4d8] sm:$0xff]
        %v417 = vld [vmem:[%s193 + $0x4e0] sm:$0xff]
        %v418 = vld [vmem:[%s193 + $0x4e8] sm:$0xff]
        %v419 = vld [vmem:[%s193 + $0x4f0] sm:$0xff]
        %v420 = vld [vmem:[%s193 + $0x4f8] sm:$0xff]
        %v421 = vld [vmem:[%s193 + $0x500] sm:$0xff]
        %v422 = vld [vmem:[%s193 + $0x508] sm:$0xff]
        %v423 = vld [vmem:[%s193 + $0x510] sm:$0xff]
        %v424 = vld [vmem:[%s193 + $0x518] sm:$0xff]
        %v425 = vld [vmem:[%s193 + $0x520] sm:$0xff]
        %v426 = vld [vmem:[%s193 + $0x528] sm:$0xff]
        %v427 = vld [vmem:[%s193 + $0x530] sm:$0xff]
        %v428 = vld [vmem:[%s193 + $0x538] sm:$0xff]
        %v429 = vld [vmem:[%s193 + $0x540] sm:$0xff]
        %v430 = vld [vmem:[%s193 + $0x548] sm:$0xff]
        %v431 = vld [vmem:[%s193 + $0x550] sm:$0xff]
        %v432 = vld [vmem:[%s193 + $0x558] sm:$0xff]
        %v433 = vld [vmem:[%s193 + $0x560] sm:$0xff]
        %v434 = vld [vmem:[%s193 + $0x568] sm:$0xff]
        %v435 = vld [vmem:[%s193 + $0x570] sm:$0xff]
        %v436 = vld [vmem:[%s193 + $0x578] sm:$0xff]
        %v437 = vld [vmem:[%s193 + $0x580] sm:$0xff]
        %v438 = vld [vmem:[%s193 + $0x588] sm:$0xff]
        %v439 = vld [vmem:[%s193 + $0x590] sm:$0xff]
        %v440 = vld [vmem:[%s193 + $0x598] sm:$0xff]
        %v441 = vld [vmem:[%s193 + $0x5a0] sm:$0xff]
        %v442 = vld [vmem:[%s193 + $0x5a8] sm:$0xff]
        %v443 = vld [vmem:[%s193 + $0x5b0] sm:$0xff]
        %v444 = vld [vmem:[%s193 + $0x5b8] sm:$0xff]
        %v445 = vld [vmem:[%s193 + $0x5c0] sm:$0xff]
        %v446 = vld [vmem:[%s193 + $0x5c8] sm:$0xff]
        %v447 = vld [vmem:[%s193 + $0x5d0] sm:$0xff]
        %v448 = vld [vmem:[%s193 + $0x5d8] sm:$0xff]
        %v449 = vld [vmem:[%s193 + $0x5e0] sm:$0xff]
        %v450 = vld [vmem:[%s193 + $0x5e8] sm:$0xff]
        %v451 = vld [vmem:[%s193 + $0x5f0] sm:$0xff]
        %v452 = vld [vmem:[%s193 + $0x5f8] sm:$0xff]
        %v453 = vld [vmem:[%s193 + $0x600] sm:$0xff]
        %v454 = vld [vmem:[%s193 + $0x608] sm:$0xff]
        %v455 = vld [vmem:[%s193 + $0x610] sm:$0xff]
        %v456 = vld [vmem:[%s193 + $0x618] sm:$0xff]
        %v457 = vld [vmem:[%s193 + $0x620] sm:$0xff]
        %v458 = vld [vmem:[%s193 + $0x628] sm:$0xff]
        %v459 = vld [vmem:[%s193 + $0x630] sm:$0xff]
        %v460 = vld [vmem:[%s193 + $0x638] sm:$0xff]
        %v461 = vld [vmem:[%s193 + $0x640] sm:$0xff]
        %v462 = vld [vmem:[%s193 + $0x648] sm:$0xff]
        %v463 = vld [vmem:[%s193 + $0x650] sm:$0xff]
        %v464 = vld [vmem:[%s193 + $0x658] sm:$0xff]
        %v465 = vld [vmem:[%s193 + $0x660] sm:$0xff]
        %v466 = vld [vmem:[%s193 + $0x668] sm:$0xff]
        %v467 = vld [vmem:[%s193 + $0x670] sm:$0xff]
        %v468 = vld [vmem:[%s193 + $0x678] sm:$0xff]
        %v469 = vld [vmem:[%s193 + $0x680] sm:$0xff]
        %v470 = vld [vmem:[%s193 + $0x688] sm:$0xff]
        %v471 = vld [vmem:[%s193 + $0x690] sm:$0xff]
        %v472 = vld [vmem:[%s193 + $0x698] sm:$0xff]
        %v473 = vld [vmem:[%s193 + $0x6a0] sm:$0xff]
        %v474 = vld [vmem:[%s193 + $0x6a8] sm:$0xff]
        %v475 = vld [vmem:[%s193 + $0x6b0] sm:$0xff]
        %v476 = vld [vmem:[%s193 + $0x6b8] sm:$0xff]
        %v477 = vld [vmem:[%s193 + $0x6c0] sm:$0xff]
        %v478 = vld [vmem:[%s193 + $0x6c8] sm:$0xff]
        %v479 = vld [vmem:[%s193 + $0x6d0] sm:$0xff]
        %v480 = vld [vmem:[%s193 + $0x6d8] sm:$0xff]
        %v481 = vld [vmem:[%s193 + $0x6e0] sm:$0xff]
        %v482 = vld [vmem:[%s193 + $0x6e8] sm:$0xff]
        %v483 = vld [vmem:[%s193 + $0x6f0] sm:$0xff]
        %v484 = vld [vmem:[%s193 + $0x6f8] sm:$0xff]
        %v485 = vld [vmem:[%s193 + $0x700] sm:$0xff]
        %v486 = vld [vmem:[%s193 + $0x708] sm:$0xff]
        %v487 = vld [vmem:[%s193 + $0x710] sm:$0xff]
        %v488 = vld [vmem:[%s193 + $0x718] sm:$0xff]
        %v489 = vld [vmem:[%s193 + $0x720] sm:$0xff]
        %v490 = vld [vmem:[%s193 + $0x728] sm:$0xff]
        %v491 = vld [vmem:[%s193 + $0x730] sm:$0xff]
        %v492 = vld [vmem:[%s193 + $0x738] sm:$0xff]
        %v493 = vld [vmem:[%s193 + $0x740] sm:$0xff]
        %v494 = vld [vmem:[%s193 + $0x748] sm:$0xff]
        %v495 = vld [vmem:[%s193 + $0x750] sm:$0xff]
        %v496 = vld [vmem:[%s193 + $0x758] sm:$0xff]
        %v497 = vld [vmem:[%s193 + $0x760] sm:$0xff]
        %v498 = vld [vmem:[%s193 + $0x768] sm:$0xff]
        %v499 = vld [vmem:[%s193 + $0x770] sm:$0xff]
        %v500 = vld [vmem:[%s193 + $0x778] sm:$0xff]
        %v501 = vld [vmem:[%s193 + $0x780] sm:$0xff]
        %v502 = vld [vmem:[%s193 + $0x788] sm:$0xff]
        %v503 = vld [vmem:[%s193 + $0x790] sm:$0xff]
        %v504 = vld [vmem:[%s193 + $0x798] sm:$0xff]
        %v505 = vld [vmem:[%s193 + $0x7a0] sm:$0xff]
        %v506 = vld [vmem:[%s193 + $0x7a8] sm:$0xff]
        %v507 = vld [vmem:[%s193 + $0x7b0] sm:$0xff]
        %v508 = vld [vmem:[%s193 + $0x7b8] sm:$0xff]
        %v509 = vld [vmem:[%s193 + $0x7c0] sm:$0xff]
        %v510 = vld [vmem:[%s193 + $0x7c8] sm:$0xff]
        %v511 = vld [vmem:[%s193 + $0x7d0] sm:$0xff]
        %v512 = vld [vmem:[%s193 + $0x7d8] sm:$0xff]
        %v513 = vld [vmem:[%s193 + $0x7e0] sm:$0xff]
        %v514 = vld [vmem:[%s193 + $0x7e8] sm:$0xff]
        %v515 = vld [vmem:[%s193 + $0x7f0] sm:$0xff]
        %v516 = vld [vmem:[%s193 + $0x7f8] sm:$0xff]
        %v517 = vld [vmem:[%s193 + $0x800] sm:$0xff]
        %v518 = vld [vmem:[%s193 + $0x808] sm:$0xff]
        %v519 = vld [vmem:[%s193 + $0x810] sm:$0xff]
        %v520 = vld [vmem:[%s193 + $0x818] sm:$0xff]
        %v521 = vld [vmem:[%s193 + $0x820] sm:$0xff]
        %v522 = vld [vmem:[%s193 + $0x828] sm:$0xff]
        %v523 = vld [vmem:[%s193 + $0x830] sm:$0xff]
        %v524 = vld [vmem:[%s193 + $0x838] sm:$0xff]
        %v525 = vld [vmem:[%s193 + $0x840] sm:$0xff]
        %v526 = vld [vmem:[%s193 + $0x848] sm:$0xff]
        %v527 = vld [vmem:[%s193 + $0x850] sm:$0xff]
        %v528 = vld [vmem:[%s193 + $0x858] sm:$0xff]
        %v529 = vld [vmem:[%s193 + $0x860] sm:$0xff]
        %v530 = vld [vmem:[%s193 + $0x868] sm:$0xff]
        %v531 = vld [vmem:[%s193 + $0x870] sm:$0xff]
        %v532 = vld [vmem:[%s193 + $0x878] sm:$0xff]
        %v533 = vld [vmem:[%s193 + $0x880] sm:$0xff]
        %v534 = vld [vmem:[%s193 + $0x888] sm:$0xff]
        %v535 = vld [vmem:[%s193 + $0x890] sm:$0xff]
        %v536 = vld [vmem:[%s193 + $0x898] sm:$0xff]
        %v537 = vld [vmem:[%s193 + $0x8a0] sm:$0xff]
        %v538 = vld [vmem:[%s193 + $0x8a8] sm:$0xff]
        %v539 = vld [vmem:[%s193 + $0x8b0] sm:$0xff]
        %v540 = vld [vmem:[%s193 + $0x8b8] sm:$0xff]
        %v541 = vld [vmem:[%s193 + $0x8c0] sm:$0xff]
        %v542 = vld [vmem:[%s193 + $0x8c8] sm:$0xff]
        %v543 = vld [vmem:[%s193 + $0x8d0] sm:$0xff]
        %v544 = vld [vmem:[%s193 + $0x8d8] sm:$0xff]
        %v545 = vld [vmem:[%s193 + $0x8e0] sm:$0xff]
        %v546 = vld [vmem:[%s193 + $0x8e8] sm:$0xff]
        %v547 = vld [vmem:[%s193 + $0x8f0] sm:$0xff]
        %v548 = vld [vmem:[%s193 + $0x8f8] sm:$0xff]
        %v549 = vld [vmem:[%s193 + $0x900] sm:$0xff]
        %v550 = vld [vmem:[%s193 + $0x908] sm:$0xff]
        %v551 = vld [vmem:[%s193 + $0x910] sm:$0xff]
        %v552 = vld [vmem:[%s193 + $0x918] sm:$0xff]
        %v553 = vld [vmem:[%s193 + $0x920] sm:$0xff]
        %v554 = vld [vmem:[%s193 + $0x928] sm:$0xff]
        %v555 = vld [vmem:[%s193 + $0x930] sm:$0xff]
        %v556 = vld [vmem:[%s193 + $0x938] sm:$0xff]
        %v557 = vld [vmem:[%s193 + $0x940] sm:$0xff]
        %v558 = vld [vmem:[%s193 + $0x948] sm:$0xff]
        %v559 = vld [vmem:[%s193 + $0x950] sm:$0xff]
        %v560 = vld [vmem:[%s193 + $0x958] sm:$0xff]
        %v561 = vld [vmem:[%s193 + $0x960] sm:$0xff]
        %v562 = vld [vmem:[%s193 + $0x968] sm:$0xff]
        %v563 = vld [vmem:[%s193 + $0x970] sm:$0xff]
        %v564 = vld [vmem:[%s193 + $0x978] sm:$0xff]
        %v565 = vld [vmem:[%s193 + $0x980] sm:$0xff]
        %v566 = vld [vmem:[%s193 + $0x988] sm:$0xff]
        %v567 = vld [vmem:[%s193 + $0x990] sm:$0xff]
        %v568 = vld [vmem:[%s193 + $0x998] sm:$0xff]
        %v569 = vld [vmem:[%s193 + $0x9a0] sm:$0xff]
        %v570 = vld [vmem:[%s193 + $0x9a8] sm:$0xff]
        %v571 = vld [vmem:[%s193 + $0x9b0] sm:$0xff]
        %v572 = vld [vmem:[%s193 + $0x9b8] sm:$0xff]
        %v573 = vld [vmem:[%s193 + $0x9c0] sm:$0xff]
        %v574 = vld [vmem:[%s193 + $0x9c8] sm:$0xff]
        %v575 = vld [vmem:[%s193 + $0x9d0] sm:$0xff]
        %v576 = vld [vmem:[%s193 + $0x9d8] sm:$0xff]
        %v577 = vld [vmem:[%s193 + $0x9e0] sm:$0xff]
        %v578 = vld [vmem:[%s193 + $0x9e8] sm:$0xff]
        %v579 = vld [vmem:[%s193 + $0x9f0] sm:$0xff]
        %v580 = vld [vmem:[%s193 + $0x9f8] sm:$0xff]
        %v581 = vld [vmem:[%s193 + $0xa00] sm:$0xff]
        %v582 = vld [vmem:[%s193 + $0xa08] sm:$0xff]
        %v583 = vld [vmem:[%s193 + $0xa10] sm:$0xff]
        %v584 = vld [vmem:[%s193 + $0xa18] sm:$0xff]
        %v585 = vld [vmem:[%s193 + $0xa20] sm:$0xff]
        %v586 = vld [vmem:[%s193 + $0xa28] sm:$0xff]
        %v587 = vld [vmem:[%s193 + $0xa30] sm:$0xff]
        %v588 = vld [vmem:[%s193 + $0xa38] sm:$0xff]
        %v589 = vld [vmem:[%s193 + $0xa40] sm:$0xff]
        %v590 = vld [vmem:[%s193 + $0xa48] sm:$0xff]
        %v591 = vld [vmem:[%s193 + $0xa50] sm:$0xff]
        %v592 = vld [vmem:[%s193 + $0xa58] sm:$0xff]
        %v593 = vld [vmem:[%s193 + $0xa60] sm:$0xff]
        %v594 = vld [vmem:[%s193 + $0xa68] sm:$0xff]
        %v595 = vld [vmem:[%s193 + $0xa70] sm:$0xff]
        %v596 = vld [vmem:[%s193 + $0xa78] sm:$0xff]
        %v597 = vld [vmem:[%s193 + $0xa80] sm:$0xff]
        %v598 = vld [vmem:[%s193 + $0xa88] sm:$0xff]
        %v599 = vld [vmem:[%s193 + $0xa90] sm:$0xff]
        %v600 = vld [vmem:[%s193 + $0xa98] sm:$0xff]
        %v601 = vld [vmem:[%s193 + $0xaa0] sm:$0xff]
        %v602 = vld [vmem:[%s193 + $0xaa8] sm:$0xff]
        %v603 = vld [vmem:[%s193 + $0xab0] sm:$0xff]
        %v604 = vld [vmem:[%s193 + $0xab8] sm:$0xff]
        %v605 = vld [vmem:[%s193 + $0xac0] sm:$0xff]
        %v606 = vld [vmem:[%s193 + $0xac8] sm:$0xff]
        %v607 = vld [vmem:[%s193 + $0xad0] sm:$0xff]
        %v608 = vld [vmem:[%s193 + $0xad8] sm:$0xff]
        %v609 = vld [vmem:[%s193 + $0xae0] sm:$0xff]
        %v610 = vld [vmem:[%s193 + $0xae8] sm:$0xff]
        %v611 = vld [vmem:[%s193 + $0xaf0] sm:$0xff]
        %v612 = vld [vmem:[%s193 + $0xaf8] sm:$0xff]
        %v613 = vld [vmem:[%s193 + $0xb00] sm:$0xff]
        %v614 = vld [vmem:[%s193 + $0xb08] sm:$0xff]
        %v615 = vld [vmem:[%s193 + $0xb10] sm:$0xff]
        %v616 = vld [vmem:[%s193 + $0xb18] sm:$0xff]
        %v617 = vld [vmem:[%s193 + $0xb20] sm:$0xff]
        %v618 = vld [vmem:[%s193 + $0xb28] sm:$0xff]
        %v619 = vld [vmem:[%s193 + $0xb30] sm:$0xff]
        %v620 = vld [vmem:[%s193 + $0xb38] sm:$0xff]
        %v621 = vld [vmem:[%s193 + $0xb40] sm:$0xff]
        %v622 = vld [vmem:[%s193 + $0xb48] sm:$0xff]
        %v623 = vld [vmem:[%s193 + $0xb50] sm:$0xff]
        %v624 = vld [vmem:[%s193 + $0xb58] sm:$0xff]
        %v625 = vld [vmem:[%s193 + $0xb60] sm:$0xff]
        %v626 = vld [vmem:[%s193 + $0xb68] sm:$0xff]
        %v627 = vld [vmem:[%s193 + $0xb70] sm:$0xff]
        %v628 = vld [vmem:[%s193 + $0xb78] sm:$0xff]
        %v629 = vld [vmem:[%s193 + $0xb80] sm:$0xff]
        %v630 = vld [vmem:[%s193 + $0xb88] sm:$0xff]
        %v631 = vld [vmem:[%s193 + $0xb90] sm:$0xff]
        %v632 = vld [vmem:[%s193 + $0xb98] sm:$0xff]
        %v633 = vld [vmem:[%s193 + $0xba0] sm:$0xff]
        %v634 = vld [vmem:[%s193 + $0xba8] sm:$0xff]
        %v635 = vld [vmem:[%s193 + $0xbb0] sm:$0xff]
        %v636 = vld [vmem:[%s193 + $0xbb8] sm:$0xff]
        %v637 = vld [vmem:[%s193 + $0xbc0] sm:$0xff]
        %v638 = vld [vmem:[%s193 + $0xbc8] sm:$0xff]
        %v639 = vld [vmem:[%s193 + $0xbd0] sm:$0xff]
        %v640 = vld [vmem:[%s193 + $0xbd8] sm:$0xff]
        %v641 = vld [vmem:[%s193 + $0xbe0] sm:$0xff]
        %v642 = vld [vmem:[%s193 + $0xbe8] sm:$0xff]
        %v643 = vld [vmem:[%s193 + $0xbf0] sm:$0xff]
        %v644 = vld [vmem:[%s193 + $0xbf8] sm:$0xff]
        %v645 = vld [vmem:[%s193 + $0xc00] sm:$0xff]
        %v646 = vld [vmem:[%s193 + $0xc08] sm:$0xff]
        %v647 = vld [vmem:[%s193 + $0xc10] sm:$0xff]
        %v648 = vld [vmem:[%s193 + $0xc18] sm:$0xff]
        %v649 = vld [vmem:[%s193 + $0xc20] sm:$0xff]
        %v650 = vld [vmem:[%s193 + $0xc28] sm:$0xff]
        %v651 = vld [vmem:[%s193 + $0xc30] sm:$0xff]
        %v652 = vld [vmem:[%s193 + $0xc38] sm:$0xff]
        %v653 = vld [vmem:[%s193 + $0xc40] sm:$0xff]
        %v654 = vld [vmem:[%s193 + $0xc48] sm:$0xff]
        %v655 = vld [vmem:[%s193 + $0xc50] sm:$0xff]
        %v656 = vld [vmem:[%s193 + $0xc58] sm:$0xff]
        %v657 = vld [vmem:[%s193 + $0xc60] sm:$0xff]
        %v658 = vld [vmem:[%s193 + $0xc68] sm:$0xff]
        %v659 = vld [vmem:[%s193 + $0xc70] sm:$0xff]
        %v660 = vld [vmem:[%s193 + $0xc78] sm:$0xff]
        %v661 = vld [vmem:[%s193 + $0xc80] sm:$0xff]
        %v662 = vld [vmem:[%s193 + $0xc88] sm:$0xff]
        %v663 = vld [vmem:[%s193 + $0xc90] sm:$0xff]
        %v664 = vld [vmem:[%s193 + $0xc98] sm:$0xff]
        %v665 = vld [vmem:[%s193 + $0xca0] sm:$0xff]
        %v666 = vld [vmem:[%s193 + $0xca8] sm:$0xff]
        %v667 = vld [vmem:[%s193 + $0xcb0] sm:$0xff]
        %v668 = vld [vmem:[%s193 + $0xcb8] sm:$0xff]
        %v669 = vld [vmem:[%s193 + $0xcc0] sm:$0xff]
        %v670 = vld [vmem:[%s193 + $0xcc8] sm:$0xff]
        %v671 = vld [vmem:[%s193 + $0xcd0] sm:$0xff]
        %v672 = vld [vmem:[%s193 + $0xcd8] sm:$0xff]
        %v673 = vld [vmem:[%s193 + $0xce0] sm:$0xff]
        %v674 = vld [vmem:[%s193 + $0xce8] sm:$0xff]
        %v675 = vld [vmem:[%s193 + $0xcf0] sm:$0xff]
        %v676 = vld [vmem:[%s193 + $0xcf8] sm:$0xff]
        %v677 = vld [vmem:[%s193 + $0xd00] sm:$0xff]
        %v678 = vld [vmem:[%s193 + $0xd08] sm:$0xff]
        %v679 = vld [vmem:[%s193 + $0xd10] sm:$0xff]
        %v680 = vld [vmem:[%s193 + $0xd18] sm:$0xff]
        %v681 = vld [vmem:[%s193 + $0xd20] sm:$0xff]
        %v682 = vld [vmem:[%s193 + $0xd28] sm:$0xff]
        %v683 = vld [vmem:[%s193 + $0xd30] sm:$0xff]
        %v684 = vld [vmem:[%s193 + $0xd38] sm:$0xff]
        %v685 = vld [vmem:[%s193 + $0xd40] sm:$0xff]
        %v686 = vld [vmem:[%s193 + $0xd48] sm:$0xff]
        %v687 = vld [vmem:[%s193 + $0xd50] sm:$0xff]
        %v688 = vld [vmem:[%s193 + $0xd58] sm:$0xff]
        %v689 = vld [vmem:[%s193 + $0xd60] sm:$0xff]
        %v690 = vld [vmem:[%s193 + $0xd68] sm:$0xff]
        %v691 = vld [vmem:[%s193 + $0xd70] sm:$0xff]
        %v692 = vld [vmem:[%s193 + $0xd78] sm:$0xff]
        %v693 = vld [vmem:[%s193 + $0xd80] sm:$0xff]
        %v694 = vld [vmem:[%s193 + $0xd88] sm:$0xff]
        %v695 = vld [vmem:[%s193 + $0xd90] sm:$0xff]
        %v696 = vld [vmem:[%s193 + $0xd98] sm:$0xff]
        %v697 = vld [vmem:[%s193 + $0xda0] sm:$0xff]
        %v698 = vld [vmem:[%s193 + $0xda8] sm:$0xff]
        %v699 = vld [vmem:[%s193 + $0xdb0] sm:$0xff]
        %v700 = vld [vmem:[%s193 + $0xdb8] sm:$0xff]
        %v701 = vld [vmem:[%s193 + $0xdc0] sm:$0xff]
        %v702 = vld [vmem:[%s193 + $0xdc8] sm:$0xff]
        %v703 = vld [vmem:[%s193 + $0xdd0] sm:$0xff]
        %v704 = vld [vmem:[%s193 + $0xdd8] sm:$0xff]
        %v705 = vld [vmem:[%s193 + $0xde0] sm:$0xff]
        %v706 = vld [vmem:[%s193 + $0xde8] sm:$0xff]
        %v707 = vld [vmem:[%s193 + $0xdf0] sm:$0xff]
        %v708 = vld [vmem:[%s193 + $0xdf8] sm:$0xff]
        %v709 = vld [vmem:[%s193 + $0xe00] sm:$0xff]
        %v710 = vld [vmem:[%s193 + $0xe08] sm:$0xff]
        %v711 = vld [vmem:[%s193 + $0xe10] sm:$0xff]
        %v712 = vld [vmem:[%s193 + $0xe18] sm:$0xff]
        %v713 = vld [vmem:[%s193 + $0xe20] sm:$0xff]
        %v714 = vld [vmem:[%s193 + $0xe28] sm:$0xff]
        %v715 = vld [vmem:[%s193 + $0xe30] sm:$0xff]
        %v716 = vld [vmem:[%s193 + $0xe38] sm:$0xff]
        %v717 = vld [vmem:[%s193 + $0xe40] sm:$0xff]
        %v718 = vld [vmem:[%s193 + $0xe48] sm:$0xff]
        %v719 = vld [vmem:[%s193 + $0xe50] sm:$0xff]
        %v720 = vld [vmem:[%s193 + $0xe58] sm:$0xff]
        %v721 = vld [vmem:[%s193 + $0xe60] sm:$0xff]
        %v722 = vld [vmem:[%s193 + $0xe68] sm:$0xff]
        %v723 = vld [vmem:[%s193 + $0xe70] sm:$0xff]
        %v724 = vld [vmem:[%s193 + $0xe78] sm:$0xff]
        %v725 = vld [vmem:[%s193 + $0xe80] sm:$0xff]
        %v726 = vld [vmem:[%s193 + $0xe88] sm:$0xff]
        %v727 = vld [vmem:[%s193 + $0xe90] sm:$0xff]
        %v728 = vld [vmem:[%s193 + $0xe98] sm:$0xff]
        %v729 = vld [vmem:[%s193 + $0xea0] sm:$0xff]
        %v730 = vld [vmem:[%s193 + $0xea8] sm:$0xff]
        %v731 = vld [vmem:[%s193 + $0xeb0] sm:$0xff]
        %v732 = vld [vmem:[%s193 + $0xeb8] sm:$0xff]
        %v733 = vld [vmem:[%s193 + $0xec0] sm:$0xff]
        %v734 = vld [vmem:[%s193 + $0xec8] sm:$0xff]
        %v735 = vld [vmem:[%s193 + $0xed0] sm:$0xff]
        %v736 = vld [vmem:[%s193 + $0xed8] sm:$0xff]
        %v737 = vld [vmem:[%s193 + $0xee0] sm:$0xff]
        %v738 = vld [vmem:[%s193 + $0xee8] sm:$0xff]
        %v739 = vld [vmem:[%s193 + $0xef0] sm:$0xff]
        %v740 = vld [vmem:[%s193 + $0xef8] sm:$0xff]
        %v741 = vld [vmem:[%s193 + $0xf00] sm:$0xff]
        %v742 = vld [vmem:[%s193 + $0xf08] sm:$0xff]
        %v743 = vld [vmem:[%s193 + $0xf10] sm:$0xff]
        %v744 = vld [vmem:[%s193 + $0xf18] sm:$0xff]
        %v745 = vld [vmem:[%s193 + $0xf20] sm:$0xff]
        %v746 = vld [vmem:[%s193 + $0xf28] sm:$0xff]
        %v747 = vld [vmem:[%s193 + $0xf30] sm:$0xff]
        %v748 = vld [vmem:[%s193 + $0xf38] sm:$0xff]
        %v749 = vld [vmem:[%s193 + $0xf40] sm:$0xff]
        %v750 = vld [vmem:[%s193 + $0xf48] sm:$0xff]
        %v751 = vld [vmem:[%s193 + $0xf50] sm:$0xff]
        %v752 = vld [vmem:[%s193 + $0xf58] sm:$0xff]
        %v753 = vld [vmem:[%s193 + $0xf60] sm:$0xff]
        %v754 = vld [vmem:[%s193 + $0xf68] sm:$0xff]
        %v755 = vld [vmem:[%s193 + $0xf70] sm:$0xff]
        %v756 = vld [vmem:[%s193 + $0xf78] sm:$0xff]
        %v757 = vld [vmem:[%s193 + $0xf80] sm:$0xff]
        %v758 = vld [vmem:[%s193 + $0xf88] sm:$0xff]
        %v759 = vld [vmem:[%s193 + $0xf90] sm:$0xff]
        %v760 = vld [vmem:[%s193 + $0xf98] sm:$0xff]
        %v761 = vld [vmem:[%s193 + $0xfa0] sm:$0xff]
        %v762 = vld [vmem:[%s193 + $0xfa8] sm:$0xff]
        %v763 = vld [vmem:[%s193 + $0xfb0] sm:$0xff]
        %v764 = vld [vmem:[%s193 + $0xfb8] sm:$0xff]
        %v765 = vld [vmem:[%s193 + $0xfc0] sm:$0xff]
        %v766 = vld [vmem:[%s193 + $0xfc8] sm:$0xff]
        %v767 = vld [vmem:[%s193 + $0xfd0] sm:$0xff]
        %v768 = vld [vmem:[%s193 + $0xfd8] sm:$0xff]
        %v769 = vld [vmem:[%s193 + $0xfe0] sm:$0xff]
        %v770 = vld [vmem:[%s193 + $0xfe8] sm:$0xff]
        %v771 = vld [vmem:[%s193 + $0xff0] sm:$0xff]
        %v772 = vld [vmem:[%s193 + $0xff8] sm:$0xff]
        %v773 = vld [vmem:[%s202] sm:$0xff]
        %v775 = vlaneseq
        %v776 = vshrl.u32 %v775, 7
        %v777 = vsub.s32 0, %v776
        %v778 = vrot.slane %v773, %v777
        %v779 = vlaneseq
        %v780 = vshrl.u32 %v779, 7
        %v781 = vsub.s32 1, %v780
        %v782 = vrot.slane %v773, %v781
        %v783 = vlaneseq
        %v784 = vshrl.u32 %v783, 7
        %v785 = vsub.s32 2, %v784
        %v786 = vrot.slane %v773, %v785
        %v787 = vlaneseq
        %v788 = vshrl.u32 %v787, 7
        %v789 = vsub.s32 3, %v788
        %v790 = vrot.slane %v773, %v789
        %v791 = vlaneseq
        %v792 = vshrl.u32 %v791, 7
        %v793 = vsub.s32 4, %v792
        %v794 = vrot.slane %v773, %v793
        %v795 = vlaneseq
        %v796 = vshrl.u32 %v795, 7
        %v797 = vsub.s32 5, %v796
        %v798 = vrot.slane %v773, %v797
        %v799 = vlaneseq
        %v800 = vshrl.u32 %v799, 7
        %v801 = vsub.s32 6, %v800
        %v802 = vrot.slane %v773, %v801
        %v803 = vlaneseq
        %v804 = vshrl.u32 %v803, 7
        %v805 = vsub.s32 7, %v804
        %v806 = vrot.slane %v773, %v805
        %v1327 = vunpack.c.l.b16 %v261
        %v1328 = vunpack.c.h.b16 %v261
        %v1329 = vunpack.c.l.b16 %v262
        %v1330 = vunpack.c.h.b16 %v262
        %v1331 = vunpack.c.l.b16 %v263
        %v1332 = vunpack.c.h.b16 %v263
        %v1333 = vunpack.c.l.b16 %v264
        %v1334 = vunpack.c.h.b16 %v264
        %v1335 = vunpack.c.l.b16 %v265
        %v1336 = vunpack.c.h.b16 %v265
        %v1337 = vunpack.c.l.b16 %v266
        %v1338 = vunpack.c.h.b16 %v266
        %v1339 = vunpack.c.l.b16 %v267
        %v1340 = vunpack.c.h.b16 %v267
        %v1341 = vunpack.c.l.b16 %v268
        %v1342 = vunpack.c.h.b16 %v268
        %v1343 = vunpack.c.l.b16 %v269
        %v1344 = vunpack.c.h.b16 %v269
        %v1345 = vunpack.c.l.b16 %v270
        %v1346 = vunpack.c.h.b16 %v270
        %v1347 = vunpack.c.l.b16 %v271
        %v1348 = vunpack.c.h.b16 %v271
        %v1349 = vunpack.c.l.b16 %v272
        %v1350 = vunpack.c.h.b16 %v272
        %v1351 = vunpack.c.l.b16 %v273
        %v1352 = vunpack.c.h.b16 %v273
        %v1353 = vunpack.c.l.b16 %v274
        %v1354 = vunpack.c.h.b16 %v274
        %v1355 = vunpack.c.l.b16 %v275
        %v1356 = vunpack.c.h.b16 %v275
        %v1357 = vunpack.c.l.b16 %v276
        %v1358 = vunpack.c.h.b16 %v276
        %v1359 = vunpack.c.l.b16 %v277
        %v1360 = vunpack.c.h.b16 %v277
        %v1361 = vunpack.c.l.b16 %v278
        %v1362 = vunpack.c.h.b16 %v278
        %v1363 = vunpack.c.l.b16 %v279
        %v1364 = vunpack.c.h.b16 %v279
        %v1365 = vunpack.c.l.b16 %v280
        %v1366 = vunpack.c.h.b16 %v280
        %v1367 = vunpack.c.l.b16 %v281
        %v1368 = vunpack.c.h.b16 %v281
        %v1369 = vunpack.c.l.b16 %v282
        %v1370 = vunpack.c.h.b16 %v282
        %v1371 = vunpack.c.l.b16 %v283
        %v1372 = vunpack.c.h.b16 %v283
        %v1373 = vunpack.c.l.b16 %v284
        %v1374 = vunpack.c.h.b16 %v284
        %v1375 = vunpack.c.l.b16 %v285
        %v1376 = vunpack.c.h.b16 %v285
        %v1377 = vunpack.c.l.b16 %v286
        %v1378 = vunpack.c.h.b16 %v286
        %v1379 = vunpack.c.l.b16 %v287
        %v1380 = vunpack.c.h.b16 %v287
        %v1381 = vunpack.c.l.b16 %v288
        %v1382 = vunpack.c.h.b16 %v288
        %v1383 = vunpack.c.l.b16 %v289
        %v1384 = vunpack.c.h.b16 %v289
        %v1385 = vunpack.c.l.b16 %v290
        %v1386 = vunpack.c.h.b16 %v290
        %v1387 = vunpack.c.l.b16 %v291
        %v1388 = vunpack.c.h.b16 %v291
        %v1389 = vunpack.c.l.b16 %v292
        %v1390 = vunpack.c.h.b16 %v292
        %v1391 = vunpack.c.l.b16 %v293
        %v1392 = vunpack.c.h.b16 %v293
        %v1393 = vunpack.c.l.b16 %v294
        %v1394 = vunpack.c.h.b16 %v294
        %v1395 = vunpack.c.l.b16 %v295
        %v1396 = vunpack.c.h.b16 %v295
        %v1397 = vunpack.c.l.b16 %v296
        %v1398 = vunpack.c.h.b16 %v296
        %v1399 = vunpack.c.l.b16 %v297
        %v1400 = vunpack.c.h.b16 %v297
        %v1401 = vunpack.c.l.b16 %v298
        %v1402 = vunpack.c.h.b16 %v298
        %v1403 = vunpack.c.l.b16 %v299
        %v1404 = vunpack.c.h.b16 %v299
        %v1405 = vunpack.c.l.b16 %v300
        %v1406 = vunpack.c.h.b16 %v300
        %v1407 = vunpack.c.l.b16 %v301
        %v1408 = vunpack.c.h.b16 %v301
        %v1409 = vunpack.c.l.b16 %v302
        %v1410 = vunpack.c.h.b16 %v302
        %v1411 = vunpack.c.l.b16 %v303
        %v1412 = vunpack.c.h.b16 %v303
        %v1413 = vunpack.c.l.b16 %v304
        %v1414 = vunpack.c.h.b16 %v304
        %v1415 = vunpack.c.l.b16 %v305
        %v1416 = vunpack.c.h.b16 %v305
        %v1417 = vunpack.c.l.b16 %v306
        %v1418 = vunpack.c.h.b16 %v306
        %v1419 = vunpack.c.l.b16 %v307
        %v1420 = vunpack.c.h.b16 %v307
        %v1421 = vunpack.c.l.b16 %v308
        %v1422 = vunpack.c.h.b16 %v308
        %v1423 = vunpack.c.l.b16 %v309
        %v1424 = vunpack.c.h.b16 %v309
        %v1425 = vunpack.c.l.b16 %v310
        %v1426 = vunpack.c.h.b16 %v310
        %v1427 = vunpack.c.l.b16 %v311
        %v1428 = vunpack.c.h.b16 %v311
        %v1429 = vunpack.c.l.b16 %v312
        %v1430 = vunpack.c.h.b16 %v312
        %v1431 = vunpack.c.l.b16 %v313
        %v1432 = vunpack.c.h.b16 %v313
        %v1433 = vunpack.c.l.b16 %v314
        %v1434 = vunpack.c.h.b16 %v314
        %v1435 = vunpack.c.l.b16 %v315
        %v1436 = vunpack.c.h.b16 %v315
        %v1437 = vunpack.c.l.b16 %v316
        %v1438 = vunpack.c.h.b16 %v316
        %v1439 = vunpack.c.l.b16 %v317
        %v1440 = vunpack.c.h.b16 %v317
        %v1441 = vunpack.c.l.b16 %v318
        %v1442 = vunpack.c.h.b16 %v318
        %v1443 = vunpack.c.l.b16 %v319
        %v1444 = vunpack.c.h.b16 %v319
        %v1445 = vunpack.c.l.b16 %v320
        %v1446 = vunpack.c.h.b16 %v320
        %v1447 = vunpack.c.l.b16 %v321
        %v1448 = vunpack.c.h.b16 %v321
        %v1449 = vunpack.c.l.b16 %v322
        %v1450 = vunpack.c.h.b16 %v322
        %v1451 = vunpack.c.l.b16 %v323
        %v1452 = vunpack.c.h.b16 %v323
        %v1453 = vunpack.c.l.b16 %v324
        %v1454 = vunpack.c.h.b16 %v324
        %v1455 = vunpack.c.l.b16 %v325
        %v1456 = vunpack.c.h.b16 %v325
        %v1457 = vunpack.c.l.b16 %v326
        %v1458 = vunpack.c.h.b16 %v326
        %v1459 = vunpack.c.l.b16 %v327
        %v1460 = vunpack.c.h.b16 %v327
        %v1461 = vunpack.c.l.b16 %v328
        %v1462 = vunpack.c.h.b16 %v328
        %v1463 = vunpack.c.l.b16 %v329
        %v1464 = vunpack.c.h.b16 %v329
        %v1465 = vunpack.c.l.b16 %v330
        %v1466 = vunpack.c.h.b16 %v330
        %v1467 = vunpack.c.l.b16 %v331
        %v1468 = vunpack.c.h.b16 %v331
        %v1469 = vunpack.c.l.b16 %v332
        %v1470 = vunpack.c.h.b16 %v332
        %v1471 = vunpack.c.l.b16 %v333
        %v1472 = vunpack.c.h.b16 %v333
        %v1473 = vunpack.c.l.b16 %v334
        %v1474 = vunpack.c.h.b16 %v334
        %v1475 = vunpack.c.l.b16 %v335
        %v1476 = vunpack.c.h.b16 %v335
        %v1477 = vunpack.c.l.b16 %v336
        %v1478 = vunpack.c.h.b16 %v336
        %v1479 = vunpack.c.l.b16 %v337
        %v1480 = vunpack.c.h.b16 %v337
        %v1481 = vunpack.c.l.b16 %v338
        %v1482 = vunpack.c.h.b16 %v338
        %v1483 = vunpack.c.l.b16 %v339
        %v1484 = vunpack.c.h.b16 %v339
        %v1485 = vunpack.c.l.b16 %v340
        %v1486 = vunpack.c.h.b16 %v340
        %v1487 = vunpack.c.l.b16 %v341
        %v1488 = vunpack.c.h.b16 %v341
        %v1489 = vunpack.c.l.b16 %v342
        %v1490 = vunpack.c.h.b16 %v342
        %v1491 = vunpack.c.l.b16 %v343
        %v1492 = vunpack.c.h.b16 %v343
        %v1493 = vunpack.c.l.b16 %v344
        %v1494 = vunpack.c.h.b16 %v344
        %v1495 = vunpack.c.l.b16 %v345
        %v1496 = vunpack.c.h.b16 %v345
        %v1497 = vunpack.c.l.b16 %v346
        %v1498 = vunpack.c.h.b16 %v346
        %v1499 = vunpack.c.l.b16 %v347
        %v1500 = vunpack.c.h.b16 %v347
        %v1501 = vunpack.c.l.b16 %v348
        %v1502 = vunpack.c.h.b16 %v348
        %v1503 = vunpack.c.l.b16 %v349
        %v1504 = vunpack.c.h.b16 %v349
        %v1505 = vunpack.c.l.b16 %v350
        %v1506 = vunpack.c.h.b16 %v350
        %v1507 = vunpack.c.l.b16 %v351
        %v1508 = vunpack.c.h.b16 %v351
        %v1509 = vunpack.c.l.b16 %v352
        %v1510 = vunpack.c.h.b16 %v352
        %v1511 = vunpack.c.l.b16 %v353
        %v1512 = vunpack.c.h.b16 %v353
        %v1513 = vunpack.c.l.b16 %v354
        %v1514 = vunpack.c.h.b16 %v354
        %v1515 = vunpack.c.l.b16 %v355
        %v1516 = vunpack.c.h.b16 %v355
        %v1517 = vunpack.c.l.b16 %v356
        %v1518 = vunpack.c.h.b16 %v356
        %v1519 = vunpack.c.l.b16 %v357
        %v1520 = vunpack.c.h.b16 %v357
        %v1521 = vunpack.c.l.b16 %v358
        %v1522 = vunpack.c.h.b16 %v358
        %v1523 = vunpack.c.l.b16 %v359
        %v1524 = vunpack.c.h.b16 %v359
        %v1525 = vunpack.c.l.b16 %v360
        %v1526 = vunpack.c.h.b16 %v360
        %v1527 = vunpack.c.l.b16 %v361
        %v1528 = vunpack.c.h.b16 %v361
        %v1529 = vunpack.c.l.b16 %v362
        %v1530 = vunpack.c.h.b16 %v362
        %v1531 = vunpack.c.l.b16 %v363
        %v1532 = vunpack.c.h.b16 %v363
        %v1533 = vunpack.c.l.b16 %v364
        %v1534 = vunpack.c.h.b16 %v364
        %v1535 = vunpack.c.l.b16 %v365
        %v1536 = vunpack.c.h.b16 %v365
        %v1537 = vunpack.c.l.b16 %v366
        %v1538 = vunpack.c.h.b16 %v366
        %v1539 = vunpack.c.l.b16 %v367
        %v1540 = vunpack.c.h.b16 %v367
        %v1541 = vunpack.c.l.b16 %v368
        %v1542 = vunpack.c.h.b16 %v368
        %v1543 = vunpack.c.l.b16 %v369
        %v1544 = vunpack.c.h.b16 %v369
        %v1545 = vunpack.c.l.b16 %v370
        %v1546 = vunpack.c.h.b16 %v370
        %v1547 = vunpack.c.l.b16 %v371
        %v1548 = vunpack.c.h.b16 %v371
        %v1549 = vunpack.c.l.b16 %v372
        %v1550 = vunpack.c.h.b16 %v372
        %v1551 = vunpack.c.l.b16 %v373
        %v1552 = vunpack.c.h.b16 %v373
        %v1553 = vunpack.c.l.b16 %v374
        %v1554 = vunpack.c.h.b16 %v374
        %v1555 = vunpack.c.l.b16 %v375
        %v1556 = vunpack.c.h.b16 %v375
        %v1557 = vunpack.c.l.b16 %v376
        %v1558 = vunpack.c.h.b16 %v376
        %v1559 = vunpack.c.l.b16 %v377
        %v1560 = vunpack.c.h.b16 %v377
        %v1561 = vunpack.c.l.b16 %v378
        %v1562 = vunpack.c.h.b16 %v378
        %v1563 = vunpack.c.l.b16 %v379
        %v1564 = vunpack.c.h.b16 %v379
        %v1565 = vunpack.c.l.b16 %v380
        %v1566 = vunpack.c.h.b16 %v380
        %v1567 = vunpack.c.l.b16 %v381
        %v1568 = vunpack.c.h.b16 %v381
        %v1569 = vunpack.c.l.b16 %v382
        %v1570 = vunpack.c.h.b16 %v382
        %v1571 = vunpack.c.l.b16 %v383
        %v1572 = vunpack.c.h.b16 %v383
        %v1573 = vunpack.c.l.b16 %v384
        %v1574 = vunpack.c.h.b16 %v384
        %v1575 = vunpack.c.l.b16 %v385
        %v1576 = vunpack.c.h.b16 %v385
        %v1577 = vunpack.c.l.b16 %v386
        %v1578 = vunpack.c.h.b16 %v386
        %v1579 = vunpack.c.l.b16 %v387
        %v1580 = vunpack.c.h.b16 %v387
        %v1581 = vunpack.c.l.b16 %v388
        %v1582 = vunpack.c.h.b16 %v388
        %v1583 = vunpack.c.l.b16 %v389
        %v1584 = vunpack.c.h.b16 %v389
        %v1585 = vunpack.c.l.b16 %v390
        %v1586 = vunpack.c.h.b16 %v390
        %v1587 = vunpack.c.l.b16 %v391
        %v1588 = vunpack.c.h.b16 %v391
        %v1589 = vunpack.c.l.b16 %v392
        %v1590 = vunpack.c.h.b16 %v392
        %v1591 = vunpack.c.l.b16 %v393
        %v1592 = vunpack.c.h.b16 %v393
        %v1593 = vunpack.c.l.b16 %v394
        %v1594 = vunpack.c.h.b16 %v394
        %v1595 = vunpack.c.l.b16 %v395
        %v1596 = vunpack.c.h.b16 %v395
        %v1597 = vunpack.c.l.b16 %v396
        %v1598 = vunpack.c.h.b16 %v396
        %v1599 = vunpack.c.l.b16 %v397
        %v1600 = vunpack.c.h.b16 %v397
        %v1601 = vunpack.c.l.b16 %v398
        %v1602 = vunpack.c.h.b16 %v398
        %v1603 = vunpack.c.l.b16 %v399
        %v1604 = vunpack.c.h.b16 %v399
        %v1605 = vunpack.c.l.b16 %v400
        %v1606 = vunpack.c.h.b16 %v400
        %v1607 = vunpack.c.l.b16 %v401
        %v1608 = vunpack.c.h.b16 %v401
        %v1609 = vunpack.c.l.b16 %v402
        %v1610 = vunpack.c.h.b16 %v402
        %v1611 = vunpack.c.l.b16 %v403
        %v1612 = vunpack.c.h.b16 %v403
        %v1613 = vunpack.c.l.b16 %v404
        %v1614 = vunpack.c.h.b16 %v404
        %v1615 = vunpack.c.l.b16 %v405
        %v1616 = vunpack.c.h.b16 %v405
        %v1617 = vunpack.c.l.b16 %v406
        %v1618 = vunpack.c.h.b16 %v406
        %v1619 = vunpack.c.l.b16 %v407
        %v1620 = vunpack.c.h.b16 %v407
        %v1621 = vunpack.c.l.b16 %v408
        %v1622 = vunpack.c.h.b16 %v408
        %v1623 = vunpack.c.l.b16 %v409
        %v1624 = vunpack.c.h.b16 %v409
        %v1625 = vunpack.c.l.b16 %v410
        %v1626 = vunpack.c.h.b16 %v410
        %v1627 = vunpack.c.l.b16 %v411
        %v1628 = vunpack.c.h.b16 %v411
        %v1629 = vunpack.c.l.b16 %v412
        %v1630 = vunpack.c.h.b16 %v412
        %v1631 = vunpack.c.l.b16 %v413
        %v1632 = vunpack.c.h.b16 %v413
        %v1633 = vunpack.c.l.b16 %v414
        %v1634 = vunpack.c.h.b16 %v414
        %v1635 = vunpack.c.l.b16 %v415
        %v1636 = vunpack.c.h.b16 %v415
        %v1637 = vunpack.c.l.b16 %v416
        %v1638 = vunpack.c.h.b16 %v416
        %v1639 = vunpack.c.l.b16 %v417
        %v1640 = vunpack.c.h.b16 %v417
        %v1641 = vunpack.c.l.b16 %v418
        %v1642 = vunpack.c.h.b16 %v418
        %v1643 = vunpack.c.l.b16 %v419
        %v1644 = vunpack.c.h.b16 %v419
        %v1645 = vunpack.c.l.b16 %v420
        %v1646 = vunpack.c.h.b16 %v420
        %v1647 = vunpack.c.l.b16 %v421
        %v1648 = vunpack.c.h.b16 %v421
        %v1649 = vunpack.c.l.b16 %v422
        %v1650 = vunpack.c.h.b16 %v422
        %v1651 = vunpack.c.l.b16 %v423
        %v1652 = vunpack.c.h.b16 %v423
        %v1653 = vunpack.c.l.b16 %v424
        %v1654 = vunpack.c.h.b16 %v424
        %v1655 = vunpack.c.l.b16 %v425
        %v1656 = vunpack.c.h.b16 %v425
        %v1657 = vunpack.c.l.b16 %v426
        %v1658 = vunpack.c.h.b16 %v426
        %v1659 = vunpack.c.l.b16 %v427
        %v1660 = vunpack.c.h.b16 %v427
        %v1661 = vunpack.c.l.b16 %v428
        %v1662 = vunpack.c.h.b16 %v428
        %v1663 = vunpack.c.l.b16 %v429
        %v1664 = vunpack.c.h.b16 %v429
        %v1665 = vunpack.c.l.b16 %v430
        %v1666 = vunpack.c.h.b16 %v430
        %v1667 = vunpack.c.l.b16 %v431
        %v1668 = vunpack.c.h.b16 %v431
        %v1669 = vunpack.c.l.b16 %v432
        %v1670 = vunpack.c.h.b16 %v432
        %v1671 = vunpack.c.l.b16 %v433
        %v1672 = vunpack.c.h.b16 %v433
        %v1673 = vunpack.c.l.b16 %v434
        %v1674 = vunpack.c.h.b16 %v434
        %v1675 = vunpack.c.l.b16 %v435
        %v1676 = vunpack.c.h.b16 %v435
        %v1677 = vunpack.c.l.b16 %v436
        %v1678 = vunpack.c.h.b16 %v436
        %v1679 = vunpack.c.l.b16 %v437
        %v1680 = vunpack.c.h.b16 %v437
        %v1681 = vunpack.c.l.b16 %v438
        %v1682 = vunpack.c.h.b16 %v438
        %v1683 = vunpack.c.l.b16 %v439
        %v1684 = vunpack.c.h.b16 %v439
        %v1685 = vunpack.c.l.b16 %v440
        %v1686 = vunpack.c.h.b16 %v440
        %v1687 = vunpack.c.l.b16 %v441
        %v1688 = vunpack.c.h.b16 %v441
        %v1689 = vunpack.c.l.b16 %v442
        %v1690 = vunpack.c.h.b16 %v442
        %v1691 = vunpack.c.l.b16 %v443
        %v1692 = vunpack.c.h.b16 %v443
        %v1693 = vunpack.c.l.b16 %v444
        %v1694 = vunpack.c.h.b16 %v444
        %v1695 = vunpack.c.l.b16 %v445
        %v1696 = vunpack.c.h.b16 %v445
        %v1697 = vunpack.c.l.b16 %v446
        %v1698 = vunpack.c.h.b16 %v446
        %v1699 = vunpack.c.l.b16 %v447
        %v1700 = vunpack.c.h.b16 %v447
        %v1701 = vunpack.c.l.b16 %v448
        %v1702 = vunpack.c.h.b16 %v448
        %v1703 = vunpack.c.l.b16 %v449
        %v1704 = vunpack.c.h.b16 %v449
        %v1705 = vunpack.c.l.b16 %v450
        %v1706 = vunpack.c.h.b16 %v450
        %v1707 = vunpack.c.l.b16 %v451
        %v1708 = vunpack.c.h.b16 %v451
        %v1709 = vunpack.c.l.b16 %v452
        %v1710 = vunpack.c.h.b16 %v452
        %v1711 = vunpack.c.l.b16 %v453
        %v1712 = vunpack.c.h.b16 %v453
        %v1713 = vunpack.c.l.b16 %v454
        %v1714 = vunpack.c.h.b16 %v454
        %v1715 = vunpack.c.l.b16 %v455
        %v1716 = vunpack.c.h.b16 %v455
        %v1717 = vunpack.c.l.b16 %v456
        %v1718 = vunpack.c.h.b16 %v456
        %v1719 = vunpack.c.l.b16 %v457
        %v1720 = vunpack.c.h.b16 %v457
        %v1721 = vunpack.c.l.b16 %v458
        %v1722 = vunpack.c.h.b16 %v458
        %v1723 = vunpack.c.l.b16 %v459
        %v1724 = vunpack.c.h.b16 %v459
        %v1725 = vunpack.c.l.b16 %v460
        %v1726 = vunpack.c.h.b16 %v460
        %v1727 = vunpack.c.l.b16 %v461
        %v1728 = vunpack.c.h.b16 %v461
        %v1729 = vunpack.c.l.b16 %v462
        %v1730 = vunpack.c.h.b16 %v462
        %v1731 = vunpack.c.l.b16 %v463
        %v1732 = vunpack.c.h.b16 %v463
        %v1733 = vunpack.c.l.b16 %v464
        %v1734 = vunpack.c.h.b16 %v464
        %v1735 = vunpack.c.l.b16 %v465
        %v1736 = vunpack.c.h.b16 %v465
        %v1737 = vunpack.c.l.b16 %v466
        %v1738 = vunpack.c.h.b16 %v466
        %v1739 = vunpack.c.l.b16 %v467
        %v1740 = vunpack.c.h.b16 %v467
        %v1741 = vunpack.c.l.b16 %v468
        %v1742 = vunpack.c.h.b16 %v468
        %v1743 = vunpack.c.l.b16 %v469
        %v1744 = vunpack.c.h.b16 %v469
        %v1745 = vunpack.c.l.b16 %v470
        %v1746 = vunpack.c.h.b16 %v470
        %v1747 = vunpack.c.l.b16 %v471
        %v1748 = vunpack.c.h.b16 %v471
        %v1749 = vunpack.c.l.b16 %v472
        %v1750 = vunpack.c.h.b16 %v472
        %v1751 = vunpack.c.l.b16 %v473
        %v1752 = vunpack.c.h.b16 %v473
        %v1753 = vunpack.c.l.b16 %v474
        %v1754 = vunpack.c.h.b16 %v474
        %v1755 = vunpack.c.l.b16 %v475
        %v1756 = vunpack.c.h.b16 %v475
        %v1757 = vunpack.c.l.b16 %v476
        %v1758 = vunpack.c.h.b16 %v476
        %v1759 = vunpack.c.l.b16 %v477
        %v1760 = vunpack.c.h.b16 %v477
        %v1761 = vunpack.c.l.b16 %v478
        %v1762 = vunpack.c.h.b16 %v478
        %v1763 = vunpack.c.l.b16 %v479
        %v1764 = vunpack.c.h.b16 %v479
        %v1765 = vunpack.c.l.b16 %v480
        %v1766 = vunpack.c.h.b16 %v480
        %v1767 = vunpack.c.l.b16 %v481
        %v1768 = vunpack.c.h.b16 %v481
        %v1769 = vunpack.c.l.b16 %v482
        %v1770 = vunpack.c.h.b16 %v482
        %v1771 = vunpack.c.l.b16 %v483
        %v1772 = vunpack.c.h.b16 %v483
        %v1773 = vunpack.c.l.b16 %v484
        %v1774 = vunpack.c.h.b16 %v484
        %v1775 = vunpack.c.l.b16 %v485
        %v1776 = vunpack.c.h.b16 %v485
        %v1777 = vunpack.c.l.b16 %v486
        %v1778 = vunpack.c.h.b16 %v486
        %v1779 = vunpack.c.l.b16 %v487
        %v1780 = vunpack.c.h.b16 %v487
        %v1781 = vunpack.c.l.b16 %v488
        %v1782 = vunpack.c.h.b16 %v488
        %v1783 = vunpack.c.l.b16 %v489
        %v1784 = vunpack.c.h.b16 %v489
        %v1785 = vunpack.c.l.b16 %v490
        %v1786 = vunpack.c.h.b16 %v490
        %v1787 = vunpack.c.l.b16 %v491
        %v1788 = vunpack.c.h.b16 %v491
        %v1789 = vunpack.c.l.b16 %v492
        %v1790 = vunpack.c.h.b16 %v492
        %v1791 = vunpack.c.l.b16 %v493
        %v1792 = vunpack.c.h.b16 %v493
        %v1793 = vunpack.c.l.b16 %v494
        %v1794 = vunpack.c.h.b16 %v494
        %v1795 = vunpack.c.l.b16 %v495
        %v1796 = vunpack.c.h.b16 %v495
        %v1797 = vunpack.c.l.b16 %v496
        %v1798 = vunpack.c.h.b16 %v496
        %v1799 = vunpack.c.l.b16 %v497
        %v1800 = vunpack.c.h.b16 %v497
        %v1801 = vunpack.c.l.b16 %v498
        %v1802 = vunpack.c.h.b16 %v498
        %v1803 = vunpack.c.l.b16 %v499
        %v1804 = vunpack.c.h.b16 %v499
        %v1805 = vunpack.c.l.b16 %v500
        %v1806 = vunpack.c.h.b16 %v500
        %v1807 = vunpack.c.l.b16 %v501
        %v1808 = vunpack.c.h.b16 %v501
        %v1809 = vunpack.c.l.b16 %v502
        %v1810 = vunpack.c.h.b16 %v502
        %v1811 = vunpack.c.l.b16 %v503
        %v1812 = vunpack.c.h.b16 %v503
        %v1813 = vunpack.c.l.b16 %v504
        %v1814 = vunpack.c.h.b16 %v504
        %v1815 = vunpack.c.l.b16 %v505
        %v1816 = vunpack.c.h.b16 %v505
        %v1817 = vunpack.c.l.b16 %v506
        %v1818 = vunpack.c.h.b16 %v506
        %v1819 = vunpack.c.l.b16 %v507
        %v1820 = vunpack.c.h.b16 %v507
        %v1821 = vunpack.c.l.b16 %v508
        %v1822 = vunpack.c.h.b16 %v508
        %v1823 = vunpack.c.l.b16 %v509
        %v1824 = vunpack.c.h.b16 %v509
        %v1825 = vunpack.c.l.b16 %v510
        %v1826 = vunpack.c.h.b16 %v510
        %v1827 = vunpack.c.l.b16 %v511
        %v1828 = vunpack.c.h.b16 %v511
        %v1829 = vunpack.c.l.b16 %v512
        %v1830 = vunpack.c.h.b16 %v512
        %v1831 = vunpack.c.l.b16 %v513
        %v1832 = vunpack.c.h.b16 %v513
        %v1833 = vunpack.c.l.b16 %v514
        %v1834 = vunpack.c.h.b16 %v514
        %v1835 = vunpack.c.l.b16 %v515
        %v1836 = vunpack.c.h.b16 %v515
        %v1837 = vunpack.c.l.b16 %v516
        %v1838 = vunpack.c.h.b16 %v516
        %v1839 = vunpack.c.l.b16 %v517
        %v1840 = vunpack.c.h.b16 %v517
        %v1841 = vunpack.c.l.b16 %v518
        %v1842 = vunpack.c.h.b16 %v518
        %v1843 = vunpack.c.l.b16 %v519
        %v1844 = vunpack.c.h.b16 %v519
        %v1845 = vunpack.c.l.b16 %v520
        %v1846 = vunpack.c.h.b16 %v520
        %v1847 = vunpack.c.l.b16 %v521
        %v1848 = vunpack.c.h.b16 %v521
        %v1849 = vunpack.c.l.b16 %v522
        %v1850 = vunpack.c.h.b16 %v522
        %v1851 = vunpack.c.l.b16 %v523
        %v1852 = vunpack.c.h.b16 %v523
        %v1853 = vunpack.c.l.b16 %v524
        %v1854 = vunpack.c.h.b16 %v524
        %v1855 = vunpack.c.l.b16 %v525
        %v1856 = vunpack.c.h.b16 %v525
        %v1857 = vunpack.c.l.b16 %v526
        %v1858 = vunpack.c.h.b16 %v526
        %v1859 = vunpack.c.l.b16 %v527
        %v1860 = vunpack.c.h.b16 %v527
        %v1861 = vunpack.c.l.b16 %v528
        %v1862 = vunpack.c.h.b16 %v528
        %v1863 = vunpack.c.l.b16 %v529
        %v1864 = vunpack.c.h.b16 %v529
        %v1865 = vunpack.c.l.b16 %v530
        %v1866 = vunpack.c.h.b16 %v530
        %v1867 = vunpack.c.l.b16 %v531
        %v1868 = vunpack.c.h.b16 %v531
        %v1869 = vunpack.c.l.b16 %v532
        %v1870 = vunpack.c.h.b16 %v532
        %v1871 = vunpack.c.l.b16 %v533
        %v1872 = vunpack.c.h.b16 %v533
        %v1873 = vunpack.c.l.b16 %v534
        %v1874 = vunpack.c.h.b16 %v534
        %v1875 = vunpack.c.l.b16 %v535
        %v1876 = vunpack.c.h.b16 %v535
        %v1877 = vunpack.c.l.b16 %v536
        %v1878 = vunpack.c.h.b16 %v536
        %v1879 = vunpack.c.l.b16 %v537
        %v1880 = vunpack.c.h.b16 %v537
        %v1881 = vunpack.c.l.b16 %v538
        %v1882 = vunpack.c.h.b16 %v538
        %v1883 = vunpack.c.l.b16 %v539
        %v1884 = vunpack.c.h.b16 %v539
        %v1885 = vunpack.c.l.b16 %v540
        %v1886 = vunpack.c.h.b16 %v540
        %v1887 = vunpack.c.l.b16 %v541
        %v1888 = vunpack.c.h.b16 %v541
        %v1889 = vunpack.c.l.b16 %v542
        %v1890 = vunpack.c.h.b16 %v542
        %v1891 = vunpack.c.l.b16 %v543
        %v1892 = vunpack.c.h.b16 %v543
        %v1893 = vunpack.c.l.b16 %v544
        %v1894 = vunpack.c.h.b16 %v544
        %v1895 = vunpack.c.l.b16 %v545
        %v1896 = vunpack.c.h.b16 %v545
        %v1897 = vunpack.c.l.b16 %v546
        %v1898 = vunpack.c.h.b16 %v546
        %v1899 = vunpack.c.l.b16 %v547
        %v1900 = vunpack.c.h.b16 %v547
        %v1901 = vunpack.c.l.b16 %v548
        %v1902 = vunpack.c.h.b16 %v548
        %v1903 = vunpack.c.l.b16 %v549
        %v1904 = vunpack.c.h.b16 %v549
        %v1905 = vunpack.c.l.b16 %v550
        %v1906 = vunpack.c.h.b16 %v550
        %v1907 = vunpack.c.l.b16 %v551
        %v1908 = vunpack.c.h.b16 %v551
        %v1909 = vunpack.c.l.b16 %v552
        %v1910 = vunpack.c.h.b16 %v552
        %v1911 = vunpack.c.l.b16 %v553
        %v1912 = vunpack.c.h.b16 %v553
        %v1913 = vunpack.c.l.b16 %v554
        %v1914 = vunpack.c.h.b16 %v554
        %v1915 = vunpack.c.l.b16 %v555
        %v1916 = vunpack.c.h.b16 %v555
        %v1917 = vunpack.c.l.b16 %v556
        %v1918 = vunpack.c.h.b16 %v556
        %v1919 = vunpack.c.l.b16 %v557
        %v1920 = vunpack.c.h.b16 %v557
        %v1921 = vunpack.c.l.b16 %v558
        %v1922 = vunpack.c.h.b16 %v558
        %v1923 = vunpack.c.l.b16 %v559
        %v1924 = vunpack.c.h.b16 %v559
        %v1925 = vunpack.c.l.b16 %v560
        %v1926 = vunpack.c.h.b16 %v560
        %v1927 = vunpack.c.l.b16 %v561
        %v1928 = vunpack.c.h.b16 %v561
        %v1929 = vunpack.c.l.b16 %v562
        %v1930 = vunpack.c.h.b16 %v562
        %v1931 = vunpack.c.l.b16 %v563
        %v1932 = vunpack.c.h.b16 %v563
        %v1933 = vunpack.c.l.b16 %v564
        %v1934 = vunpack.c.h.b16 %v564
        %v1935 = vunpack.c.l.b16 %v565
        %v1936 = vunpack.c.h.b16 %v565
        %v1937 = vunpack.c.l.b16 %v566
        %v1938 = vunpack.c.h.b16 %v566
        %v1939 = vunpack.c.l.b16 %v567
        %v1940 = vunpack.c.h.b16 %v567
        %v1941 = vunpack.c.l.b16 %v568
        %v1942 = vunpack.c.h.b16 %v568
        %v1943 = vunpack.c.l.b16 %v569
        %v1944 = vunpack.c.h.b16 %v569
        %v1945 = vunpack.c.l.b16 %v570
        %v1946 = vunpack.c.h.b16 %v570
        %v1947 = vunpack.c.l.b16 %v571
        %v1948 = vunpack.c.h.b16 %v571
        %v1949 = vunpack.c.l.b16 %v572
        %v1950 = vunpack.c.h.b16 %v572
        %v1951 = vunpack.c.l.b16 %v573
        %v1952 = vunpack.c.h.b16 %v573
        %v1953 = vunpack.c.l.b16 %v574
        %v1954 = vunpack.c.h.b16 %v574
        %v1955 = vunpack.c.l.b16 %v575
        %v1956 = vunpack.c.h.b16 %v575
        %v1957 = vunpack.c.l.b16 %v576
        %v1958 = vunpack.c.h.b16 %v576
        %v1959 = vunpack.c.l.b16 %v577
        %v1960 = vunpack.c.h.b16 %v577
        %v1961 = vunpack.c.l.b16 %v578
        %v1962 = vunpack.c.h.b16 %v578
        %v1963 = vunpack.c.l.b16 %v579
        %v1964 = vunpack.c.h.b16 %v579
        %v1965 = vunpack.c.l.b16 %v580
        %v1966 = vunpack.c.h.b16 %v580
        %v1967 = vunpack.c.l.b16 %v581
        %v1968 = vunpack.c.h.b16 %v581
        %v1969 = vunpack.c.l.b16 %v582
        %v1970 = vunpack.c.h.b16 %v582
        %v1971 = vunpack.c.l.b16 %v583
        %v1972 = vunpack.c.h.b16 %v583
        %v1973 = vunpack.c.l.b16 %v584
        %v1974 = vunpack.c.h.b16 %v584
        %v1975 = vunpack.c.l.b16 %v585
        %v1976 = vunpack.c.h.b16 %v585
        %v1977 = vunpack.c.l.b16 %v586
        %v1978 = vunpack.c.h.b16 %v586
        %v1979 = vunpack.c.l.b16 %v587
        %v1980 = vunpack.c.h.b16 %v587
        %v1981 = vunpack.c.l.b16 %v588
        %v1982 = vunpack.c.h.b16 %v588
        %v1983 = vunpack.c.l.b16 %v589
        %v1984 = vunpack.c.h.b16 %v589
        %v1985 = vunpack.c.l.b16 %v590
        %v1986 = vunpack.c.h.b16 %v590
        %v1987 = vunpack.c.l.b16 %v591
        %v1988 = vunpack.c.h.b16 %v591
        %v1989 = vunpack.c.l.b16 %v592
        %v1990 = vunpack.c.h.b16 %v592
        %v1991 = vunpack.c.l.b16 %v593
        %v1992 = vunpack.c.h.b16 %v593
        %v1993 = vunpack.c.l.b16 %v594
        %v1994 = vunpack.c.h.b16 %v594
        %v1995 = vunpack.c.l.b16 %v595
        %v1996 = vunpack.c.h.b16 %v595
        %v1997 = vunpack.c.l.b16 %v596
        %v1998 = vunpack.c.h.b16 %v596
        %v1999 = vunpack.c.l.b16 %v597
        %v2000 = vunpack.c.h.b16 %v597
        %v2001 = vunpack.c.l.b16 %v598
        %v2002 = vunpack.c.h.b16 %v598
        %v2003 = vunpack.c.l.b16 %v599
        %v2004 = vunpack.c.h.b16 %v599
        %v2005 = vunpack.c.l.b16 %v600
        %v2006 = vunpack.c.h.b16 %v600
        %v2007 = vunpack.c.l.b16 %v601
        %v2008 = vunpack.c.h.b16 %v601
        %v2009 = vunpack.c.l.b16 %v602
        %v2010 = vunpack.c.h.b16 %v602
        %v2011 = vunpack.c.l.b16 %v603
        %v2012 = vunpack.c.h.b16 %v603
        %v2013 = vunpack.c.l.b16 %v604
        %v2014 = vunpack.c.h.b16 %v604
        %v2015 = vunpack.c.l.b16 %v605
        %v2016 = vunpack.c.h.b16 %v605
        %v2017 = vunpack.c.l.b16 %v606
        %v2018 = vunpack.c.h.b16 %v606
        %v2019 = vunpack.c.l.b16 %v607
        %v2020 = vunpack.c.h.b16 %v607
        %v2021 = vunpack.c.l.b16 %v608
        %v2022 = vunpack.c.h.b16 %v608
        %v2023 = vunpack.c.l.b16 %v609
        %v2024 = vunpack.c.h.b16 %v609
        %v2025 = vunpack.c.l.b16 %v610
        %v2026 = vunpack.c.h.b16 %v610
        %v2027 = vunpack.c.l.b16 %v611
        %v2028 = vunpack.c.h.b16 %v611
        %v2029 = vunpack.c.l.b16 %v612
        %v2030 = vunpack.c.h.b16 %v612
        %v2031 = vunpack.c.l.b16 %v613
        %v2032 = vunpack.c.h.b16 %v613
        %v2033 = vunpack.c.l.b16 %v614
        %v2034 = vunpack.c.h.b16 %v614
        %v2035 = vunpack.c.l.b16 %v615
        %v2036 = vunpack.c.h.b16 %v615
        %v2037 = vunpack.c.l.b16 %v616
        %v2038 = vunpack.c.h.b16 %v616
        %v2039 = vunpack.c.l.b16 %v617
        %v2040 = vunpack.c.h.b16 %v617
        %v2041 = vunpack.c.l.b16 %v618
        %v2042 = vunpack.c.h.b16 %v618
        %v2043 = vunpack.c.l.b16 %v619
        %v2044 = vunpack.c.h.b16 %v619
        %v2045 = vunpack.c.l.b16 %v620
        %v2046 = vunpack.c.h.b16 %v620
        %v2047 = vunpack.c.l.b16 %v621
        %v2048 = vunpack.c.h.b16 %v621
        %v2049 = vunpack.c.l.b16 %v622
        %v2050 = vunpack.c.h.b16 %v622
        %v2051 = vunpack.c.l.b16 %v623
        %v2052 = vunpack.c.h.b16 %v623
        %v2053 = vunpack.c.l.b16 %v624
        %v2054 = vunpack.c.h.b16 %v624
        %v2055 = vunpack.c.l.b16 %v625
        %v2056 = vunpack.c.h.b16 %v625
        %v2057 = vunpack.c.l.b16 %v626
        %v2058 = vunpack.c.h.b16 %v626
        %v2059 = vunpack.c.l.b16 %v627
        %v2060 = vunpack.c.h.b16 %v627
        %v2061 = vunpack.c.l.b16 %v628
        %v2062 = vunpack.c.h.b16 %v628
        %v2063 = vunpack.c.l.b16 %v629
        %v2064 = vunpack.c.h.b16 %v629
        %v2065 = vunpack.c.l.b16 %v630
        %v2066 = vunpack.c.h.b16 %v630
        %v2067 = vunpack.c.l.b16 %v631
        %v2068 = vunpack.c.h.b16 %v631
        %v2069 = vunpack.c.l.b16 %v632
        %v2070 = vunpack.c.h.b16 %v632
        %v2071 = vunpack.c.l.b16 %v633
        %v2072 = vunpack.c.h.b16 %v633
        %v2073 = vunpack.c.l.b16 %v634
        %v2074 = vunpack.c.h.b16 %v634
        %v2075 = vunpack.c.l.b16 %v635
        %v2076 = vunpack.c.h.b16 %v635
        %v2077 = vunpack.c.l.b16 %v636
        %v2078 = vunpack.c.h.b16 %v636
        %v2079 = vunpack.c.l.b16 %v637
        %v2080 = vunpack.c.h.b16 %v637
        %v2081 = vunpack.c.l.b16 %v638
        %v2082 = vunpack.c.h.b16 %v638
        %v2083 = vunpack.c.l.b16 %v639
        %v2084 = vunpack.c.h.b16 %v639
        %v2085 = vunpack.c.l.b16 %v640
        %v2086 = vunpack.c.h.b16 %v640
        %v2087 = vunpack.c.l.b16 %v641
        %v2088 = vunpack.c.h.b16 %v641
        %v2089 = vunpack.c.l.b16 %v642
        %v2090 = vunpack.c.h.b16 %v642
        %v2091 = vunpack.c.l.b16 %v643
        %v2092 = vunpack.c.h.b16 %v643
        %v2093 = vunpack.c.l.b16 %v644
        %v2094 = vunpack.c.h.b16 %v644
        %v2095 = vunpack.c.l.b16 %v645
        %v2096 = vunpack.c.h.b16 %v645
        %v2097 = vunpack.c.l.b16 %v646
        %v2098 = vunpack.c.h.b16 %v646
        %v2099 = vunpack.c.l.b16 %v647
        %v2100 = vunpack.c.h.b16 %v647
        %v2101 = vunpack.c.l.b16 %v648
        %v2102 = vunpack.c.h.b16 %v648
        %v2103 = vunpack.c.l.b16 %v649
        %v2104 = vunpack.c.h.b16 %v649
        %v2105 = vunpack.c.l.b16 %v650
        %v2106 = vunpack.c.h.b16 %v650
        %v2107 = vunpack.c.l.b16 %v651
        %v2108 = vunpack.c.h.b16 %v651
        %v2109 = vunpack.c.l.b16 %v652
        %v2110 = vunpack.c.h.b16 %v652
        %v2111 = vunpack.c.l.b16 %v653
        %v2112 = vunpack.c.h.b16 %v653
        %v2113 = vunpack.c.l.b16 %v654
        %v2114 = vunpack.c.h.b16 %v654
        %v2115 = vunpack.c.l.b16 %v655
        %v2116 = vunpack.c.h.b16 %v655
        %v2117 = vunpack.c.l.b16 %v656
        %v2118 = vunpack.c.h.b16 %v656
        %v2119 = vunpack.c.l.b16 %v657
        %v2120 = vunpack.c.h.b16 %v657
        %v2121 = vunpack.c.l.b16 %v658
        %v2122 = vunpack.c.h.b16 %v658
        %v2123 = vunpack.c.l.b16 %v659
        %v2124 = vunpack.c.h.b16 %v659
        %v2125 = vunpack.c.l.b16 %v660
        %v2126 = vunpack.c.h.b16 %v660
        %v2127 = vunpack.c.l.b16 %v661
        %v2128 = vunpack.c.h.b16 %v661
        %v2129 = vunpack.c.l.b16 %v662
        %v2130 = vunpack.c.h.b16 %v662
        %v2131 = vunpack.c.l.b16 %v663
        %v2132 = vunpack.c.h.b16 %v663
        %v2133 = vunpack.c.l.b16 %v664
        %v2134 = vunpack.c.h.b16 %v664
        %v2135 = vunpack.c.l.b16 %v665
        %v2136 = vunpack.c.h.b16 %v665
        %v2137 = vunpack.c.l.b16 %v666
        %v2138 = vunpack.c.h.b16 %v666
        %v2139 = vunpack.c.l.b16 %v667
        %v2140 = vunpack.c.h.b16 %v667
        %v2141 = vunpack.c.l.b16 %v668
        %v2142 = vunpack.c.h.b16 %v668
        %v2143 = vunpack.c.l.b16 %v669
        %v2144 = vunpack.c.h.b16 %v669
        %v2145 = vunpack.c.l.b16 %v670
        %v2146 = vunpack.c.h.b16 %v670
        %v2147 = vunpack.c.l.b16 %v671
        %v2148 = vunpack.c.h.b16 %v671
        %v2149 = vunpack.c.l.b16 %v672
        %v2150 = vunpack.c.h.b16 %v672
        %v2151 = vunpack.c.l.b16 %v673
        %v2152 = vunpack.c.h.b16 %v673
        %v2153 = vunpack.c.l.b16 %v674
        %v2154 = vunpack.c.h.b16 %v674
        %v2155 = vunpack.c.l.b16 %v675
        %v2156 = vunpack.c.h.b16 %v675
        %v2157 = vunpack.c.l.b16 %v676
        %v2158 = vunpack.c.h.b16 %v676
        %v2159 = vunpack.c.l.b16 %v677
        %v2160 = vunpack.c.h.b16 %v677
        %v2161 = vunpack.c.l.b16 %v678
        %v2162 = vunpack.c.h.b16 %v678
        %v2163 = vunpack.c.l.b16 %v679
        %v2164 = vunpack.c.h.b16 %v679
        %v2165 = vunpack.c.l.b16 %v680
        %v2166 = vunpack.c.h.b16 %v680
        %v2167 = vunpack.c.l.b16 %v681
        %v2168 = vunpack.c.h.b16 %v681
        %v2169 = vunpack.c.l.b16 %v682
        %v2170 = vunpack.c.h.b16 %v682
        %v2171 = vunpack.c.l.b16 %v683
        %v2172 = vunpack.c.h.b16 %v683
        %v2173 = vunpack.c.l.b16 %v684
        %v2174 = vunpack.c.h.b16 %v684
        %v2175 = vunpack.c.l.b16 %v685
        %v2176 = vunpack.c.h.b16 %v685
        %v2177 = vunpack.c.l.b16 %v686
        %v2178 = vunpack.c.h.b16 %v686
        %v2179 = vunpack.c.l.b16 %v687
        %v2180 = vunpack.c.h.b16 %v687
        %v2181 = vunpack.c.l.b16 %v688
        %v2182 = vunpack.c.h.b16 %v688
        %v2183 = vunpack.c.l.b16 %v689
        %v2184 = vunpack.c.h.b16 %v689
        %v2185 = vunpack.c.l.b16 %v690
        %v2186 = vunpack.c.h.b16 %v690
        %v2187 = vunpack.c.l.b16 %v691
        %v2188 = vunpack.c.h.b16 %v691
        %v2189 = vunpack.c.l.b16 %v692
        %v2190 = vunpack.c.h.b16 %v692
        %v2191 = vunpack.c.l.b16 %v693
        %v2192 = vunpack.c.h.b16 %v693
        %v2193 = vunpack.c.l.b16 %v694
        %v2194 = vunpack.c.h.b16 %v694
        %v2195 = vunpack.c.l.b16 %v695
        %v2196 = vunpack.c.h.b16 %v695
        %v2197 = vunpack.c.l.b16 %v696
        %v2198 = vunpack.c.h.b16 %v696
        %v2199 = vunpack.c.l.b16 %v697
        %v2200 = vunpack.c.h.b16 %v697
        %v2201 = vunpack.c.l.b16 %v698
        %v2202 = vunpack.c.h.b16 %v698
        %v2203 = vunpack.c.l.b16 %v699
        %v2204 = vunpack.c.h.b16 %v699
        %v2205 = vunpack.c.l.b16 %v700
        %v2206 = vunpack.c.h.b16 %v700
        %v2207 = vunpack.c.l.b16 %v701
        %v2208 = vunpack.c.h.b16 %v701
        %v2209 = vunpack.c.l.b16 %v702
        %v2210 = vunpack.c.h.b16 %v702
        %v2211 = vunpack.c.l.b16 %v703
        %v2212 = vunpack.c.h.b16 %v703
        %v2213 = vunpack.c.l.b16 %v704
        %v2214 = vunpack.c.h.b16 %v704
        %v2215 = vunpack.c.l.b16 %v705
        %v2216 = vunpack.c.h.b16 %v705
        %v2217 = vunpack.c.l.b16 %v706
        %v2218 = vunpack.c.h.b16 %v706
        %v2219 = vunpack.c.l.b16 %v707
        %v2220 = vunpack.c.h.b16 %v707
        %v2221 = vunpack.c.l.b16 %v708
        %v2222 = vunpack.c.h.b16 %v708
        %v2223 = vunpack.c.l.b16 %v709
        %v2224 = vunpack.c.h.b16 %v709
        %v2225 = vunpack.c.l.b16 %v710
        %v2226 = vunpack.c.h.b16 %v710
        %v2227 = vunpack.c.l.b16 %v711
        %v2228 = vunpack.c.h.b16 %v711
        %v2229 = vunpack.c.l.b16 %v712
        %v2230 = vunpack.c.h.b16 %v712
        %v2231 = vunpack.c.l.b16 %v713
        %v2232 = vunpack.c.h.b16 %v713
        %v2233 = vunpack.c.l.b16 %v714
        %v2234 = vunpack.c.h.b16 %v714
        %v2235 = vunpack.c.l.b16 %v715
        %v2236 = vunpack.c.h.b16 %v715
        %v2237 = vunpack.c.l.b16 %v716
        %v2238 = vunpack.c.h.b16 %v716
        %v2239 = vunpack.c.l.b16 %v717
        %v2240 = vunpack.c.h.b16 %v717
        %v2241 = vunpack.c.l.b16 %v718
        %v2242 = vunpack.c.h.b16 %v718
        %v2243 = vunpack.c.l.b16 %v719
        %v2244 = vunpack.c.h.b16 %v719
        %v2245 = vunpack.c.l.b16 %v720
        %v2246 = vunpack.c.h.b16 %v720
        %v2247 = vunpack.c.l.b16 %v721
        %v2248 = vunpack.c.h.b16 %v721
        %v2249 = vunpack.c.l.b16 %v722
        %v2250 = vunpack.c.h.b16 %v722
        %v2251 = vunpack.c.l.b16 %v723
        %v2252 = vunpack.c.h.b16 %v723
        %v2253 = vunpack.c.l.b16 %v724
        %v2254 = vunpack.c.h.b16 %v724
        %v2255 = vunpack.c.l.b16 %v725
        %v2256 = vunpack.c.h.b16 %v725
        %v2257 = vunpack.c.l.b16 %v726
        %v2258 = vunpack.c.h.b16 %v726
        %v2259 = vunpack.c.l.b16 %v727
        %v2260 = vunpack.c.h.b16 %v727
        %v2261 = vunpack.c.l.b16 %v728
        %v2262 = vunpack.c.h.b16 %v728
        %v2263 = vunpack.c.l.b16 %v729
        %v2264 = vunpack.c.h.b16 %v729
        %v2265 = vunpack.c.l.b16 %v730
        %v2266 = vunpack.c.h.b16 %v730
        %v2267 = vunpack.c.l.b16 %v731
        %v2268 = vunpack.c.h.b16 %v731
        %v2269 = vunpack.c.l.b16 %v732
        %v2270 = vunpack.c.h.b16 %v732
        %v2271 = vunpack.c.l.b16 %v733
        %v2272 = vunpack.c.h.b16 %v733
        %v2273 = vunpack.c.l.b16 %v734
        %v2274 = vunpack.c.h.b16 %v734
        %v2275 = vunpack.c.l.b16 %v735
        %v2276 = vunpack.c.h.b16 %v735
        %v2277 = vunpack.c.l.b16 %v736
        %v2278 = vunpack.c.h.b16 %v736
        %v2279 = vunpack.c.l.b16 %v737
        %v2280 = vunpack.c.h.b16 %v737
        %v2281 = vunpack.c.l.b16 %v738
        %v2282 = vunpack.c.h.b16 %v738
        %v2283 = vunpack.c.l.b16 %v739
        %v2284 = vunpack.c.h.b16 %v739
        %v2285 = vunpack.c.l.b16 %v740
        %v2286 = vunpack.c.h.b16 %v740
        %v2287 = vunpack.c.l.b16 %v741
        %v2288 = vunpack.c.h.b16 %v741
        %v2289 = vunpack.c.l.b16 %v742
        %v2290 = vunpack.c.h.b16 %v742
        %v2291 = vunpack.c.l.b16 %v743
        %v2292 = vunpack.c.h.b16 %v743
        %v2293 = vunpack.c.l.b16 %v744
        %v2294 = vunpack.c.h.b16 %v744
        %v2295 = vunpack.c.l.b16 %v745
        %v2296 = vunpack.c.h.b16 %v745
        %v2297 = vunpack.c.l.b16 %v746
        %v2298 = vunpack.c.h.b16 %v746
        %v2299 = vunpack.c.l.b16 %v747
        %v2300 = vunpack.c.h.b16 %v747
        %v2301 = vunpack.c.l.b16 %v748
        %v2302 = vunpack.c.h.b16 %v748
        %v2303 = vunpack.c.l.b16 %v749
        %v2304 = vunpack.c.h.b16 %v749
        %v2305 = vunpack.c.l.b16 %v750
        %v2306 = vunpack.c.h.b16 %v750
        %v2307 = vunpack.c.l.b16 %v751
        %v2308 = vunpack.c.h.b16 %v751
        %v2309 = vunpack.c.l.b16 %v752
        %v2310 = vunpack.c.h.b16 %v752
        %v2311 = vunpack.c.l.b16 %v753
        %v2312 = vunpack.c.h.b16 %v753
        %v2313 = vunpack.c.l.b16 %v754
        %v2314 = vunpack.c.h.b16 %v754
        %v2315 = vunpack.c.l.b16 %v755
        %v2316 = vunpack.c.h.b16 %v755
        %v2317 = vunpack.c.l.b16 %v756
        %v2318 = vunpack.c.h.b16 %v756
        %v2319 = vunpack.c.l.b16 %v757
        %v2320 = vunpack.c.h.b16 %v757
        %v2321 = vunpack.c.l.b16 %v758
        %v2322 = vunpack.c.h.b16 %v758
        %v2323 = vunpack.c.l.b16 %v759
        %v2324 = vunpack.c.h.b16 %v759
        %v2325 = vunpack.c.l.b16 %v760
        %v2326 = vunpack.c.h.b16 %v760
        %v2327 = vunpack.c.l.b16 %v761
        %v2328 = vunpack.c.h.b16 %v761
        %v2329 = vunpack.c.l.b16 %v762
        %v2330 = vunpack.c.h.b16 %v762
        %v2331 = vunpack.c.l.b16 %v763
        %v2332 = vunpack.c.h.b16 %v763
        %v2333 = vunpack.c.l.b16 %v764
        %v2334 = vunpack.c.h.b16 %v764
        %v2335 = vunpack.c.l.b16 %v765
        %v2336 = vunpack.c.h.b16 %v765
        %v2337 = vunpack.c.l.b16 %v766
        %v2338 = vunpack.c.h.b16 %v766
        %v2339 = vunpack.c.l.b16 %v767
        %v2340 = vunpack.c.h.b16 %v767
        %v2341 = vunpack.c.l.b16 %v768
        %v2342 = vunpack.c.h.b16 %v768
        %v2343 = vunpack.c.l.b16 %v769
        %v2344 = vunpack.c.h.b16 %v769
        %v2345 = vunpack.c.l.b16 %v770
        %v2346 = vunpack.c.h.b16 %v770
        %v2347 = vunpack.c.l.b16 %v771
        %v2348 = vunpack.c.h.b16 %v771
        %v2349 = vunpack.c.l.b16 %v772
        %v2350 = vunpack.c.h.b16 %v772
        %v2351 = vpack.c.b16 %v1335, %v1327
        %v2352 = vpack.c.b16 %v1336, %v1328
        %v2353 = vpack.c.b16 %v1337, %v1329
        %v2354 = vpack.c.b16 %v1338, %v1330
        %v2355 = vpack.c.b16 %v1339, %v1331
        %v2356 = vpack.c.b16 %v1340, %v1332
        %v2357 = vpack.c.b16 %v1341, %v1333
        %v2358 = vpack.c.b16 %v1342, %v1334
        %v2359 = vpack.c.b16 %v1351, %v1343
        %v2360 = vpack.c.b16 %v1352, %v1344
        %v2361 = vpack.c.b16 %v1353, %v1345
        %v2362 = vpack.c.b16 %v1354, %v1346
        %v2363 = vpack.c.b16 %v1355, %v1347
        %v2364 = vpack.c.b16 %v1356, %v1348
        %v2365 = vpack.c.b16 %v1357, %v1349
        %v2366 = vpack.c.b16 %v1358, %v1350
        %v2367 = vpack.c.b16 %v1367, %v1359
        %v2368 = vpack.c.b16 %v1368, %v1360
        %v2369 = vpack.c.b16 %v1369, %v1361
        %v2370 = vpack.c.b16 %v1370, %v1362
        %v2371 = vpack.c.b16 %v1371, %v1363
        %v2372 = vpack.c.b16 %v1372, %v1364
        %v2373 = vpack.c.b16 %v1373, %v1365
        %v2374 = vpack.c.b16 %v1374, %v1366
        %v2375 = vpack.c.b16 %v1383, %v1375
        %v2376 = vpack.c.b16 %v1384, %v1376
        %v2377 = vpack.c.b16 %v1385, %v1377
        %v2378 = vpack.c.b16 %v1386, %v1378
        %v2379 = vpack.c.b16 %v1387, %v1379
        %v2380 = vpack.c.b16 %v1388, %v1380
        %v2381 = vpack.c.b16 %v1389, %v1381
        %v2382 = vpack.c.b16 %v1390, %v1382
        %v2383 = vpack.c.b16 %v1399, %v1391
        %v2384 = vpack.c.b16 %v1400, %v1392
        %v2385 = vpack.c.b16 %v1401, %v1393
        %v2386 = vpack.c.b16 %v1402, %v1394
        %v2387 = vpack.c.b16 %v1403, %v1395
        %v2388 = vpack.c.b16 %v1404, %v1396
        %v2389 = vpack.c.b16 %v1405, %v1397
        %v2390 = vpack.c.b16 %v1406, %v1398
        %v2391 = vpack.c.b16 %v1415, %v1407
        %v2392 = vpack.c.b16 %v1416, %v1408
        %v2393 = vpack.c.b16 %v1417, %v1409
        %v2394 = vpack.c.b16 %v1418, %v1410
        %v2395 = vpack.c.b16 %v1419, %v1411
        %v2396 = vpack.c.b16 %v1420, %v1412
        %v2397 = vpack.c.b16 %v1421, %v1413
        %v2398 = vpack.c.b16 %v1422, %v1414
        %v2399 = vpack.c.b16 %v1431, %v1423
        %v2400 = vpack.c.b16 %v1432, %v1424
        %v2401 = vpack.c.b16 %v1433, %v1425
        %v2402 = vpack.c.b16 %v1434, %v1426
        %v2403 = vpack.c.b16 %v1435, %v1427
        %v2404 = vpack.c.b16 %v1436, %v1428
        %v2405 = vpack.c.b16 %v1437, %v1429
        %v2406 = vpack.c.b16 %v1438, %v1430
        %v2407 = vpack.c.b16 %v1447, %v1439
        %v2408 = vpack.c.b16 %v1448, %v1440
        %v2409 = vpack.c.b16 %v1449, %v1441
        %v2410 = vpack.c.b16 %v1450, %v1442
        %v2411 = vpack.c.b16 %v1451, %v1443
        %v2412 = vpack.c.b16 %v1452, %v1444
        %v2413 = vpack.c.b16 %v1453, %v1445
        %v2414 = vpack.c.b16 %v1454, %v1446
        %v2415 = vpack.c.b16 %v1463, %v1455
        %v2416 = vpack.c.b16 %v1464, %v1456
        %v2417 = vpack.c.b16 %v1465, %v1457
        %v2418 = vpack.c.b16 %v1466, %v1458
        %v2419 = vpack.c.b16 %v1467, %v1459
        %v2420 = vpack.c.b16 %v1468, %v1460
        %v2421 = vpack.c.b16 %v1469, %v1461
        %v2422 = vpack.c.b16 %v1470, %v1462
        %v2423 = vpack.c.b16 %v1479, %v1471
        %v2424 = vpack.c.b16 %v1480, %v1472
        %v2425 = vpack.c.b16 %v1481, %v1473
        %v2426 = vpack.c.b16 %v1482, %v1474
        %v2427 = vpack.c.b16 %v1483, %v1475
        %v2428 = vpack.c.b16 %v1484, %v1476
        %v2429 = vpack.c.b16 %v1485, %v1477
        %v2430 = vpack.c.b16 %v1486, %v1478
        %v2431 = vpack.c.b16 %v1495, %v1487
        %v2432 = vpack.c.b16 %v1496, %v1488
        %v2433 = vpack.c.b16 %v1497, %v1489
        %v2434 = vpack.c.b16 %v1498, %v1490
        %v2435 = vpack.c.b16 %v1499, %v1491
        %v2436 = vpack.c.b16 %v1500, %v1492
        %v2437 = vpack.c.b16 %v1501, %v1493
        %v2438 = vpack.c.b16 %v1502, %v1494
        %v2439 = vpack.c.b16 %v1511, %v1503
        %v2440 = vpack.c.b16 %v1512, %v1504
        %v2441 = vpack.c.b16 %v1513, %v1505
        %v2442 = vpack.c.b16 %v1514, %v1506
        %v2443 = vpack.c.b16 %v1515, %v1507
        %v2444 = vpack.c.b16 %v1516, %v1508
        %v2445 = vpack.c.b16 %v1517, %v1509
        %v2446 = vpack.c.b16 %v1518, %v1510
        %v2447 = vpack.c.b16 %v1527, %v1519
        %v2448 = vpack.c.b16 %v1528, %v1520
        %v2449 = vpack.c.b16 %v1529, %v1521
        %v2450 = vpack.c.b16 %v1530, %v1522
        %v2451 = vpack.c.b16 %v1531, %v1523
        %v2452 = vpack.c.b16 %v1532, %v1524
        %v2453 = vpack.c.b16 %v1533, %v1525
        %v2454 = vpack.c.b16 %v1534, %v1526
        %v2455 = vpack.c.b16 %v1543, %v1535
        %v2456 = vpack.c.b16 %v1544, %v1536
        %v2457 = vpack.c.b16 %v1545, %v1537
        %v2458 = vpack.c.b16 %v1546, %v1538
        %v2459 = vpack.c.b16 %v1547, %v1539
        %v2460 = vpack.c.b16 %v1548, %v1540
        %v2461 = vpack.c.b16 %v1549, %v1541
        %v2462 = vpack.c.b16 %v1550, %v1542
        %v2463 = vpack.c.b16 %v1559, %v1551
        %v2464 = vpack.c.b16 %v1560, %v1552
        %v2465 = vpack.c.b16 %v1561, %v1553
        %v2466 = vpack.c.b16 %v1562, %v1554
        %v2467 = vpack.c.b16 %v1563, %v1555
        %v2468 = vpack.c.b16 %v1564, %v1556
        %v2469 = vpack.c.b16 %v1565, %v1557
        %v2470 = vpack.c.b16 %v1566, %v1558
        %v2471 = vpack.c.b16 %v1575, %v1567
        %v2472 = vpack.c.b16 %v1576, %v1568
        %v2473 = vpack.c.b16 %v1577, %v1569
        %v2474 = vpack.c.b16 %v1578, %v1570
        %v2475 = vpack.c.b16 %v1579, %v1571
        %v2476 = vpack.c.b16 %v1580, %v1572
        %v2477 = vpack.c.b16 %v1581, %v1573
        %v2478 = vpack.c.b16 %v1582, %v1574
        %v2479 = vpack.c.b16 %v1591, %v1583
        %v2480 = vpack.c.b16 %v1592, %v1584
        %v2481 = vpack.c.b16 %v1593, %v1585
        %v2482 = vpack.c.b16 %v1594, %v1586
        %v2483 = vpack.c.b16 %v1595, %v1587
        %v2484 = vpack.c.b16 %v1596, %v1588
        %v2485 = vpack.c.b16 %v1597, %v1589
        %v2486 = vpack.c.b16 %v1598, %v1590
        %v2487 = vpack.c.b16 %v1607, %v1599
        %v2488 = vpack.c.b16 %v1608, %v1600
        %v2489 = vpack.c.b16 %v1609, %v1601
        %v2490 = vpack.c.b16 %v1610, %v1602
        %v2491 = vpack.c.b16 %v1611, %v1603
        %v2492 = vpack.c.b16 %v1612, %v1604
        %v2493 = vpack.c.b16 %v1613, %v1605
        %v2494 = vpack.c.b16 %v1614, %v1606
        %v2495 = vpack.c.b16 %v1623, %v1615
        %v2496 = vpack.c.b16 %v1624, %v1616
        %v2497 = vpack.c.b16 %v1625, %v1617
        %v2498 = vpack.c.b16 %v1626, %v1618
        %v2499 = vpack.c.b16 %v1627, %v1619
        %v2500 = vpack.c.b16 %v1628, %v1620
        %v2501 = vpack.c.b16 %v1629, %v1621
        %v2502 = vpack.c.b16 %v1630, %v1622
        %v2503 = vpack.c.b16 %v1639, %v1631
        %v2504 = vpack.c.b16 %v1640, %v1632
        %v2505 = vpack.c.b16 %v1641, %v1633
        %v2506 = vpack.c.b16 %v1642, %v1634
        %v2507 = vpack.c.b16 %v1643, %v1635
        %v2508 = vpack.c.b16 %v1644, %v1636
        %v2509 = vpack.c.b16 %v1645, %v1637
        %v2510 = vpack.c.b16 %v1646, %v1638
        %v2511 = vpack.c.b16 %v1655, %v1647
        %v2512 = vpack.c.b16 %v1656, %v1648
        %v2513 = vpack.c.b16 %v1657, %v1649
        %v2514 = vpack.c.b16 %v1658, %v1650
        %v2515 = vpack.c.b16 %v1659, %v1651
        %v2516 = vpack.c.b16 %v1660, %v1652
        %v2517 = vpack.c.b16 %v1661, %v1653
        %v2518 = vpack.c.b16 %v1662, %v1654
        %v2519 = vpack.c.b16 %v1671, %v1663
        %v2520 = vpack.c.b16 %v1672, %v1664
        %v2521 = vpack.c.b16 %v1673, %v1665
        %v2522 = vpack.c.b16 %v1674, %v1666
        %v2523 = vpack.c.b16 %v1675, %v1667
        %v2524 = vpack.c.b16 %v1676, %v1668
        %v2525 = vpack.c.b16 %v1677, %v1669
        %v2526 = vpack.c.b16 %v1678, %v1670
        %v2527 = vpack.c.b16 %v1687, %v1679
        %v2528 = vpack.c.b16 %v1688, %v1680
        %v2529 = vpack.c.b16 %v1689, %v1681
        %v2530 = vpack.c.b16 %v1690, %v1682
        %v2531 = vpack.c.b16 %v1691, %v1683
        %v2532 = vpack.c.b16 %v1692, %v1684
        %v2533 = vpack.c.b16 %v1693, %v1685
        %v2534 = vpack.c.b16 %v1694, %v1686
        %v2535 = vpack.c.b16 %v1703, %v1695
        %v2536 = vpack.c.b16 %v1704, %v1696
        %v2537 = vpack.c.b16 %v1705, %v1697
        %v2538 = vpack.c.b16 %v1706, %v1698
        %v2539 = vpack.c.b16 %v1707, %v1699
        %v2540 = vpack.c.b16 %v1708, %v1700
        %v2541 = vpack.c.b16 %v1709, %v1701
        %v2542 = vpack.c.b16 %v1710, %v1702
        %v2543 = vpack.c.b16 %v1719, %v1711
        %v2544 = vpack.c.b16 %v1720, %v1712
        %v2545 = vpack.c.b16 %v1721, %v1713
        %v2546 = vpack.c.b16 %v1722, %v1714
        %v2547 = vpack.c.b16 %v1723, %v1715
        %v2548 = vpack.c.b16 %v1724, %v1716
        %v2549 = vpack.c.b16 %v1725, %v1717
        %v2550 = vpack.c.b16 %v1726, %v1718
        %v2551 = vpack.c.b16 %v1735, %v1727
        %v2552 = vpack.c.b16 %v1736, %v1728
        %v2553 = vpack.c.b16 %v1737, %v1729
        %v2554 = vpack.c.b16 %v1738, %v1730
        %v2555 = vpack.c.b16 %v1739, %v1731
        %v2556 = vpack.c.b16 %v1740, %v1732
        %v2557 = vpack.c.b16 %v1741, %v1733
        %v2558 = vpack.c.b16 %v1742, %v1734
        %v2559 = vpack.c.b16 %v1751, %v1743
        %v2560 = vpack.c.b16 %v1752, %v1744
        %v2561 = vpack.c.b16 %v1753, %v1745
        %v2562 = vpack.c.b16 %v1754, %v1746
        %v2563 = vpack.c.b16 %v1755, %v1747
        %v2564 = vpack.c.b16 %v1756, %v1748
        %v2565 = vpack.c.b16 %v1757, %v1749
        %v2566 = vpack.c.b16 %v1758, %v1750
        %v2567 = vpack.c.b16 %v1767, %v1759
        %v2568 = vpack.c.b16 %v1768, %v1760
        %v2569 = vpack.c.b16 %v1769, %v1761
        %v2570 = vpack.c.b16 %v1770, %v1762
        %v2571 = vpack.c.b16 %v1771, %v1763
        %v2572 = vpack.c.b16 %v1772, %v1764
        %v2573 = vpack.c.b16 %v1773, %v1765
        %v2574 = vpack.c.b16 %v1774, %v1766
        %v2575 = vpack.c.b16 %v1783, %v1775
        %v2576 = vpack.c.b16 %v1784, %v1776
        %v2577 = vpack.c.b16 %v1785, %v1777
        %v2578 = vpack.c.b16 %v1786, %v1778
        %v2579 = vpack.c.b16 %v1787, %v1779
        %v2580 = vpack.c.b16 %v1788, %v1780
        %v2581 = vpack.c.b16 %v1789, %v1781
        %v2582 = vpack.c.b16 %v1790, %v1782
        %v2583 = vpack.c.b16 %v1799, %v1791
        %v2584 = vpack.c.b16 %v1800, %v1792
        %v2585 = vpack.c.b16 %v1801, %v1793
        %v2586 = vpack.c.b16 %v1802, %v1794
        %v2587 = vpack.c.b16 %v1803, %v1795
        %v2588 = vpack.c.b16 %v1804, %v1796
        %v2589 = vpack.c.b16 %v1805, %v1797
        %v2590 = vpack.c.b16 %v1806, %v1798
        %v2591 = vpack.c.b16 %v1815, %v1807
        %v2592 = vpack.c.b16 %v1816, %v1808
        %v2593 = vpack.c.b16 %v1817, %v1809
        %v2594 = vpack.c.b16 %v1818, %v1810
        %v2595 = vpack.c.b16 %v1819, %v1811
        %v2596 = vpack.c.b16 %v1820, %v1812
        %v2597 = vpack.c.b16 %v1821, %v1813
        %v2598 = vpack.c.b16 %v1822, %v1814
        %v2599 = vpack.c.b16 %v1831, %v1823
        %v2600 = vpack.c.b16 %v1832, %v1824
        %v2601 = vpack.c.b16 %v1833, %v1825
        %v2602 = vpack.c.b16 %v1834, %v1826
        %v2603 = vpack.c.b16 %v1835, %v1827
        %v2604 = vpack.c.b16 %v1836, %v1828
        %v2605 = vpack.c.b16 %v1837, %v1829
        %v2606 = vpack.c.b16 %v1838, %v1830
        %v2607 = vpack.c.b16 %v1847, %v1839
        %v2608 = vpack.c.b16 %v1848, %v1840
        %v2609 = vpack.c.b16 %v1849, %v1841
        %v2610 = vpack.c.b16 %v1850, %v1842
        %v2611 = vpack.c.b16 %v1851, %v1843
        %v2612 = vpack.c.b16 %v1852, %v1844
        %v2613 = vpack.c.b16 %v1853, %v1845
        %v2614 = vpack.c.b16 %v1854, %v1846
        %v2615 = vpack.c.b16 %v1863, %v1855
        %v2616 = vpack.c.b16 %v1864, %v1856
        %v2617 = vpack.c.b16 %v1865, %v1857
        %v2618 = vpack.c.b16 %v1866, %v1858
        %v2619 = vpack.c.b16 %v1867, %v1859
        %v2620 = vpack.c.b16 %v1868, %v1860
        %v2621 = vpack.c.b16 %v1869, %v1861
        %v2622 = vpack.c.b16 %v1870, %v1862
        %v2623 = vpack.c.b16 %v1879, %v1871
        %v2624 = vpack.c.b16 %v1880, %v1872
        %v2625 = vpack.c.b16 %v1881, %v1873
        %v2626 = vpack.c.b16 %v1882, %v1874
        %v2627 = vpack.c.b16 %v1883, %v1875
        %v2628 = vpack.c.b16 %v1884, %v1876
        %v2629 = vpack.c.b16 %v1885, %v1877
        %v2630 = vpack.c.b16 %v1886, %v1878
        %v2631 = vpack.c.b16 %v1895, %v1887
        %v2632 = vpack.c.b16 %v1896, %v1888
        %v2633 = vpack.c.b16 %v1897, %v1889
        %v2634 = vpack.c.b16 %v1898, %v1890
        %v2635 = vpack.c.b16 %v1899, %v1891
        %v2636 = vpack.c.b16 %v1900, %v1892
        %v2637 = vpack.c.b16 %v1901, %v1893
        %v2638 = vpack.c.b16 %v1902, %v1894
        %v2639 = vpack.c.b16 %v1911, %v1903
        %v2640 = vpack.c.b16 %v1912, %v1904
        %v2641 = vpack.c.b16 %v1913, %v1905
        %v2642 = vpack.c.b16 %v1914, %v1906
        %v2643 = vpack.c.b16 %v1915, %v1907
        %v2644 = vpack.c.b16 %v1916, %v1908
        %v2645 = vpack.c.b16 %v1917, %v1909
        %v2646 = vpack.c.b16 %v1918, %v1910
        %v2647 = vpack.c.b16 %v1927, %v1919
        %v2648 = vpack.c.b16 %v1928, %v1920
        %v2649 = vpack.c.b16 %v1929, %v1921
        %v2650 = vpack.c.b16 %v1930, %v1922
        %v2651 = vpack.c.b16 %v1931, %v1923
        %v2652 = vpack.c.b16 %v1932, %v1924
        %v2653 = vpack.c.b16 %v1933, %v1925
        %v2654 = vpack.c.b16 %v1934, %v1926
        %v2655 = vpack.c.b16 %v1943, %v1935
        %v2656 = vpack.c.b16 %v1944, %v1936
        %v2657 = vpack.c.b16 %v1945, %v1937
        %v2658 = vpack.c.b16 %v1946, %v1938
        %v2659 = vpack.c.b16 %v1947, %v1939
        %v2660 = vpack.c.b16 %v1948, %v1940
        %v2661 = vpack.c.b16 %v1949, %v1941
        %v2662 = vpack.c.b16 %v1950, %v1942
        %v2663 = vpack.c.b16 %v1959, %v1951
        %v2664 = vpack.c.b16 %v1960, %v1952
        %v2665 = vpack.c.b16 %v1961, %v1953
        %v2666 = vpack.c.b16 %v1962, %v1954
        %v2667 = vpack.c.b16 %v1963, %v1955
        %v2668 = vpack.c.b16 %v1964, %v1956
        %v2669 = vpack.c.b16 %v1965, %v1957
        %v2670 = vpack.c.b16 %v1966, %v1958
        %v2671 = vpack.c.b16 %v1975, %v1967
        %v2672 = vpack.c.b16 %v1976, %v1968
        %v2673 = vpack.c.b16 %v1977, %v1969
        %v2674 = vpack.c.b16 %v1978, %v1970
        %v2675 = vpack.c.b16 %v1979, %v1971
        %v2676 = vpack.c.b16 %v1980, %v1972
        %v2677 = vpack.c.b16 %v1981, %v1973
        %v2678 = vpack.c.b16 %v1982, %v1974
        %v2679 = vpack.c.b16 %v1991, %v1983
        %v2680 = vpack.c.b16 %v1992, %v1984
        %v2681 = vpack.c.b16 %v1993, %v1985
        %v2682 = vpack.c.b16 %v1994, %v1986
        %v2683 = vpack.c.b16 %v1995, %v1987
        %v2684 = vpack.c.b16 %v1996, %v1988
        %v2685 = vpack.c.b16 %v1997, %v1989
        %v2686 = vpack.c.b16 %v1998, %v1990
        %v2687 = vpack.c.b16 %v2007, %v1999
        %v2688 = vpack.c.b16 %v2008, %v2000
        %v2689 = vpack.c.b16 %v2009, %v2001
        %v2690 = vpack.c.b16 %v2010, %v2002
        %v2691 = vpack.c.b16 %v2011, %v2003
        %v2692 = vpack.c.b16 %v2012, %v2004
        %v2693 = vpack.c.b16 %v2013, %v2005
        %v2694 = vpack.c.b16 %v2014, %v2006
        %v2695 = vpack.c.b16 %v2023, %v2015
        %v2696 = vpack.c.b16 %v2024, %v2016
        %v2697 = vpack.c.b16 %v2025, %v2017
        %v2698 = vpack.c.b16 %v2026, %v2018
        %v2699 = vpack.c.b16 %v2027, %v2019
        %v2700 = vpack.c.b16 %v2028, %v2020
        %v2701 = vpack.c.b16 %v2029, %v2021
        %v2702 = vpack.c.b16 %v2030, %v2022
        %v2703 = vpack.c.b16 %v2039, %v2031
        %v2704 = vpack.c.b16 %v2040, %v2032
        %v2705 = vpack.c.b16 %v2041, %v2033
        %v2706 = vpack.c.b16 %v2042, %v2034
        %v2707 = vpack.c.b16 %v2043, %v2035
        %v2708 = vpack.c.b16 %v2044, %v2036
        %v2709 = vpack.c.b16 %v2045, %v2037
        %v2710 = vpack.c.b16 %v2046, %v2038
        %v2711 = vpack.c.b16 %v2055, %v2047
        %v2712 = vpack.c.b16 %v2056, %v2048
        %v2713 = vpack.c.b16 %v2057, %v2049
        %v2714 = vpack.c.b16 %v2058, %v2050
        %v2715 = vpack.c.b16 %v2059, %v2051
        %v2716 = vpack.c.b16 %v2060, %v2052
        %v2717 = vpack.c.b16 %v2061, %v2053
        %v2718 = vpack.c.b16 %v2062, %v2054
        %v2719 = vpack.c.b16 %v2071, %v2063
        %v2720 = vpack.c.b16 %v2072, %v2064
        %v2721 = vpack.c.b16 %v2073, %v2065
        %v2722 = vpack.c.b16 %v2074, %v2066
        %v2723 = vpack.c.b16 %v2075, %v2067
        %v2724 = vpack.c.b16 %v2076, %v2068
        %v2725 = vpack.c.b16 %v2077, %v2069
        %v2726 = vpack.c.b16 %v2078, %v2070
        %v2727 = vpack.c.b16 %v2087, %v2079
        %v2728 = vpack.c.b16 %v2088, %v2080
        %v2729 = vpack.c.b16 %v2089, %v2081
        %v2730 = vpack.c.b16 %v2090, %v2082
        %v2731 = vpack.c.b16 %v2091, %v2083
        %v2732 = vpack.c.b16 %v2092, %v2084
        %v2733 = vpack.c.b16 %v2093, %v2085
        %v2734 = vpack.c.b16 %v2094, %v2086
        %v2735 = vpack.c.b16 %v2103, %v2095
        %v2736 = vpack.c.b16 %v2104, %v2096
        %v2737 = vpack.c.b16 %v2105, %v2097
        %v2738 = vpack.c.b16 %v2106, %v2098
        %v2739 = vpack.c.b16 %v2107, %v2099
        %v2740 = vpack.c.b16 %v2108, %v2100
        %v2741 = vpack.c.b16 %v2109, %v2101
        %v2742 = vpack.c.b16 %v2110, %v2102
        %v2743 = vpack.c.b16 %v2119, %v2111
        %v2744 = vpack.c.b16 %v2120, %v2112
        %v2745 = vpack.c.b16 %v2121, %v2113
        %v2746 = vpack.c.b16 %v2122, %v2114
        %v2747 = vpack.c.b16 %v2123, %v2115
        %v2748 = vpack.c.b16 %v2124, %v2116
        %v2749 = vpack.c.b16 %v2125, %v2117
        %v2750 = vpack.c.b16 %v2126, %v2118
        %v2751 = vpack.c.b16 %v2135, %v2127
        %v2752 = vpack.c.b16 %v2136, %v2128
        %v2753 = vpack.c.b16 %v2137, %v2129
        %v2754 = vpack.c.b16 %v2138, %v2130
        %v2755 = vpack.c.b16 %v2139, %v2131
        %v2756 = vpack.c.b16 %v2140, %v2132
        %v2757 = vpack.c.b16 %v2141, %v2133
        %v2758 = vpack.c.b16 %v2142, %v2134
        %v2759 = vpack.c.b16 %v2151, %v2143
        %v2760 = vpack.c.b16 %v2152, %v2144
        %v2761 = vpack.c.b16 %v2153, %v2145
        %v2762 = vpack.c.b16 %v2154, %v2146
        %v2763 = vpack.c.b16 %v2155, %v2147
        %v2764 = vpack.c.b16 %v2156, %v2148
        %v2765 = vpack.c.b16 %v2157, %v2149
        %v2766 = vpack.c.b16 %v2158, %v2150
        %v2767 = vpack.c.b16 %v2167, %v2159
        %v2768 = vpack.c.b16 %v2168, %v2160
        %v2769 = vpack.c.b16 %v2169, %v2161
        %v2770 = vpack.c.b16 %v2170, %v2162
        %v2771 = vpack.c.b16 %v2171, %v2163
        %v2772 = vpack.c.b16 %v2172, %v2164
        %v2773 = vpack.c.b16 %v2173, %v2165
        %v2774 = vpack.c.b16 %v2174, %v2166
        %v2775 = vpack.c.b16 %v2183, %v2175
        %v2776 = vpack.c.b16 %v2184, %v2176
        %v2777 = vpack.c.b16 %v2185, %v2177
        %v2778 = vpack.c.b16 %v2186, %v2178
        %v2779 = vpack.c.b16 %v2187, %v2179
        %v2780 = vpack.c.b16 %v2188, %v2180
        %v2781 = vpack.c.b16 %v2189, %v2181
        %v2782 = vpack.c.b16 %v2190, %v2182
        %v2783 = vpack.c.b16 %v2199, %v2191
        %v2784 = vpack.c.b16 %v2200, %v2192
        %v2785 = vpack.c.b16 %v2201, %v2193
        %v2786 = vpack.c.b16 %v2202, %v2194
        %v2787 = vpack.c.b16 %v2203, %v2195
        %v2788 = vpack.c.b16 %v2204, %v2196
        %v2789 = vpack.c.b16 %v2205, %v2197
        %v2790 = vpack.c.b16 %v2206, %v2198
        %v2791 = vpack.c.b16 %v2215, %v2207
        %v2792 = vpack.c.b16 %v2216, %v2208
        %v2793 = vpack.c.b16 %v2217, %v2209
        %v2794 = vpack.c.b16 %v2218, %v2210
        %v2795 = vpack.c.b16 %v2219, %v2211
        %v2796 = vpack.c.b16 %v2220, %v2212
        %v2797 = vpack.c.b16 %v2221, %v2213
        %v2798 = vpack.c.b16 %v2222, %v2214
        %v2799 = vpack.c.b16 %v2231, %v2223
        %v2800 = vpack.c.b16 %v2232, %v2224
        %v2801 = vpack.c.b16 %v2233, %v2225
        %v2802 = vpack.c.b16 %v2234, %v2226
        %v2803 = vpack.c.b16 %v2235, %v2227
        %v2804 = vpack.c.b16 %v2236, %v2228
        %v2805 = vpack.c.b16 %v2237, %v2229
        %v2806 = vpack.c.b16 %v2238, %v2230
        %v2807 = vpack.c.b16 %v2247, %v2239
        %v2808 = vpack.c.b16 %v2248, %v2240
        %v2809 = vpack.c.b16 %v2249, %v2241
        %v2810 = vpack.c.b16 %v2250, %v2242
        %v2811 = vpack.c.b16 %v2251, %v2243
        %v2812 = vpack.c.b16 %v2252, %v2244
        %v2813 = vpack.c.b16 %v2253, %v2245
        %v2814 = vpack.c.b16 %v2254, %v2246
        %v2815 = vpack.c.b16 %v2263, %v2255
        %v2816 = vpack.c.b16 %v2264, %v2256
        %v2817 = vpack.c.b16 %v2265, %v2257
        %v2818 = vpack.c.b16 %v2266, %v2258
        %v2819 = vpack.c.b16 %v2267, %v2259
        %v2820 = vpack.c.b16 %v2268, %v2260
        %v2821 = vpack.c.b16 %v2269, %v2261
        %v2822 = vpack.c.b16 %v2270, %v2262
        %v2823 = vpack.c.b16 %v2279, %v2271
        %v2824 = vpack.c.b16 %v2280, %v2272
        %v2825 = vpack.c.b16 %v2281, %v2273
        %v2826 = vpack.c.b16 %v2282, %v2274
        %v2827 = vpack.c.b16 %v2283, %v2275
        %v2828 = vpack.c.b16 %v2284, %v2276
        %v2829 = vpack.c.b16 %v2285, %v2277
        %v2830 = vpack.c.b16 %v2286, %v2278
        %v2831 = vpack.c.b16 %v2295, %v2287
        %v2832 = vpack.c.b16 %v2296, %v2288
        %v2833 = vpack.c.b16 %v2297, %v2289
        %v2834 = vpack.c.b16 %v2298, %v2290
        %v2835 = vpack.c.b16 %v2299, %v2291
        %v2836 = vpack.c.b16 %v2300, %v2292
        %v2837 = vpack.c.b16 %v2301, %v2293
        %v2838 = vpack.c.b16 %v2302, %v2294
        %v2839 = vpack.c.b16 %v2311, %v2303
        %v2840 = vpack.c.b16 %v2312, %v2304
        %v2841 = vpack.c.b16 %v2313, %v2305
        %v2842 = vpack.c.b16 %v2314, %v2306
        %v2843 = vpack.c.b16 %v2315, %v2307
        %v2844 = vpack.c.b16 %v2316, %v2308
        %v2845 = vpack.c.b16 %v2317, %v2309
        %v2846 = vpack.c.b16 %v2318, %v2310
        %v2847 = vpack.c.b16 %v2327, %v2319
        %v2848 = vpack.c.b16 %v2328, %v2320
        %v2849 = vpack.c.b16 %v2329, %v2321
        %v2850 = vpack.c.b16 %v2330, %v2322
        %v2851 = vpack.c.b16 %v2331, %v2323
        %v2852 = vpack.c.b16 %v2332, %v2324
        %v2853 = vpack.c.b16 %v2333, %v2325
        %v2854 = vpack.c.b16 %v2334, %v2326
        %v2855 = vpack.c.b16 %v2343, %v2335
        %v2856 = vpack.c.b16 %v2344, %v2336
        %v2857 = vpack.c.b16 %v2345, %v2337
        %v2858 = vpack.c.b16 %v2346, %v2338
        %v2859 = vpack.c.b16 %v2347, %v2339
        %v2860 = vpack.c.b16 %v2348, %v2340
        %v2861 = vpack.c.b16 %v2349, %v2341
        %v2862 = vpack.c.b16 %v2350, %v2342
        %3375 = vmatprep.subr.bf16.mxu0 %v2352
        %3376 = vmatpush1.bf16.msra.mxu0 %v2351
        %3377 = vmatprep.subr.bf16.mxu0 %v2360
        %3378 = vmatpush1.bf16.msra.mxu0 %v2359
        %3379 = vmatprep.subr.bf16.mxu0 %v2368
        %3380 = vmatpush1.bf16.msra.mxu0 %v2367
        %3381 = vmatprep.subr.bf16.mxu0 %v2376
        %3382 = vmatpush1.bf16.msra.mxu0 %v2375
        %3383 = vmatprep.subr.bf16.mxu0 %v2384
        %3384 = vmatpush1.bf16.msra.mxu0 %v2383
        %3385 = vmatprep.subr.bf16.mxu0 %v2392
        %3386 = vmatpush1.bf16.msra.mxu0 %v2391
        %3387 = vmatprep.subr.bf16.mxu0 %v2400
        %3388 = vmatpush1.bf16.msra.mxu0 %v2399
        %3389 = vmatprep.subr.bf16.mxu0 %v2408
        %3390 = vmatpush1.bf16.msra.mxu0 %v2407
        %3391 = vmatprep.subr.bf16.mxu0 %v2416
        %3392 = vmatpush1.bf16.msra.mxu0 %v2415
        %3393 = vmatprep.subr.bf16.mxu0 %v2424
        %3394 = vmatpush1.bf16.msra.mxu0 %v2423
        %3395 = vmatprep.subr.bf16.mxu0 %v2432
        %3396 = vmatpush1.bf16.msra.mxu0 %v2431
        %3397 = vmatprep.subr.bf16.mxu0 %v2440
        %3398 = vmatpush1.bf16.msra.mxu0 %v2439
        %3399 = vmatprep.subr.bf16.mxu0 %v2448
        %3400 = vmatpush1.bf16.msra.mxu0 %v2447
        %3401 = vmatprep.subr.bf16.mxu0 %v2456
        %3402 = vmatpush1.bf16.msra.mxu0 %v2455
        %3403 = vmatprep.subr.bf16.mxu0 %v2464
        %3404 = vmatpush1.bf16.msra.mxu0 %v2463
        %3405 = vmatprep.subr.bf16.mxu0 %v2472
        %3406 = vmatpush1.bf16.msra.mxu0 %v2471
        %3407 = vmatprep.mubr.bf16.mxu0 %v254
        %3408 = vmatmul.mubr.bf16.gmra.mrb[0].mxu0 %v253
        %v3409 = vpop.f32.mrb[0].mxu0
        %v3410 = vadd.f32 %v778, %v3409
        %v3411 = vpop.f32.mrb[0].mxu0
        %v3412 = vadd.f32 %v782, %v3411
        %v3413 = vpop.f32.mrb[0].mxu0
        %v3414 = vpop.f32.mrb[0].mxu0
        %3415 = vdwg.mxu0
        %3416 = vmatprep.subr.bf16.mxu0 %v2480
        %3417 = vmatpush1.bf16.msra.mxu0 %v2479
        %3418 = vmatprep.subr.bf16.mxu0 %v2488
        %3419 = vmatpush1.bf16.msra.mxu0 %v2487
        %3420 = vmatprep.subr.bf16.mxu0 %v2496
        %3421 = vmatpush1.bf16.msra.mxu0 %v2495
        %3422 = vmatprep.subr.bf16.mxu0 %v2504
        %3423 = vmatpush1.bf16.msra.mxu0 %v2503
        %3424 = vmatprep.subr.bf16.mxu0 %v2512
        %3425 = vmatpush1.bf16.msra.mxu0 %v2511
        %3426 = vmatprep.subr.bf16.mxu0 %v2520
        %3427 = vmatpush1.bf16.msra.mxu0 %v2519
        %3428 = vmatprep.subr.bf16.mxu0 %v2528
        %3429 = vmatpush1.bf16.msra.mxu0 %v2527
        %3430 = vmatprep.subr.bf16.mxu0 %v2536
        %3431 = vmatpush1.bf16.msra.mxu0 %v2535
        %3432 = vmatprep.subr.bf16.mxu0 %v2544
        %3433 = vmatpush1.bf16.msra.mxu0 %v2543
        %3434 = vmatprep.subr.bf16.mxu0 %v2552
        %3435 = vmatpush1.bf16.msra.mxu0 %v2551
        %3436 = vmatprep.subr.bf16.mxu0 %v2560
        %3437 = vmatpush1.bf16.msra.mxu0 %v2559
        %3438 = vmatprep.subr.bf16.mxu0 %v2568
        %3439 = vmatpush1.bf16.msra.mxu0 %v2567
        %3440 = vmatprep.subr.bf16.mxu0 %v2576
        %3441 = vmatpush1.bf16.msra.mxu0 %v2575
        %3442 = vmatprep.subr.bf16.mxu0 %v2584
        %3443 = vmatpush1.bf16.msra.mxu0 %v2583
        %3444 = vmatprep.subr.bf16.mxu0 %v2592
        %3445 = vmatpush1.bf16.msra.mxu0 %v2591
        %3446 = vmatprep.subr.bf16.mxu0 %v2600
        %3447 = vmatpush1.bf16.msra.mxu0 %v2599
        %3448 = vmatprep.mubr.bf16.mxu0 %v256
        %3449 = vmatmul.mubr.bf16.gmra.mrb[0].mxu0 %v255
        %v3450 = vpop.f32.mrb[0].mxu0
        %v3451 = vadd.f32 %v3410, %v3450
        %v3452 = vpop.f32.mrb[0].mxu0
        %v3453 = vadd.f32 %v3412, %v3452
        %v3454 = vpop.f32.mrb[0].mxu0
        %v3455 = vpop.f32.mrb[0].mxu0
        %3456 = vdwg.mxu0
        %3457 = vmatprep.subr.bf16.mxu0 %v2608
        %3458 = vmatpush1.bf16.msra.mxu0 %v2607
        %3459 = vmatprep.subr.bf16.mxu0 %v2616
        %3460 = vmatpush1.bf16.msra.mxu0 %v2615
        %3461 = vmatprep.subr.bf16.mxu0 %v2624
        %3462 = vmatpush1.bf16.msra.mxu0 %v2623
        %3463 = vmatprep.subr.bf16.mxu0 %v2632
        %3464 = vmatpush1.bf16.msra.mxu0 %v2631
        %3465 = vmatprep.subr.bf16.mxu0 %v2640
        %3466 = vmatpush1.bf16.msra.mxu0 %v2639
        %3467 = vmatprep.subr.bf16.mxu0 %v2648
        %3468 = vmatpush1.bf16.msra.mxu0 %v2647
        %3469 = vmatprep.subr.bf16.mxu0 %v2656
        %3470 = vmatpush1.bf16.msra.mxu0 %v2655
        %3471 = vmatprep.subr.bf16.mxu0 %v2664
        %3472 = vmatpush1.bf16.msra.mxu0 %v2663
        %3473 = vmatprep.subr.bf16.mxu0 %v2672
        %3474 = vmatpush1.bf16.msra.mxu0 %v2671
        %3475 = vmatprep.subr.bf16.mxu0 %v2680
        %3476 = vmatpush1.bf16.msra.mxu0 %v2679
        %3477 = vmatprep.subr.bf16.mxu0 %v2688
        %3478 = vmatpush1.bf16.msra.mxu0 %v2687
        %3479 = vmatprep.subr.bf16.mxu0 %v2696
        %3480 = vmatpush1.bf16.msra.mxu0 %v2695
        %3481 = vmatprep.subr.bf16.mxu0 %v2704
        %3482 = vmatpush1.bf16.msra.mxu0 %v2703
        %3483 = vmatprep.subr.bf16.mxu0 %v2712
        %3484 = vmatpush1.bf16.msra.mxu0 %v2711
        %3485 = vmatprep.subr.bf16.mxu0 %v2720
        %3486 = vmatpush1.bf16.msra.mxu0 %v2719
        %3487 = vmatprep.subr.bf16.mxu0 %v2728
        %3488 = vmatpush1.bf16.msra.mxu0 %v2727
        %3489 = vmatprep.mubr.bf16.mxu0 %v258
        %3490 = vmatmul.mubr.bf16.gmra.mrb[0].mxu0 %v257
        %v3491 = vpop.f32.mrb[0].mxu0
        %v3492 = vadd.f32 %v3451, %v3491
        %v3493 = vpop.f32.mrb[0].mxu0
        %v3494 = vadd.f32 %v3453, %v3493
        %v3495 = vpop.f32.mrb[0].mxu0
        %v3496 = vpop.f32.mrb[0].mxu0
        %3497 = vdwg.mxu0
        %3498 = vmatprep.subr.bf16.mxu0 %v2736
        %3499 = vmatpush1.bf16.msra.mxu0 %v2735
        %3500 = vmatprep.subr.bf16.mxu0 %v2744
        %3501 = vmatpush1.bf16.msra.mxu0 %v2743
        %3502 = vmatprep.subr.bf16.mxu0 %v2752
        %3503 = vmatpush1.bf16.msra.mxu0 %v2751
        %3504 = vmatprep.subr.bf16.mxu0 %v2760
        %3505 = vmatpush1.bf16.msra.mxu0 %v2759
        %3506 = vmatprep.subr.bf16.mxu0 %v2768
        %3507 = vmatpush1.bf16.msra.mxu0 %v2767
        %3508 = vmatprep.subr.bf16.mxu0 %v2776
        %3509 = vmatpush1.bf16.msra.mxu0 %v2775
        %3510 = vmatprep.subr.bf16.mxu0 %v2784
        %3511 = vmatpush1.bf16.msra.mxu0 %v2783
        %3512 = vmatprep.subr.bf16.mxu0 %v2792
        %3513 = vmatpush1.bf16.msra.mxu0 %v2791
        %3514 = vmatprep.subr.bf16.mxu0 %v2800
        %3515 = vmatpush1.bf16.msra.mxu0 %v2799
        %3516 = vmatprep.subr.bf16.mxu0 %v2808
        %3517 = vmatpush1.bf16.msra.mxu0 %v2807
        %3518 = vmatprep.subr.bf16.mxu0 %v2816
        %3519 = vmatpush1.bf16.msra.mxu0 %v2815
        %3520 = vmatprep.subr.bf16.mxu0 %v2824
        %3521 = vmatpush1.bf16.msra.mxu0 %v2823
        %3522 = vmatprep.subr.bf16.mxu0 %v2832
        %3523 = vmatpush1.bf16.msra.mxu0 %v2831
        %3524 = vmatprep.subr.bf16.mxu0 %v2840
        %3525 = vmatpush1.bf16.msra.mxu0 %v2839
        %3526 = vmatprep.subr.bf16.mxu0 %v2848
        %3527 = vmatpush1.bf16.msra.mxu0 %v2847
        %3528 = vmatprep.subr.bf16.mxu0 %v2856
        %3529 = vmatpush1.bf16.msra.mxu0 %v2855
        %3530 = vmatprep.mubr.bf16.mxu0 %v260
        %3531 = vmatmul.mubr.bf16.gmra.mrb[0].mxu0 %v259
        %v3532 = vpop.f32.mrb[0].mxu0
        %v3533 = vadd.f32 %v3492, %v3532
        %v3534 = vpop.f32.mrb[0].mxu0
        %v3535 = vadd.f32 %v3494, %v3534
        %v3536 = vpop.f32.mrb[0].mxu0
        %v3537 = vpop.f32.mrb[0].mxu0
        %3538 = vdwg.mxu0
        %3539 = vmatprep.subr.bf16.mxu0 %v2354
        %3540 = vmatpush1.bf16.msra.mxu0 %v2353
        %3541 = vmatprep.subr.bf16.mxu0 %v2362
        %3542 = vmatpush1.bf16.msra.mxu0 %v2361
        %3543 = vmatprep.subr.bf16.mxu0 %v2370
        %3544 = vmatpush1.bf16.msra.mxu0 %v2369
        %3545 = vmatprep.subr.bf16.mxu0 %v2378
        %3546 = vmatpush1.bf16.msra.mxu0 %v2377
        %3547 = vmatprep.subr.bf16.mxu0 %v2386
        %3548 = vmatpush1.bf16.msra.mxu0 %v2385
        %3549 = vmatprep.subr.bf16.mxu0 %v2394
        %3550 = vmatpush1.bf16.msra.mxu0 %v2393
        %3551 = vmatprep.subr.bf16.mxu0 %v2402
        %3552 = vmatpush1.bf16.msra.mxu0 %v2401
        %3553 = vmatprep.subr.bf16.mxu0 %v2410
        %3554 = vmatpush1.bf16.msra.mxu0 %v2409
        %3555 = vmatprep.subr.bf16.mxu0 %v2418
        %3556 = vmatpush1.bf16.msra.mxu0 %v2417
        %3557 = vmatprep.subr.bf16.mxu0 %v2426
        %3558 = vmatpush1.bf16.msra.mxu0 %v2425
        %3559 = vmatprep.subr.bf16.mxu0 %v2434
        %3560 = vmatpush1.bf16.msra.mxu0 %v2433
        %3561 = vmatprep.subr.bf16.mxu0 %v2442
        %3562 = vmatpush1.bf16.msra.mxu0 %v2441
        %3563 = vmatprep.subr.bf16.mxu0 %v2450
        %3564 = vmatpush1.bf16.msra.mxu0 %v2449
        %3565 = vmatprep.subr.bf16.mxu0 %v2458
        %3566 = vmatpush1.bf16.msra.mxu0 %v2457
        %3567 = vmatprep.subr.bf16.mxu0 %v2466
        %3568 = vmatpush1.bf16.msra.mxu0 %v2465
        %3569 = vmatprep.subr.bf16.mxu0 %v2474
        %3570 = vmatpush1.bf16.msra.mxu0 %v2473
        %3571 = vmatprep.mubr.bf16.mxu0 %v254
        %3572 = vmatmul.mubr.bf16.gmra.mrb[0].mxu0 %v253
        %v3573 = vpop.f32.mrb[0].mxu0
        %v3574 = vadd.f32 %v786, %v3573
        %v3575 = vpop.f32.mrb[0].mxu0
        %v3576 = vadd.f32 %v790, %v3575
        %v3577 = vpop.f32.mrb[0].mxu0
        %v3578 = vpop.f32.mrb[0].mxu0
        %3579 = vdwg.mxu0
        %3580 = vmatprep.subr.bf16.mxu0 %v2482
        %3581 = vmatpush1.bf16.msra.mxu0 %v2481
        %3582 = vmatprep.subr.bf16.mxu0 %v2490
        %3583 = vmatpush1.bf16.msra.mxu0 %v2489
        %3584 = vmatprep.subr.bf16.mxu0 %v2498
        %3585 = vmatpush1.bf16.msra.mxu0 %v2497
        %3586 = vmatprep.subr.bf16.mxu0 %v2506
        %3587 = vmatpush1.bf16.msra.mxu0 %v2505
        %3588 = vmatprep.subr.bf16.mxu0 %v2514
        %3589 = vmatpush1.bf16.msra.mxu0 %v2513
        %3590 = vmatprep.subr.bf16.mxu0 %v2522
        %3591 = vmatpush1.bf16.msra.mxu0 %v2521
        %3592 = vmatprep.subr.bf16.mxu0 %v2530
        %3593 = vmatpush1.bf16.msra.mxu0 %v2529
        %3594 = vmatprep.subr.bf16.mxu0 %v2538
        %3595 = vmatpush1.bf16.msra.mxu0 %v2537
        %3596 = vmatprep.subr.bf16.mxu0 %v2546
        %3597 = vmatpush1.bf16.msra.mxu0 %v2545
        %3598 = vmatprep.subr.bf16.mxu0 %v2554
        %3599 = vmatpush1.bf16.msra.mxu0 %v2553
        %3600 = vmatprep.subr.bf16.mxu0 %v2562
        %3601 = vmatpush1.bf16.msra.mxu0 %v2561
        %3602 = vmatprep.subr.bf16.mxu0 %v2570
        %3603 = vmatpush1.bf16.msra.mxu0 %v2569
        %3604 = vmatprep.subr.bf16.mxu0 %v2578
        %3605 = vmatpush1.bf16.msra.mxu0 %v2577
        %3606 = vmatprep.subr.bf16.mxu0 %v2586
        %3607 = vmatpush1.bf16.msra.mxu0 %v2585
        %3608 = vmatprep.subr.bf16.mxu0 %v2594
        %3609 = vmatpush1.bf16.msra.mxu0 %v2593
        %3610 = vmatprep.subr.bf16.mxu0 %v2602
        %3611 = vmatpush1.bf16.msra.mxu0 %v2601
        %3612 = vmatprep.mubr.bf16.mxu0 %v256
        %3613 = vmatmul.mubr.bf16.gmra.mrb[0].mxu0 %v255
        %v3614 = vpop.f32.mrb[0].mxu0
        %v3615 = vadd.f32 %v3574, %v3614
        %v3616 = vpop.f32.mrb[0].mxu0
        %v3617 = vadd.f32 %v3576, %v3616
        %v3618 = vpop.f32.mrb[0].mxu0
        %v3619 = vpop.f32.mrb[0].mxu0
        %3620 = vdwg.mxu0
        %3621 = vmatprep.subr.bf16.mxu0 %v2610
        %3622 = vmatpush1.bf16.msra.mxu0 %v2609
        %3623 = vmatprep.subr.bf16.mxu0 %v2618
        %3624 = vmatpush1.bf16.msra.mxu0 %v2617
        %3625 = vmatprep.subr.bf16.mxu0 %v2626
        %3626 = vmatpush1.bf16.msra.mxu0 %v2625
        %3627 = vmatprep.subr.bf16.mxu0 %v2634
        %3628 = vmatpush1.bf16.msra.mxu0 %v2633
        %3629 = vmatprep.subr.bf16.mxu0 %v2642
        %3630 = vmatpush1.bf16.msra.mxu0 %v2641
        %3631 = vmatprep.subr.bf16.mxu0 %v2650
        %3632 = vmatpush1.bf16.msra.mxu0 %v2649
        %3633 = vmatprep.subr.bf16.mxu0 %v2658
        %3634 = vmatpush1.bf16.msra.mxu0 %v2657
        %3635 = vmatprep.subr.bf16.mxu0 %v2666
        %3636 = vmatpush1.bf16.msra.mxu0 %v2665
        %3637 = vmatprep.subr.bf16.mxu0 %v2674
        %3638 = vmatpush1.bf16.msra.mxu0 %v2673
        %3639 = vmatprep.subr.bf16.mxu0 %v2682
        %3640 = vmatpush1.bf16.msra.mxu0 %v2681
        %3641 = vmatprep.subr.bf16.mxu0 %v2690
        %3642 = vmatpush1.bf16.msra.mxu0 %v2689
        %3643 = vmatprep.subr.bf16.mxu0 %v2698
        %3644 = vmatpush1.bf16.msra.mxu0 %v2697
        %3645 = vmatprep.subr.bf16.mxu0 %v2706
        %3646 = vmatpush1.bf16.msra.mxu0 %v2705
        %3647 = vmatprep.subr.bf16.mxu0 %v2714
        %3648 = vmatpush1.bf16.msra.mxu0 %v2713
        %3649 = vmatprep.subr.bf16.mxu0 %v2722
        %3650 = vmatpush1.bf16.msra.mxu0 %v2721
        %3651 = vmatprep.subr.bf16.mxu0 %v2730
        %3652 = vmatpush1.bf16.msra.mxu0 %v2729
        %3653 = vmatprep.mubr.bf16.mxu0 %v258
        %3654 = vmatmul.mubr.bf16.gmra.mrb[0].mxu0 %v257
        %v3655 = vpop.f32.mrb[0].mxu0
        %v3656 = vadd.f32 %v3615, %v3655
        %v3657 = vpop.f32.mrb[0].mxu0
        %v3658 = vadd.f32 %v3617, %v3657
        %v3659 = vpop.f32.mrb[0].mxu0
        %v3660 = vpop.f32.mrb[0].mxu0
        %3661 = vdwg.mxu0
        %3662 = vmatprep.subr.bf16.mxu0 %v2738
        %3663 = vmatpush1.bf16.msra.mxu0 %v2737
        %3664 = vmatprep.subr.bf16.mxu0 %v2746
        %3665 = vmatpush1.bf16.msra.mxu0 %v2745
        %3666 = vmatprep.subr.bf16.mxu0 %v2754
        %3667 = vmatpush1.bf16.msra.mxu0 %v2753
        %3668 = vmatprep.subr.bf16.mxu0 %v2762
        %3669 = vmatpush1.bf16.msra.mxu0 %v2761
        %3670 = vmatprep.subr.bf16.mxu0 %v2770
        %3671 = vmatpush1.bf16.msra.mxu0 %v2769
        %3672 = vmatprep.subr.bf16.mxu0 %v2778
        %3673 = vmatpush1.bf16.msra.mxu0 %v2777
        %3674 = vmatprep.subr.bf16.mxu0 %v2786
        %3675 = vmatpush1.bf16.msra.mxu0 %v2785
        %3676 = vmatprep.subr.bf16.mxu0 %v2794
        %3677 = vmatpush1.bf16.msra.mxu0 %v2793
        %3678 = vmatprep.subr.bf16.mxu0 %v2802
        %3679 = vmatpush1.bf16.msra.mxu0 %v2801
        %3680 = vmatprep.subr.bf16.mxu0 %v2810
        %3681 = vmatpush1.bf16.msra.mxu0 %v2809
        %3682 = vmatprep.subr.bf16.mxu0 %v2818
        %3683 = vmatpush1.bf16.msra.mxu0 %v2817
        %3684 = vmatprep.subr.bf16.mxu0 %v2826
        %3685 = vmatpush1.bf16.msra.mxu0 %v2825
        %3686 = vmatprep.subr.bf16.mxu0 %v2834
        %3687 = vmatpush1.bf16.msra.mxu0 %v2833
        %3688 = vmatprep.subr.bf16.mxu0 %v2842
        %3689 = vmatpush1.bf16.msra.mxu0 %v2841
        %3690 = vmatprep.subr.bf16.mxu0 %v2850
        %3691 = vmatpush1.bf16.msra.mxu0 %v2849
        %3692 = vmatprep.subr.bf16.mxu0 %v2858
        %3693 = vmatpush1.bf16.msra.mxu0 %v2857
        %3694 = vmatprep.mubr.bf16.mxu0 %v260
        %3695 = vmatmul.mubr.bf16.gmra.mrb[0].mxu0 %v259
        %v3696 = vpop.f32.mrb[0].mxu0
        %v3697 = vadd.f32 %v3656, %v3696
        %v3698 = vpop.f32.mrb[0].mxu0
        %v3699 = vadd.f32 %v3658, %v3698
        %v3700 = vpop.f32.mrb[0].mxu0
        %v3701 = vpop.f32.mrb[0].mxu0
        %3702 = vdwg.mxu0
        %3703 = vmatprep.subr.bf16.mxu0 %v2356
        %3704 = vmatpush1.bf16.msra.mxu0 %v2355
        %3705 = vmatprep.subr.bf16.mxu0 %v2364
        %3706 = vmatpush1.bf16.msra.mxu0 %v2363
        %3707 = vmatprep.subr.bf16.mxu0 %v2372
        %3708 = vmatpush1.bf16.msra.mxu0 %v2371
        %3709 = vmatprep.subr.bf16.mxu0 %v2380
        %3710 = vmatpush1.bf16.msra.mxu0 %v2379
        %3711 = vmatprep.subr.bf16.mxu0 %v2388
        %3712 = vmatpush1.bf16.msra.mxu0 %v2387
        %3713 = vmatprep.subr.bf16.mxu0 %v2396
        %3714 = vmatpush1.bf16.msra.mxu0 %v2395
        %3715 = vmatprep.subr.bf16.mxu0 %v2404
        %3716 = vmatpush1.bf16.msra.mxu0 %v2403
        %3717 = vmatprep.subr.bf16.mxu0 %v2412
        %3718 = vmatpush1.bf16.msra.mxu0 %v2411
        %3719 = vmatprep.subr.bf16.mxu0 %v2420
        %3720 = vmatpush1.bf16.msra.mxu0 %v2419
        %3721 = vmatprep.subr.bf16.mxu0 %v2428
        %3722 = vmatpush1.bf16.msra.mxu0 %v2427
        %3723 = vmatprep.subr.bf16.mxu0 %v2436
        %3724 = vmatpush1.bf16.msra.mxu0 %v2435
        %3725 = vmatprep.subr.bf16.mxu0 %v2444
        %3726 = vmatpush1.bf16.msra.mxu0 %v2443
        %3727 = vmatprep.subr.bf16.mxu0 %v2452
        %3728 = vmatpush1.bf16.msra.mxu0 %v2451
        %3729 = vmatprep.subr.bf16.mxu0 %v2460
        %3730 = vmatpush1.bf16.msra.mxu0 %v2459
        %3731 = vmatprep.subr.bf16.mxu0 %v2468
        %3732 = vmatpush1.bf16.msra.mxu0 %v2467
        %3733 = vmatprep.subr.bf16.mxu0 %v2476
        %3734 = vmatpush1.bf16.msra.mxu0 %v2475
        %3735 = vmatprep.mubr.bf16.mxu0 %v254
        %3736 = vmatmul.mubr.bf16.gmra.mrb[0].mxu0 %v253
        %v3737 = vpop.f32.mrb[0].mxu0
        %v3738 = vadd.f32 %v794, %v3737
        %v3739 = vpop.f32.mrb[0].mxu0
        %v3740 = vadd.f32 %v798, %v3739
        %v3741 = vpop.f32.mrb[0].mxu0
        %v3742 = vpop.f32.mrb[0].mxu0
        %3743 = vdwg.mxu0
        %3744 = vmatprep.subr.bf16.mxu0 %v2484
        %3745 = vmatpush1.bf16.msra.mxu0 %v2483
        %3746 = vmatprep.subr.bf16.mxu0 %v2492
        %3747 = vmatpush1.bf16.msra.mxu0 %v2491
        %3748 = vmatprep.subr.bf16.mxu0 %v2500
        %3749 = vmatpush1.bf16.msra.mxu0 %v2499
        %3750 = vmatprep.subr.bf16.mxu0 %v2508
        %3751 = vmatpush1.bf16.msra.mxu0 %v2507
        %3752 = vmatprep.subr.bf16.mxu0 %v2516
        %3753 = vmatpush1.bf16.msra.mxu0 %v2515
        %3754 = vmatprep.subr.bf16.mxu0 %v2524
        %3755 = vmatpush1.bf16.msra.mxu0 %v2523
        %3756 = vmatprep.subr.bf16.mxu0 %v2532
        %3757 = vmatpush1.bf16.msra.mxu0 %v2531
        %3758 = vmatprep.subr.bf16.mxu0 %v2540
        %3759 = vmatpush1.bf16.msra.mxu0 %v2539
        %3760 = vmatprep.subr.bf16.mxu0 %v2548
        %3761 = vmatpush1.bf16.msra.mxu0 %v2547
        %3762 = vmatprep.subr.bf16.mxu0 %v2556
        %3763 = vmatpush1.bf16.msra.mxu0 %v2555
        %3764 = vmatprep.subr.bf16.mxu0 %v2564
        %3765 = vmatpush1.bf16.msra.mxu0 %v2563
        %3766 = vmatprep.subr.bf16.mxu0 %v2572
        %3767 = vmatpush1.bf16.msra.mxu0 %v2571
        %3768 = vmatprep.subr.bf16.mxu0 %v2580
        %3769 = vmatpush1.bf16.msra.mxu0 %v2579
        %3770 = vmatprep.subr.bf16.mxu0 %v2588
        %3771 = vmatpush1.bf16.msra.mxu0 %v2587
        %3772 = vmatprep.subr.bf16.mxu0 %v2596
        %3773 = vmatpush1.bf16.msra.mxu0 %v2595
        %3774 = vmatprep.subr.bf16.mxu0 %v2604
        %3775 = vmatpush1.bf16.msra.mxu0 %v2603
        %3776 = vmatprep.mubr.bf16.mxu0 %v256
        %3777 = vmatmul.mubr.bf16.gmra.mrb[0].mxu0 %v255
        %v3778 = vpop.f32.mrb[0].mxu0
        %v3779 = vadd.f32 %v3738, %v3778
        %v3780 = vpop.f32.mrb[0].mxu0
        %v3781 = vadd.f32 %v3740, %v3780
        %v3782 = vpop.f32.mrb[0].mxu0
        %v3783 = vpop.f32.mrb[0].mxu0
        %3784 = vdwg.mxu0
        %3785 = vmatprep.subr.bf16.mxu0 %v2612
        %3786 = vmatpush1.bf16.msra.mxu0 %v2611
        %3787 = vmatprep.subr.bf16.mxu0 %v2620
        %3788 = vmatpush1.bf16.msra.mxu0 %v2619
        %3789 = vmatprep.subr.bf16.mxu0 %v2628
        %3790 = vmatpush1.bf16.msra.mxu0 %v2627
        %3791 = vmatprep.subr.bf16.mxu0 %v2636
        %3792 = vmatpush1.bf16.msra.mxu0 %v2635
        %3793 = vmatprep.subr.bf16.mxu0 %v2644
        %3794 = vmatpush1.bf16.msra.mxu0 %v2643
        %3795 = vmatprep.subr.bf16.mxu0 %v2652
        %3796 = vmatpush1.bf16.msra.mxu0 %v2651
        %3797 = vmatprep.subr.bf16.mxu0 %v2660
        %3798 = vmatpush1.bf16.msra.mxu0 %v2659
        %3799 = vmatprep.subr.bf16.mxu0 %v2668
        %3800 = vmatpush1.bf16.msra.mxu0 %v2667
        %3801 = vmatprep.subr.bf16.mxu0 %v2676
        %3802 = vmatpush1.bf16.msra.mxu0 %v2675
        %3803 = vmatprep.subr.bf16.mxu0 %v2684
        %3804 = vmatpush1.bf16.msra.mxu0 %v2683
        %3805 = vmatprep.subr.bf16.mxu0 %v2692
        %3806 = vmatpush1.bf16.msra.mxu0 %v2691
        %3807 = vmatprep.subr.bf16.mxu0 %v2700
        %3808 = vmatpush1.bf16.msra.mxu0 %v2699
        %3809 = vmatprep.subr.bf16.mxu0 %v2708
        %3810 = vmatpush1.bf16.msra.mxu0 %v2707
        %3811 = vmatprep.subr.bf16.mxu0 %v2716
        %3812 = vmatpush1.bf16.msra.mxu0 %v2715
        %3813 = vmatprep.subr.bf16.mxu0 %v2724
        %3814 = vmatpush1.bf16.msra.mxu0 %v2723
        %3815 = vmatprep.subr.bf16.mxu0 %v2732
        %3816 = vmatpush1.bf16.msra.mxu0 %v2731
        %3817 = vmatprep.mubr.bf16.mxu0 %v258
        %3818 = vmatmul.mubr.bf16.gmra.mrb[0].mxu0 %v257
        %v3819 = vpop.f32.mrb[0].mxu0
        %v3820 = vadd.f32 %v3779, %v3819
        %v3821 = vpop.f32.mrb[0].mxu0
        %v3822 = vadd.f32 %v3781, %v3821
        %v3823 = vpop.f32.mrb[0].mxu0
        %v3824 = vpop.f32.mrb[0].mxu0
        %3825 = vdwg.mxu0
        %3826 = vmatprep.subr.bf16.mxu0 %v2740
        %3827 = vmatpush1.bf16.msra.mxu0 %v2739
        %3828 = vmatprep.subr.bf16.mxu0 %v2748
        %3829 = vmatpush1.bf16.msra.mxu0 %v2747
        %3830 = vmatprep.subr.bf16.mxu0 %v2756
        %3831 = vmatpush1.bf16.msra.mxu0 %v2755
        %3832 = vmatprep.subr.bf16.mxu0 %v2764
        %3833 = vmatpush1.bf16.msra.mxu0 %v2763
        %3834 = vmatprep.subr.bf16.mxu0 %v2772
        %3835 = vmatpush1.bf16.msra.mxu0 %v2771
        %3836 = vmatprep.subr.bf16.mxu0 %v2780
        %3837 = vmatpush1.bf16.msra.mxu0 %v2779
        %3838 = vmatprep.subr.bf16.mxu0 %v2788
        %3839 = vmatpush1.bf16.msra.mxu0 %v2787
        %3840 = vmatprep.subr.bf16.mxu0 %v2796
        %3841 = vmatpush1.bf16.msra.mxu0 %v2795
        %3842 = vmatprep.subr.bf16.mxu0 %v2804
        %3843 = vmatpush1.bf16.msra.mxu0 %v2803
        %3844 = vmatprep.subr.bf16.mxu0 %v2812
        %3845 = vmatpush1.bf16.msra.mxu0 %v2811
        %3846 = vmatprep.subr.bf16.mxu0 %v2820
        %3847 = vmatpush1.bf16.msra.mxu0 %v2819
        %3848 = vmatprep.subr.bf16.mxu0 %v2828
        %3849 = vmatpush1.bf16.msra.mxu0 %v2827
        %3850 = vmatprep.subr.bf16.mxu0 %v2836
        %3851 = vmatpush1.bf16.msra.mxu0 %v2835
        %3852 = vmatprep.subr.bf16.mxu0 %v2844
        %3853 = vmatpush1.bf16.msra.mxu0 %v2843
        %3854 = vmatprep.subr.bf16.mxu0 %v2852
        %3855 = vmatpush1.bf16.msra.mxu0 %v2851
        %3856 = vmatprep.subr.bf16.mxu0 %v2860
        %3857 = vmatpush1.bf16.msra.mxu0 %v2859
        %3858 = vmatprep.mubr.bf16.mxu0 %v260
        %3859 = vmatmul.mubr.bf16.gmra.mrb[0].mxu0 %v259
        %v3860 = vpop.f32.mrb[0].mxu0
        %v3861 = vadd.f32 %v3820, %v3860
        %v3862 = vpop.f32.mrb[0].mxu0
        %v3863 = vadd.f32 %v3822, %v3862
        %v3864 = vpop.f32.mrb[0].mxu0
        %v3865 = vpop.f32.mrb[0].mxu0
        %3866 = vdwg.mxu0
        %3867 = vmatprep.subr.bf16.mxu0 %v2358
        %3868 = vmatpush1.bf16.msra.mxu0 %v2357
        %3869 = vmatprep.subr.bf16.mxu0 %v2366
        %3870 = vmatpush1.bf16.msra.mxu0 %v2365
        %3871 = vmatprep.subr.bf16.mxu0 %v2374
        %3872 = vmatpush1.bf16.msra.mxu0 %v2373
        %3873 = vmatprep.subr.bf16.mxu0 %v2382
        %3874 = vmatpush1.bf16.msra.mxu0 %v2381
        %3875 = vmatprep.subr.bf16.mxu0 %v2390
        %3876 = vmatpush1.bf16.msra.mxu0 %v2389
        %3877 = vmatprep.subr.bf16.mxu0 %v2398
        %3878 = vmatpush1.bf16.msra.mxu0 %v2397
        %3879 = vmatprep.subr.bf16.mxu0 %v2406
        %3880 = vmatpush1.bf16.msra.mxu0 %v2405
        %3881 = vmatprep.subr.bf16.mxu0 %v2414
        %3882 = vmatpush1.bf16.msra.mxu0 %v2413
        %3883 = vmatprep.subr.bf16.mxu0 %v2422
        %3884 = vmatpush1.bf16.msra.mxu0 %v2421
        %3885 = vmatprep.subr.bf16.mxu0 %v2430
        %3886 = vmatpush1.bf16.msra.mxu0 %v2429
        %3887 = vmatprep.subr.bf16.mxu0 %v2438
        %3888 = vmatpush1.bf16.msra.mxu0 %v2437
        %3889 = vmatprep.subr.bf16.mxu0 %v2446
        %3890 = vmatpush1.bf16.msra.mxu0 %v2445
        %3891 = vmatprep.subr.bf16.mxu0 %v2454
        %3892 = vmatpush1.bf16.msra.mxu0 %v2453
        %3893 = vmatprep.subr.bf16.mxu0 %v2462
        %3894 = vmatpush1.bf16.msra.mxu0 %v2461
        %3895 = vmatprep.subr.bf16.mxu0 %v2470
        %3896 = vmatpush1.bf16.msra.mxu0 %v2469
        %3897 = vmatprep.subr.bf16.mxu0 %v2478
        %3898 = vmatpush1.bf16.msra.mxu0 %v2477
        %3899 = vmatprep.mubr.bf16.mxu0 %v254
        %3900 = vmatmul.mubr.bf16.gmra.mrb[0].mxu0 %v253
        %v3901 = vpop.f32.mrb[0].mxu0
        %v3902 = vadd.f32 %v802, %v3901
        %v3903 = vpop.f32.mrb[0].mxu0
        %v3904 = vadd.f32 %v806, %v3903
        %v3905 = vpop.f32.mrb[0].mxu0
        %v3906 = vpop.f32.mrb[0].mxu0
        %3907 = vdwg.mxu0
        %3908 = vmatprep.subr.bf16.mxu0 %v2486
        %3909 = vmatpush1.bf16.msra.mxu0 %v2485
        %3910 = vmatprep.subr.bf16.mxu0 %v2494
        %3911 = vmatpush1.bf16.msra.mxu0 %v2493
        %3912 = vmatprep.subr.bf16.mxu0 %v2502
        %3913 = vmatpush1.bf16.msra.mxu0 %v2501
        %3914 = vmatprep.subr.bf16.mxu0 %v2510
        %3915 = vmatpush1.bf16.msra.mxu0 %v2509
        %3916 = vmatprep.subr.bf16.mxu0 %v2518
        %3917 = vmatpush1.bf16.msra.mxu0 %v2517
        %3918 = vmatprep.subr.bf16.mxu0 %v2526
        %3919 = vmatpush1.bf16.msra.mxu0 %v2525
        %3920 = vmatprep.subr.bf16.mxu0 %v2534
        %3921 = vmatpush1.bf16.msra.mxu0 %v2533
        %3922 = vmatprep.subr.bf16.mxu0 %v2542
        %3923 = vmatpush1.bf16.msra.mxu0 %v2541
        %3924 = vmatprep.subr.bf16.mxu0 %v2550
        %3925 = vmatpush1.bf16.msra.mxu0 %v2549
        %3926 = vmatprep.subr.bf16.mxu0 %v2558
        %3927 = vmatpush1.bf16.msra.mxu0 %v2557
        %3928 = vmatprep.subr.bf16.mxu0 %v2566
        %3929 = vmatpush1.bf16.msra.mxu0 %v2565
        %3930 = vmatprep.subr.bf16.mxu0 %v2574
        %3931 = vmatpush1.bf16.msra.mxu0 %v2573
        %3932 = vmatprep.subr.bf16.mxu0 %v2582
        %3933 = vmatpush1.bf16.msra.mxu0 %v2581
        %3934 = vmatprep.subr.bf16.mxu0 %v2590
        %3935 = vmatpush1.bf16.msra.mxu0 %v2589
        %3936 = vmatprep.subr.bf16.mxu0 %v2598
        %3937 = vmatpush1.bf16.msra.mxu0 %v2597
        %3938 = vmatprep.subr.bf16.mxu0 %v2606
        %3939 = vmatpush1.bf16.msra.mxu0 %v2605
        %3940 = vmatprep.mubr.bf16.mxu0 %v256
        %3941 = vmatmul.mubr.bf16.gmra.mrb[0].mxu0 %v255
        %v3942 = vpop.f32.mrb[0].mxu0
        %v3943 = vadd.f32 %v3902, %v3942
        %v3944 = vpop.f32.mrb[0].mxu0
        %v3945 = vadd.f32 %v3904, %v3944
        %v3946 = vpop.f32.mrb[0].mxu0
        %v3947 = vpop.f32.mrb[0].mxu0
        %3948 = vdwg.mxu0
        %3949 = vmatprep.subr.bf16.mxu0 %v2614
        %3950 = vmatpush1.bf16.msra.mxu0 %v2613
        %3951 = vmatprep.subr.bf16.mxu0 %v2622
        %3952 = vmatpush1.bf16.msra.mxu0 %v2621
        %3953 = vmatprep.subr.bf16.mxu0 %v2630
        %3954 = vmatpush1.bf16.msra.mxu0 %v2629
        %3955 = vmatprep.subr.bf16.mxu0 %v2638
        %3956 = vmatpush1.bf16.msra.mxu0 %v2637
        %3957 = vmatprep.subr.bf16.mxu0 %v2646
        %3958 = vmatpush1.bf16.msra.mxu0 %v2645
        %3959 = vmatprep.subr.bf16.mxu0 %v2654
        %3960 = vmatpush1.bf16.msra.mxu0 %v2653
        %3961 = vmatprep.subr.bf16.mxu0 %v2662
        %3962 = vmatpush1.bf16.msra.mxu0 %v2661
        %3963 = vmatprep.subr.bf16.mxu0 %v2670
        %3964 = vmatpush1.bf16.msra.mxu0 %v2669
        %3965 = vmatprep.subr.bf16.mxu0 %v2678
        %3966 = vmatpush1.bf16.msra.mxu0 %v2677
        %3967 = vmatprep.subr.bf16.mxu0 %v2686
        %3968 = vmatpush1.bf16.msra.mxu0 %v2685
        %3969 = vmatprep.subr.bf16.mxu0 %v2694
        %3970 = vmatpush1.bf16.msra.mxu0 %v2693
        %3971 = vmatprep.subr.bf16.mxu0 %v2702
        %3972 = vmatpush1.bf16.msra.mxu0 %v2701
        %3973 = vmatprep.subr.bf16.mxu0 %v2710
        %3974 = vmatpush1.bf16.msra.mxu0 %v2709
        %3975 = vmatprep.subr.bf16.mxu0 %v2718
        %3976 = vmatpush1.bf16.msra.mxu0 %v2717
        %3977 = vmatprep.subr.bf16.mxu0 %v2726
        %3978 = vmatpush1.bf16.msra.mxu0 %v2725
        %3979 = vmatprep.subr.bf16.mxu0 %v2734
        %3980 = vmatpush1.bf16.msra.mxu0 %v2733
        %3981 = vmatprep.mubr.bf16.mxu0 %v258
        %3982 = vmatmul.mubr.bf16.gmra.mrb[0].mxu0 %v257
        %v3983 = vpop.f32.mrb[0].mxu0
        %v3984 = vadd.f32 %v3943, %v3983
        %v3985 = vpop.f32.mrb[0].mxu0
        %v3986 = vadd.f32 %v3945, %v3985
        %v3987 = vpop.f32.mrb[0].mxu0
        %v3988 = vpop.f32.mrb[0].mxu0
        %3989 = vdwg.mxu0
        %3990 = vmatprep.subr.bf16.mxu0 %v2742
        %3991 = vmatpush1.bf16.msra.mxu0 %v2741
        %3992 = vmatprep.subr.bf16.mxu0 %v2750
        %3993 = vmatpush1.bf16.msra.mxu0 %v2749
        %3994 = vmatprep.subr.bf16.mxu0 %v2758
        %3995 = vmatpush1.bf16.msra.mxu0 %v2757
        %3996 = vmatprep.subr.bf16.mxu0 %v2766
        %3997 = vmatpush1.bf16.msra.mxu0 %v2765
        %3998 = vmatprep.subr.bf16.mxu0 %v2774
        %3999 = vmatpush1.bf16.msra.mxu0 %v2773
        %4000 = vmatprep.subr.bf16.mxu0 %v2782
        %4001 = vmatpush1.bf16.msra.mxu0 %v2781
        %4002 = vmatprep.subr.bf16.mxu0 %v2790
        %4003 = vmatpush1.bf16.msra.mxu0 %v2789
        %4004 = vmatprep.subr.bf16.mxu0 %v2798
        %4005 = vmatpush1.bf16.msra.mxu0 %v2797
        %4006 = vmatprep.subr.bf16.mxu0 %v2806
        %4007 = vmatpush1.bf16.msra.mxu0 %v2805
        %4008 = vmatprep.subr.bf16.mxu0 %v2814
        %4009 = vmatpush1.bf16.msra.mxu0 %v2813
        %4010 = vmatprep.subr.bf16.mxu0 %v2822
        %4011 = vmatpush1.bf16.msra.mxu0 %v2821
        %4012 = vmatprep.subr.bf16.mxu0 %v2830
        %4013 = vmatpush1.bf16.msra.mxu0 %v2829
        %4014 = vmatprep.subr.bf16.mxu0 %v2838
        %4015 = vmatpush1.bf16.msra.mxu0 %v2837
        %4016 = vmatprep.subr.bf16.mxu0 %v2846
        %4017 = vmatpush1.bf16.msra.mxu0 %v2845
        %4018 = vmatprep.subr.bf16.mxu0 %v2854
        %4019 = vmatpush1.bf16.msra.mxu0 %v2853
        %4020 = vmatprep.subr.bf16.mxu0 %v2862
        %4021 = vmatpush1.bf16.msra.mxu0 %v2861
        %4022 = vmatprep.mubr.bf16.mxu0 %v260
        %4023 = vmatmul.mubr.bf16.gmra.mrb[0].mxu0 %v259
        %v4024 = vpop.f32.mrb[0].mxu0
        %v4025 = vadd.f32 %v3984, %v4024
        %v4026 = vpop.f32.mrb[0].mxu0
        %v4027 = vadd.f32 %v3986, %v4026
        %v4028 = vpop.f32.mrb[0].mxu0
        %v4029 = vpop.f32.mrb[0].mxu0
        %4030 = vdwg.mxu0
        %4031 = vst [vmem:[#allocation2] sm:$0xff] %v3533
        %4032 = vst [vmem:[#allocation2 + $0x8] sm:$0xff] %v3535
        %4033 = vst [vmem:[#allocation2 + $0x10] sm:$0xff] %v3697
        %4034 = vst [vmem:[#allocation2 + $0x18] sm:$0xff] %v3699
        %4035 = vst [vmem:[#allocation2 + $0x20] sm:$0xff] %v3861
        %4036 = vst [vmem:[#allocation2 + $0x28] sm:$0xff] %v3863
        %4037 = vst [vmem:[#allocation2 + $0x30] sm:$0xff] %v4025
        %4038 = vst [vmem:[#allocation2 + $0x38] sm:$0xff] %v4027
        %p4039 = scmp.eq.s32.totalorder %s19, 9
        // Predicated region
        $region49: #{fused_mlp.1} parent=31 // pred_check
          %p4040 = pneg %p4039
        $region50: #{fused_mlp.1} parent=31 // pred_check_branch
          %4042 = sbr.rel (%p4040) target = $region52
        $region51: #{fused_mlp.1} parent=31 // pred_region
          %4043 = vst [vmem:[#allocation9] sm:$0xff] %v3533
          %4044 = vst [vmem:[#allocation9 + $0x8] sm:$0xff] %v3535
          %4045 = vst [vmem:[#allocation9 + $0x10] sm:$0xff] %v3697
          %4046 = vst [vmem:[#allocation9 + $0x18] sm:$0xff] %v3699
          %4047 = vst [vmem:[#allocation9 + $0x20] sm:$0xff] %v3861
          %4048 = vst [vmem:[#allocation9 + $0x28] sm:$0xff] %v3863
          %4049 = vst [vmem:[#allocation9 + $0x30] sm:$0xff] %v4025
          %4050 = vst [vmem:[#allocation9 + $0x38] sm:$0xff] %v4027
        $region52: #{fused_mlp.1} parent=31 // pred_fallthru
          _
        // Predicated region
        $region53: #{fused_mlp.1} parent=31 // pred_check
          %p4051 = pneg %p105
        $region54: #{fused_mlp.1} parent=31 // pred_check_branch
          %4053 = sbr.rel (%p4051) target = $region56
        $region55: #{fused_mlp.1} parent=31 // pred_region
          %s4055 = ssub.s32 1024, 1024
          %4056 = vsyncadd [#allocation5], %s4055
          %s4058 = sshll.u32 [#allocation9], 4
          %s4059 = int_to_ptr.vmem [resolvable:$true] %s4058
          %4061 = dma.vmem_to_hbm [thread:$0]  %s4059, 1024, %s3, [#allocation5]
        $region56: #{fused_mlp.1} parent=31 // pred_fallthru
          _
        // Predicated region
        $region57: #{fused_mlp.1} parent=31 // pred_check
          %p4062 = pneg %p105
        $region58: #{fused_mlp.1} parent=31 // pred_check_branch
          %4064 = sbr.rel (%p4062) target = $region60
        $region59: #{fused_mlp.1} parent=31 // pred_region
          %4065 = dma.done [#allocation5], 1024
        $region60: #{fused_mlp.1} parent=31 // pred_fallthru
          _
      $region32: #{fused_mlp.1} parent=5 // pred_fallthru
        _
      %p4066 = scmp.le.s32.totalorder 2, %s14
      // Predicated region
      $region61: #{fused_mlp.1} parent=5 // pred_check
        %p4067 = pneg %p4066
      $region62: #{fused_mlp.1} parent=5 // pred_check_branch
        %4069 = sbr.rel (%p4067) target = $region64
      $region63: #{fused_mlp.1} parent=5 // pred_region
        %s4070 = ssub.s32 %s14, 2
      $region64: #{fused_mlp.1} parent=5 // pred_fallthru
        _
    $region6: #{fused_mlp.1} parent=1 // loop_footer
      %s18 = sadd.s32 1, %s14
    $region7: #{fused_mlp.1} parent=1 // loop_footer_branch
      %13 = sbr.rel target = $region3
    $region8: #{fused_mlp.1} parent=1 // loop_exit
      _
    %4071 = vsyncpa [#allocation4], 1
    %s4072 = scalar_lea.sflag [#allocation4], 1
    %4073 = vsyncpa %s4072, 1
    %4074 = vsyncpa [#allocation7], 1
    %s4075 = scalar_lea.sflag [#allocation7], 1
    %4076 = vsyncpa %s4075, 1
    %4077 = vsyncpa [#allocation5], 1
    %s4078 = scalar_lea.sflag [#allocation5], 1
    %4079 = vsyncpa %s4078, 1

</llo_original>
